<compile_context>
chip_gen: v7x
topology: tpu7x:2x2x1
jax: 0.10.0
libtpu: 0.0.40
codegen_flags: <defaults>
</compile_context>

<pallas_src>
import functools

import jax
import jax.numpy as jnp
from jax.experimental import pallas as pl
from jax.experimental.pallas import tpu as pltpu


# ----------------------------------------------------------------------------
# helpers: pick block sizes that evenly divide an axis (keeps BlockSpecs legal)
# ----------------------------------------------------------------------------
def _largest_divisor(n, max_d):
    if n <= max_d:
        return n
    for d in range(max_d, 0, -1):
        if n % d == 0:
            return d
    return n


def _pick_row_block(n, max_block=256, align=8):
    """Row-block for the attention grid: divides n and is sublane-aligned."""
    if n <= max_block:
        return n
    for b in range(max_block, 0, -1):
        if n % b == 0 and b % align == 0:
            return b
    return n  # fall back: whole axis as one block


# ----------------------------------------------------------------------------
# Fused bidirectional LSTM kernel (input projection + recurrence, chunked T).
#   Per grid step i (of nc):
#     xf_ref : [Tc, N, I]  x chunk for forward time  [i*Tc, (i+1)*Tc)
#     xb_ref : [Tc, N, I]  x chunk for backward time [(nc-1-i)*Tc, (nc-i)*Tc)
#     wihf/wihb : [I, 4H]  input weights (bf16), bf/bb: [1, 4H] combined bias
#     whh    : [2H, 4H]    vstack(Whh_f, Whh_b) (bf16)
#   Outputs:
#     of_ref : [Tc, N, H]  forward hidden states for chunk i
#     ob_ref : [Tc, N, H]  backward hidden states for chunk nc-1-i
#   Scratch (persists across grid steps):
#     hcat [2N, 2H] block-diagonal state [hf 0; 0 hb], ccat [2N, H],
#     gxf/gxb [Tc, N, 4H] per-chunk gate pre-activations.
# ----------------------------------------------------------------------------
def _bilstm_kernel(xf_ref, xb_ref, wihf_ref, wihb_ref, bf_ref, bb_ref,
                   whh_ref, of_ref, ob_ref, hcat, ccat, gxf, gxb, *, unroll):
    Tc, N, I = xf_ref.shape
    H = of_ref.shape[-1]

    @pl.when(pl.program_id(0) == 0)
    def _():
        hcat[...] = jnp.zeros_like(hcat)   # zeros in the off-diagonal halves
        ccat[...] = jnp.zeros_like(ccat)   # are what makes the fused matmul work

    # --- hoisted input projection for the whole chunk (off the serial path,
    #     pipelined behind the x-chunk DMA) -----------------------------------
    xf2 = xf_ref[...].reshape(Tc * N, I).astype(jnp.bfloat16)
    xb2 = xb_ref[...].reshape(Tc * N, I).astype(jnp.bfloat16)
    gxf[...] = (jnp.dot(xf2, wihf_ref[...], preferred_element_type=jnp.float32)
                + bf_ref[...]).reshape(Tc, N, 4 * H)
    gxb[...] = (jnp.dot(xb2, wihb_ref[...], preferred_element_type=jnp.float32)
                + bb_ref[...]).reshape(Tc, N, 4 * H)

    whh = whh_ref[...]                    # [2H, 4H] bf16, loaded once

    # --- serial recurrence over the chunk ------------------------------------
    def step(s, carry):
        sb = Tc - 1 - s
        # one fused MXU push for both directions: [hf 0; 0 hb] @ [Whh_f; Whh_b]
        rec = jnp.dot(hcat[...].astype(jnp.bfloat16), whh,
                      preferred_element_type=jnp.float32)          # [2N, 4H]
        gin = jnp.concatenate([gxf[s], gxb[sb]], axis=0) + rec      # [2N, 4H]

        i = jax.nn.sigmoid(gin[:, 0 * H:1 * H])
        f = jax.nn.sigmoid(gin[:, 1 * H:2 * H])
        g = jnp.tanh(gin[:, 2 * H:3 * H])
        o = jax.nn.sigmoid(gin[:, 3 * H:4 * H])
        c = f * ccat[...] + i * g
        h = o * jnp.tanh(c)                                         # [2N, H]

        ccat[...] = c
        hcat[0:N, 0:H] = h[0:N, :]          # forward half of the block-diag
        hcat[N:2 * N, H:2 * H] = h[N:2 * N, :]  # backward half

        of_ref[s] = h[0:N, :]               # full-lane dense stores
        ob_ref[sb] = h[N:2 * N, :]
        return carry

    jax.lax.fori_loop(0, Tc, step, 0, unroll=unroll)


def bidirectional_lstm(x, p, max_chunk=64):
    """x: [T, N, I] (batch_first=False).  Returns (h_fwd, h_bwd), each [T,N,H]."""
    T, N, I = x.shape
    H = p["whh"].shape[0] // 2
    Tc = _largest_divisor(T, max_chunk)
    nc = T // Tc

    kernel = functools.partial(_bilstm_kernel, unroll=min(Tc, 8))

    return pl.pallas_call(
        kernel,
        out_shape=(jax.ShapeDtypeStruct((T, N, H), jnp.float32),
                   jax.ShapeDtypeStruct((T, N, H), jnp.float32)),
        grid=(nc,),
        in_specs=[
            pl.BlockSpec((Tc, N, I), lambda i: (i, 0, 0)),               # x fwd
            pl.BlockSpec((Tc, N, I), lambda i: (nc - 1 - i, 0, 0)),      # x bwd
            pl.BlockSpec((I, 4 * H), lambda i: (0, 0)),                  # Wih_f
            pl.BlockSpec((I, 4 * H), lambda i: (0, 0)),                  # Wih_b
            pl.BlockSpec((1, 4 * H), lambda i: (0, 0)),                  # b_f
            pl.BlockSpec((1, 4 * H), lambda i: (0, 0)),                  # b_b
            pl.BlockSpec((2 * H, 4 * H), lambda i: (0, 0)),              # Whh
        ],
        out_specs=(
            pl.BlockSpec((Tc, N, H), lambda i: (i, 0, 0)),
            pl.BlockSpec((Tc, N, H), lambda i: (nc - 1 - i, 0, 0)),
        ),
        scratch_shapes=[
            pltpu.VMEM((2 * N, 2 * H), jnp.float32),    # hcat (block-diag)
            pltpu.VMEM((2 * N, H), jnp.float32),        # ccat
            pltpu.VMEM((Tc, N, 4 * H), jnp.float32),    # gates fwd chunk
            pltpu.VMEM((Tc, N, 4 * H), jnp.float32),    # gates bwd chunk
        ],
        compiler_params=pltpu.CompilerParams(
            dimension_semantics=("arbitrary",)),        # carried h/c state
    )(x, x,
      p["wih_f"].astype(jnp.bfloat16), p["wih_b"].astype(jnp.bfloat16),
      p["b_f"], p["b_b"], p["whh"].astype(jnp.bfloat16))


# ----------------------------------------------------------------------------
# Vectorized attention kernel (optionally fused with the final classifier).
#   Per grid step (a block of bm rows):
#     x = concat(xf, xb, -1)                            [bm, L, D]
#     u = tanh(reshape(x, [bm*L, D]) @ Wa + ba)         one MXU matmul
#     alpha = softmax(sum(u * cv, -1), axis=L)
#     attended = sum(x * alpha[..., None], axis=1)      [bm, D]
#     out = attended (@ Wfc + bfc)                      dense slab store
# ----------------------------------------------------------------------------
def _attention_kernel(*refs, fuse_fc):
    if fuse_fc:
        xf_ref, xb_ref, wa_ref, ba_ref, cv_ref, wfc_ref, bfc_ref, out_ref = refs
    else:
        xf_ref, xb_ref, wa_ref, ba_ref, cv_ref, out_ref = refs

    M, L, H = xf_ref.shape
    D = 2 * H

    x = jnp.concatenate([xf_ref[...], xb_ref[...]], axis=-1)       # [M, L, D]
    x2 = x.reshape(M * L, D)
    u = jnp.tanh(jnp.dot(x2.astype(jnp.bfloat16), wa_ref[...],
                         preferred_element_type=jnp.float32) + ba_ref[...])
    u3 = u.reshape(M, L, D)
    s = jnp.sum(u3 * cv_ref[...], axis=-1)                         # [M, L]
    s = s - jnp.max(s, axis=-1, keepdims=True)
    e = jnp.exp(s)
    alpha = e / jnp.sum(e, axis=-1, keepdims=True)                 # softmax over L
    attended = jnp.sum(x * alpha[:, :, None], axis=1)              # [M, D]

    if fuse_fc:
        out_ref[...] = (jnp.dot(attended.astype(jnp.bfloat16), wfc_ref[...],
                                preferred_element_type=jnp.float32)
                        + bfc_ref[...])
    else:
        out_ref[...] = attended


def attention_layer(xf, xb, wa, ba, cv, wfc=None, bfc=None):
    # xf, xb: [M, L, H]; wa: [D, D]; ba/cv: [1, D]; optional fc [D, O], [1, O]
    M, L, H = xf.shape
    D = 2 * H
    fuse_fc = wfc is not None
    out_dim = wfc.shape[1] if fuse_fc else D
    bm = _pick_row_block(M)
    grid = (M // bm,)

    in_specs = [
        pl.BlockSpec((bm, L, H), lambda i: (i, 0, 0)),
        pl.BlockSpec((bm, L, H), lambda i: (i, 0, 0)),
        pl.BlockSpec((D, D), lambda i: (0, 0)),
        pl.BlockSpec((1, D), lambda i: (0, 0)),
        pl.BlockSpec((1, D), lambda i: (0, 0)),
    ]
    args = [xf, xb, wa.astype(jnp.bfloat16), ba, cv]
    if fuse_fc:
        in_specs += [
            pl.BlockSpec((D, out_dim), lambda i: (0, 0)),
            pl.BlockSpec((1, out_dim), lambda i: (0, 0)),
        ]
        args += [wfc.astype(jnp.bfloat16), bfc]

    return pl.pallas_call(
        functools.partial(_attention_kernel, fuse_fc=fuse_fc),
        out_shape=jax.ShapeDtypeStruct((M, out_dim), jnp.float32),
        grid=grid,
        in_specs=in_specs,
        out_specs=pl.BlockSpec((bm, out_dim), lambda i: (i, 0)),
        compiler_params=pltpu.CompilerParams(
            dimension_semantics=("parallel",)),      # rows are independent
    )(*args)


# ----------------------------------------------------------------------------
# Parameter construction (deterministic) + full HAN forward
# ----------------------------------------------------------------------------
def init_params(key, vocab_size, embedding_dim, hidden_dim, output_dim):
    H = hidden_dim
    D = 2 * H
    counter = [0]

    def n(shape):
        counter[0] += 1
        return jax.random.normal(jax.random.fold_in(key, counter[0]),
                                 shape, jnp.float32) * 0.1

    def bilstm_params(in_dim):
        return {
            "wih_f": n((in_dim, 4 * H)),     # forward input weights (pre-T)
            "wih_b": n((in_dim, 4 * H)),     # backward input weights
            "b_f": n((1, 4 * H)),            # combined b_ih + b_hh, forward
            "b_b": n((1, 4 * H)),            # combined b_ih + b_hh, backward
            "whh": n((2 * H, 4 * H)),        # vstack(Whh_f, Whh_b) for the
        }                                    # fused recurrent matmul

    def attn_params(dim):
        return {"w": n((dim, dim)),          # attention_fc weight^T
                "b": n((1, dim)),            # attention_fc bias
                "cv": n((1, dim))}           # context vector (f32 row)

    return {
        "embedding": n((vocab_size, embedding_dim)),
        "word_lstm": bilstm_params(embedding_dim),
        "sent_lstm": bilstm_params(D),
        "word_attn": attn_params(D),
        "sent_attn": attn_params(D),
        "fc_w": n((D, output_dim)),
        "fc_b": n((1, output_dim)),
    }


@jax.jit
def han_forward(params, x_tokens):
    # x_tokens: int32 [B, S, W]
    B, S, W = x_tokens.shape
    flat = x_tokens.reshape(-1, W)                               # [B*S, W]
    embedded = jnp.take(params["embedding"], flat, axis=0)       # [B*S, W, E]

    # word level (recurrence over the B*S axis, matching batch_first=False)
    wf, wb = bidirectional_lstm(embedded, params["word_lstm"])   # 2x [B*S, W, H]
    wa = params["word_attn"]
    word_att = attention_layer(wf, wb, wa["w"], wa["b"], wa["cv"])  # [B*S, 2H]
    # dropout: identity at inference

    # sentence level (recurrence over the B axis)
    sent_in = word_att.reshape(B, S, -1)                         # [B, S, 2H]
    sf, sb = bidirectional_lstm(sent_in, params["sent_lstm"])    # 2x [B, S, H]
    sa = params["sent_attn"]
    # final fc fused into the sentence-attention kernel
    logits = attention_layer(sf, sb, sa["w"], sa["b"], sa["cv"],
                             wfc=params["fc_w"], bfc=params["fc_b"])  # [B, O]
    return logits


if __name__ == "__main__":
    vocab_size, embedding_dim, hidden_dim, output_dim = 50, 16, 16, 4
    B, S, W = 2, 3, 8

    key = jax.random.PRNGKey(0)
    k_param, k_data = jax.random.split(key)
    params = init_params(k_param, vocab_size, embedding_dim, hidden_dim,
                         output_dim)
    x_tokens = jax.random.randint(k_data, (B, S, W), 0, vocab_size,
                                  dtype=jnp.int32)

    logits = han_forward(params, x_tokens)
    jax.block_until_ready(logits)
    assert logits.shape == (B, output_dim)
    assert bool(jnp.all(jnp.isfinite(logits)))
    print("KERNEL_OK")
</pallas_src>

<mosaic_0001>
module attributes {stable_mosaic.version = 11 : i64} {
  func.func @_attention_kernel(%arg0: i32, %arg1: memref<6x8x16xf32, #tpu.memory_space<vmem>>, %arg2: memref<6x8x16xf32, #tpu.memory_space<vmem>>, %arg3: memref<32x32xbf16, #tpu.memory_space<vmem>>, %arg4: memref<1x32xf32, #tpu.memory_space<vmem>>, %arg5: memref<1x32xf32, #tpu.memory_space<vmem>>, %arg6: memref<6x32xf32, #tpu.memory_space<vmem>>) attributes {dimension_semantics = [#tpu.dimension_semantics<parallel>], iteration_bounds = array<i64: 1>, scalar_prefetch = 0 : i64, scratch_operands = 0 : i64, tpu.core_type = #tpu.core_type<tc>, window_params = [{transform_indices = @transform_0, window_bounds = array<i64: 6, 8, 16>}, {transform_indices = @transform_1, window_bounds = array<i64: 6, 8, 16>}, {pipeline_mode = #tpu.pipeline_mode<synchronous>, transform_indices = @transform_2, window_bounds = array<i64: 32, 32>}, {pipeline_mode = #tpu.pipeline_mode<synchronous>, transform_indices = @transform_3, window_bounds = array<i64: 1, 32>}, {pipeline_mode = #tpu.pipeline_mode<synchronous>, transform_indices = @transform_4, window_bounds = array<i64: 1, 32>}, {transform_indices = @transform_5, window_bounds = array<i64: 6, 32>}]} {
    %c0 = arith.constant 0 : index
    %c0_0 = arith.constant 0 : index
    %c0_1 = arith.constant 0 : index
    %0 = vector.load %arg1[%c0, %c0_0, %c0_1] : memref<6x8x16xf32, #tpu.memory_space<vmem>>, vector<6x8x16xf32>
    %c0_2 = arith.constant 0 : index
    %c0_3 = arith.constant 0 : index
    %c0_4 = arith.constant 0 : index
    %1 = vector.load %arg2[%c0_2, %c0_3, %c0_4] : memref<6x8x16xf32, #tpu.memory_space<vmem>>, vector<6x8x16xf32>
    %2 = tpu.concatenate %0, %1 in 2 : vector<6x8x16xf32>, vector<6x8x16xf32> -> vector<6x8x32xf32>
    %3 = vector.shape_cast %2 : vector<6x8x32xf32> to vector<48x32xf32>
    %4 = arith.truncf %3 : vector<48x32xf32> to vector<48x32xbf16>
    %c0_5 = arith.constant 0 : index
    %c0_6 = arith.constant 0 : index
    %5 = vector.load %arg3[%c0_5, %c0_6] : memref<32x32xbf16, #tpu.memory_space<vmem>>, vector<32x32xbf16>
    %cst = arith.constant dense<0.000000e+00> : vector<48x32xf32>
    %6 = tpu.matmul %4, %5, %cst {dimension_numbers = #tpu.dot_dimension_numbers<[1], [0], [0], [1], [0, 0, 1, 1], [], []>} : vector<48x32xbf16>, vector<32x32xbf16>, vector<48x32xf32> -> vector<48x32xf32>
    %c0_7 = arith.constant 0 : index
    %c0_8 = arith.constant 0 : index
    %7 = vector.load %arg4[%c0_7, %c0_8] : memref<1x32xf32, #tpu.memory_space<vmem>>, vector<1x32xf32>
    %8 = vector.broadcast %7 : vector<1x32xf32> to vector<48x32xf32>
    %9 = arith.addf %6, %8 : vector<48x32xf32>
    %10 = math.tanh %9 : vector<48x32xf32>
    %11 = vector.shape_cast %10 : vector<48x32xf32> to vector<6x8x32xf32>
    %c0_9 = arith.constant 0 : index
    %c0_10 = arith.constant 0 : index
    %12 = vector.load %arg5[%c0_9, %c0_10] : memref<1x32xf32, #tpu.memory_space<vmem>>, vector<1x32xf32>
    %13 = vector.shape_cast %12 : vector<1x32xf32> to vector<1x1x32xf32>
    %14 = vector.broadcast %13 : vector<1x1x32xf32> to vector<6x8x32xf32>
    %15 = arith.mulf %11, %14 : vector<6x8x32xf32>
    %cst_11 = arith.constant dense<0.000000e+00> : vector<6x8xf32>
    %16 = vector.multi_reduction <add>, %15, %cst_11 [2] : vector<6x8x32xf32> to vector<6x8xf32>
    %cst_12 = arith.constant dense<0xFF800000> : vector<6xf32>
    %17 = vector.multi_reduction <maximumf>, %16, %cst_12 [1] : vector<6x8xf32> to vector<6xf32>
    %18 = vector.shape_cast %17 : vector<6xf32> to vector<6x1xf32>
    %19 = vector.broadcast %18 : vector<6x1xf32> to vector<6x8xf32>
    %20 = arith.subf %16, %19 : vector<6x8xf32>
    %21 = math.exp %20 : vector<6x8xf32>
    %cst_13 = arith.constant dense<0.000000e+00> : vector<6xf32>
    %22 = vector.multi_reduction <add>, %21, %cst_13 [1] : vector<6x8xf32> to vector<6xf32>
    %23 = vector.shape_cast %22 : vector<6xf32> to vector<6x1xf32>
    %24 = vector.broadcast %23 : vector<6x1xf32> to vector<6x8xf32>
    %25 = arith.divf %21, %24 : vector<6x8xf32>
    %26 = vector.shape_cast %25 : vector<6x8xf32> to vector<6x8x1xf32>
    %27 = vector.broadcast %26 : vector<6x8x1xf32> to vector<6x8x32xf32>
    %28 = arith.mulf %2, %27 : vector<6x8x32xf32>
    %cst_14 = arith.constant dense<0.000000e+00> : vector<6x32xf32>
    %29 = vector.multi_reduction <add>, %28, %cst_14 [1] : vector<6x8x32xf32> to vector<6x32xf32>
    %c0_15 = arith.constant 0 : index
    %c0_16 = arith.constant 0 : index
    %30 = vector.load %arg6[%c0_15, %c0_16] : memref<6x32xf32, #tpu.memory_space<vmem>>, vector<6x32xf32>
    tpu.vector_store %arg6[%c0_15, %c0_16], %29 {strides = array<i32>} : memref<6x32xf32, #tpu.memory_space<vmem>>, vector<6x32xf32>,
    return
  }
  func.func @transform_0(%arg0: i32) -> (i32, i32, i32) {
    %c0_i32 = arith.constant 0 : i32
    %c0_i32_0 = arith.constant 0 : i32
    %c0_i32_1 = arith.constant 0 : i32
    return %arg0, %c0_i32, %c0_i32_0 : i32, i32, i32
  }
  func.func @transform_1(%arg0: i32) -> (i32, i32, i32) {
    %c0_i32 = arith.constant 0 : i32
    %c0_i32_0 = arith.constant 0 : i32
    %c0_i32_1 = arith.constant 0 : i32
    return %arg0, %c0_i32, %c0_i32_0 : i32, i32, i32
  }
  func.func @transform_2(%arg0: i32) -> (i32, i32) {
    %c0_i32 = arith.constant 0 : i32
    %c0_i32_0 = arith.constant 0 : i32
    %c0_i32_1 = arith.constant 0 : i32
    return %c0_i32, %c0_i32_0 : i32, i32
  }
  func.func @transform_3(%arg0: i32) -> (i32, i32) {
    %c0_i32 = arith.constant 0 : i32
    %c0_i32_0 = arith.constant 0 : i32
    %c0_i32_1 = arith.constant 0 : i32
    return %c0_i32, %c0_i32_0 : i32, i32
  }
  func.func @transform_4(%arg0: i32) -> (i32, i32) {
    %c0_i32 = arith.constant 0 : i32
    %c0_i32_0 = arith.constant 0 : i32
    %c0_i32_1 = arith.constant 0 : i32
    return %c0_i32, %c0_i32_0 : i32, i32
  }
  func.func @transform_5(%arg0: i32) -> (i32, i32) {
    %c0_i32 = arith.constant 0 : i32
    %c0_i32_0 = arith.constant 0 : i32
    return %arg0, %c0_i32 : i32, i32
  }
}

module attributes {stable_mosaic.version = 11 : i64} {
  func.func @_bilstm_kernel(%arg0: i32, %arg1: memref<6x8x16xf32, #tpu.memory_space<vmem>>, %arg2: memref<6x8x16xf32, #tpu.memory_space<vmem>>, %arg3: memref<16x64xbf16, #tpu.memory_space<vmem>>, %arg4: memref<16x64xbf16, #tpu.memory_space<vmem>>, %arg5: memref<1x64xf32, #tpu.memory_space<vmem>>, %arg6: memref<1x64xf32, #tpu.memory_space<vmem>>, %arg7: memref<32x64xbf16, #tpu.memory_space<vmem>>, %arg8: memref<6x8x16xf32, #tpu.memory_space<vmem>>, %arg9: memref<6x8x16xf32, #tpu.memory_space<vmem>>, %arg10: memref<16x32xf32, #tpu.memory_space<vmem>>, %arg11: memref<16x16xf32, #tpu.memory_space<vmem>>, %arg12: memref<6x8x64xf32, #tpu.memory_space<vmem>>, %arg13: memref<6x8x64xf32, #tpu.memory_space<vmem>>) attributes {dimension_semantics = [#tpu.dimension_semantics<arbitrary>], iteration_bounds = array<i64: 1>, scalar_prefetch = 0 : i64, scratch_operands = 4 : i64, tpu.core_type = #tpu.core_type<tc>, window_params = [{transform_indices = @transform_0, window_bounds = array<i64: 6, 8, 16>}, {transform_indices = @transform_1, window_bounds = array<i64: 6, 8, 16>}, {pipeline_mode = #tpu.pipeline_mode<synchronous>, transform_indices = @transform_2, window_bounds = array<i64: 16, 64>}, {pipeline_mode = #tpu.pipeline_mode<synchronous>, transform_indices = @transform_3, window_bounds = array<i64: 16, 64>}, {pipeline_mode = #tpu.pipeline_mode<synchronous>, transform_indices = @transform_4, window_bounds = array<i64: 1, 64>}, {pipeline_mode = #tpu.pipeline_mode<synchronous>, transform_indices = @transform_5, window_bounds = array<i64: 1, 64>}, {pipeline_mode = #tpu.pipeline_mode<synchronous>, transform_indices = @transform_6, window_bounds = array<i64: 32, 64>}, {transform_indices = @transform_7, window_bounds = array<i64: 6, 8, 16>}, {transform_indices = @transform_8, window_bounds = array<i64: 6, 8, 16>}]} {
    %c0_i32 = arith.constant 0 : i32
    %0 = arith.cmpi eq, %arg0, %c0_i32 : i32
    %1 = arith.extui %0 : i1 to i32
    %c0_i32_0 = arith.constant 0 : i32
    %2 = arith.cmpi ne, %1, %c0_i32_0 : i32
    scf.if %2 {
      %cst_160 = arith.constant 0.000000e+00 : f32
      %342 = vector.broadcast %cst_160 : f32 to vector<16x32xf32>
      %c0_161 = arith.constant 0 : index
      %c0_162 = arith.constant 0 : index
      %343 = vector.load %arg10[%c0_161, %c0_162] : memref<16x32xf32, #tpu.memory_space<vmem>>, vector<16x32xf32>
      tpu.vector_store %arg10[%c0_161, %c0_162], %342 {strides = array<i32>} : memref<16x32xf32, #tpu.memory_space<vmem>>, vector<16x32xf32>,
      %cst_163 = arith.constant 0.000000e+00 : f32
      %344 = vector.broadcast %cst_163 : f32 to vector<16x16xf32>
      %c0_164 = arith.constant 0 : index
      %c0_165 = arith.constant 0 : index
      %345 = vector.load %arg11[%c0_164, %c0_165] : memref<16x16xf32, #tpu.memory_space<vmem>>, vector<16x16xf32>
      tpu.vector_store %arg11[%c0_164, %c0_165], %344 {strides = array<i32>} : memref<16x16xf32, #tpu.memory_space<vmem>>, vector<16x16xf32>,
    } else {
    }
    %c0 = arith.constant 0 : index
    %c0_1 = arith.constant 0 : index
    %c0_2 = arith.constant 0 : index
    %3 = vector.load %arg1[%c0, %c0_1, %c0_2] : memref<6x8x16xf32, #tpu.memory_space<vmem>>, vector<6x8x16xf32>
    %4 = vector.shape_cast %3 : vector<6x8x16xf32> to vector<48x16xf32>
    %5 = arith.truncf %4 : vector<48x16xf32> to vector<48x16xbf16>
    %c0_3 = arith.constant 0 : index
    %c0_4 = arith.constant 0 : index
    %c0_5 = arith.constant 0 : index
    %6 = vector.load %arg2[%c0_3, %c0_4, %c0_5] : memref<6x8x16xf32, #tpu.memory_space<vmem>>, vector<6x8x16xf32>
    %7 = vector.shape_cast %6 : vector<6x8x16xf32> to vector<48x16xf32>
    %8 = arith.truncf %7 : vector<48x16xf32> to vector<48x16xbf16>
    %c0_6 = arith.constant 0 : index
    %c0_7 = arith.constant 0 : index
    %9 = vector.load %arg3[%c0_6, %c0_7] : memref<16x64xbf16, #tpu.memory_space<vmem>>, vector<16x64xbf16>
    %cst = arith.constant dense<0.000000e+00> : vector<48x64xf32>
    %10 = tpu.matmul %5, %9, %cst {dimension_numbers = #tpu.dot_dimension_numbers<[1], [0], [0], [1], [0, 0, 1, 1], [], []>} : vector<48x16xbf16>, vector<16x64xbf16>, vector<48x64xf32> -> vector<48x64xf32>
    %c0_8 = arith.constant 0 : index
    %c0_9 = arith.constant 0 : index
    %11 = vector.load %arg5[%c0_8, %c0_9] : memref<1x64xf32, #tpu.memory_space<vmem>>, vector<1x64xf32>
    %12 = vector.broadcast %11 : vector<1x64xf32> to vector<48x64xf32>
    %13 = arith.addf %10, %12 : vector<48x64xf32>
    %14 = vector.shape_cast %13 : vector<48x64xf32> to vector<6x8x64xf32>
    %c0_10 = arith.constant 0 : index
    %c0_11 = arith.constant 0 : index
    %c0_12 = arith.constant 0 : index
    %15 = vector.load %arg12[%c0_10, %c0_11, %c0_12] : memref<6x8x64xf32, #tpu.memory_space<vmem>>, vector<6x8x64xf32>
    tpu.vector_store %arg12[%c0_10, %c0_11, %c0_12], %14 {strides = array<i32>} : memref<6x8x64xf32, #tpu.memory_space<vmem>>, vector<6x8x64xf32>,
    %c0_13 = arith.constant 0 : index
    %c0_14 = arith.constant 0 : index
    %16 = vector.load %arg4[%c0_13, %c0_14] : memref<16x64xbf16, #tpu.memory_space<vmem>>, vector<16x64xbf16>
    %cst_15 = arith.constant dense<0.000000e+00> : vector<48x64xf32>
    %17 = tpu.matmul %8, %16, %cst_15 {dimension_numbers = #tpu.dot_dimension_numbers<[1], [0], [0], [1], [0, 0, 1, 1], [], []>} : vector<48x16xbf16>, vector<16x64xbf16>, vector<48x64xf32> -> vector<48x64xf32>
    %c0_16 = arith.constant 0 : index
    %c0_17 = arith.constant 0 : index
    %18 = vector.load %arg6[%c0_16, %c0_17] : memref<1x64xf32, #tpu.memory_space<vmem>>, vector<1x64xf32>
    %19 = vector.broadcast %18 : vector<1x64xf32> to vector<48x64xf32>
    %20 = arith.addf %17, %19 : vector<48x64xf32>
    %21 = vector.shape_cast %20 : vector<48x64xf32> to vector<6x8x64xf32>
    %c0_18 = arith.constant 0 : index
    %c0_19 = arith.constant 0 : index
    %c0_20 = arith.constant 0 : index
    %22 = vector.load %arg13[%c0_18, %c0_19, %c0_20] : memref<6x8x64xf32, #tpu.memory_space<vmem>>, vector<6x8x64xf32>
    tpu.vector_store %arg13[%c0_18, %c0_19, %c0_20], %21 {strides = array<i32>} : memref<6x8x64xf32, #tpu.memory_space<vmem>>, vector<6x8x64xf32>,
    %c0_21 = arith.constant 0 : index
    %c0_22 = arith.constant 0 : index
    %23 = vector.load %arg7[%c0_21, %c0_22] : memref<32x64xbf16, #tpu.memory_space<vmem>>, vector<32x64xbf16>
    %c0_i32_23 = arith.constant 0 : i32
    %c5_i32 = arith.constant 5 : i32
    %24 = arith.subi %c5_i32, %c0_i32_23 : i32
    %c0_24 = arith.constant 0 : index
    %c0_25 = arith.constant 0 : index
    %25 = vector.load %arg10[%c0_24, %c0_25] : memref<16x32xf32, #tpu.memory_space<vmem>>, vector<16x32xf32>
    %26 = arith.truncf %25 : vector<16x32xf32> to vector<16x32xbf16>
    %cst_26 = arith.constant dense<0.000000e+00> : vector<16x64xf32>
    %27 = tpu.matmul %26, %23, %cst_26 {dimension_numbers = #tpu.dot_dimension_numbers<[1], [0], [0], [1], [0, 0, 1, 1], [], []>} : vector<16x32xbf16>, vector<32x64xbf16>, vector<16x64xf32> -> vector<16x64xf32>
    %28 = arith.index_cast %c0_i32_23 : i32 to index
    %c0_27 = arith.constant 0 : index
    %c0_28 = arith.constant 0 : index
    %29 = vector.load %arg12[%28, %c0_27, %c0_28] : memref<6x8x64xf32, #tpu.memory_space<vmem>>, vector<1x8x64xf32>
    %30 = vector.shape_cast %29 : vector<1x8x64xf32> to vector<8x64xf32>
    %31 = arith.index_cast %24 : i32 to index
    %c0_29 = arith.constant 0 : index
    %c0_30 = arith.constant 0 : index
    %32 = vector.load %arg13[%31, %c0_29, %c0_30] : memref<6x8x64xf32, #tpu.memory_space<vmem>>, vector<1x8x64xf32>
    %33 = vector.shape_cast %32 : vector<1x8x64xf32> to vector<8x64xf32>
    %34 = tpu.concatenate %30, %33 in 0 : vector<8x64xf32>, vector<8x64xf32> -> vector<16x64xf32>
    %35 = arith.addf %34, %27 : vector<16x64xf32>
    %36 = vector.extract_strided_slice %35 {offsets = [0, 0], sizes = [16, 16], strides = [1, 1]} : vector<16x64xf32> to vector<16x16xf32>
    %37 = arith.negf %36 : vector<16x16xf32>
    %38 = math.exp %37 : vector<16x16xf32>
    %cst_31 = arith.constant 1.000000e+00 : f32
    %39 = vector.broadcast %cst_31 : f32 to vector<16x16xf32>
    %40 = arith.addf %39, %38 : vector<16x16xf32>
    %41 = arith.divf %39, %40 : vector<16x16xf32>
    %42 = vector.extract_strided_slice %35 {offsets = [0, 16], sizes = [16, 16], strides = [1, 1]} : vector<16x64xf32> to vector<16x16xf32>
    %43 = arith.negf %42 : vector<16x16xf32>
    %44 = math.exp %43 : vector<16x16xf32>
    %cst_32 = arith.constant 1.000000e+00 : f32
    %45 = vector.broadcast %cst_32 : f32 to vector<16x16xf32>
    %46 = arith.addf %45, %44 : vector<16x16xf32>
    %47 = arith.divf %45, %46 : vector<16x16xf32>
    %48 = vector.extract_strided_slice %35 {offsets = [0, 32], sizes = [16, 16], strides = [1, 1]} : vector<16x64xf32> to vector<16x16xf32>
    %49 = math.tanh %48 : vector<16x16xf32>
    %50 = vector.extract_strided_slice %35 {offsets = [0, 48], sizes = [16, 16], strides = [1, 1]} : vector<16x64xf32> to vector<16x16xf32>
    %51 = arith.negf %50 : vector<16x16xf32>
    %52 = math.exp %51 : vector<16x16xf32>
    %cst_33 = arith.constant 1.000000e+00 : f32
    %53 = vector.broadcast %cst_33 : f32 to vector<16x16xf32>
    %54 = arith.addf %53, %52 : vector<16x16xf32>
    %55 = arith.divf %53, %54 : vector<16x16xf32>
    %c0_34 = arith.constant 0 : index
    %c0_35 = arith.constant 0 : index
    %56 = vector.load %arg11[%c0_34, %c0_35] : memref<16x16xf32, #tpu.memory_space<vmem>>, vector<16x16xf32>
    %57 = arith.mulf %47, %56 : vector<16x16xf32>
    %58 = arith.mulf %41, %49 : vector<16x16xf32>
    %59 = arith.addf %57, %58 : vector<16x16xf32>
    %60 = math.tanh %59 : vector<16x16xf32>
    %61 = arith.mulf %55, %60 : vector<16x16xf32>
    %c0_36 = arith.constant 0 : index
    %c0_37 = arith.constant 0 : index
    %62 = vector.load %arg11[%c0_36, %c0_37] : memref<16x16xf32, #tpu.memory_space<vmem>>, vector<16x16xf32>
    tpu.vector_store %arg11[%c0_36, %c0_37], %59 {strides = array<i32>} : memref<16x16xf32, #tpu.memory_space<vmem>>, vector<16x16xf32>,
    %63 = vector.extract_strided_slice %61 {offsets = [0, 0], sizes = [8, 16], strides = [1, 1]} : vector<16x16xf32> to vector<8x16xf32>
    %c0_38 = arith.constant 0 : index
    %c0_39 = arith.constant 0 : index
    %64 = vector.load %arg10[%c0_38, %c0_39] : memref<16x32xf32, #tpu.memory_space<vmem>>, vector<8x16xf32>
    tpu.vector_store %arg10[%c0_38, %c0_39], %63 {strides = array<i32>} : memref<16x32xf32, #tpu.memory_space<vmem>>, vector<8x16xf32>,
    %65 = vector.extract_strided_slice %61 {offsets = [8, 0], sizes = [8, 16], strides = [1, 1]} : vector<16x16xf32> to vector<8x16xf32>
    %c8 = arith.constant 8 : index
    %c16 = arith.constant 16 : index
    %66 = vector.load %arg10[%c8, %c16] : memref<16x32xf32, #tpu.memory_space<vmem>>, vector<8x16xf32>
    tpu.vector_store %arg10[%c8, %c16], %65 {strides = array<i32>} : memref<16x32xf32, #tpu.memory_space<vmem>>, vector<8x16xf32>,
    %67 = vector.extract_strided_slice %61 {offsets = [0, 0], sizes = [8, 16], strides = [1, 1]} : vector<16x16xf32> to vector<8x16xf32>
    %68 = arith.index_cast %c0_i32_23 : i32 to index
    %c0_40 = arith.constant 0 : index
    %c0_41 = arith.constant 0 : index
    %69 = vector.load %arg8[%68, %c0_40, %c0_41] : memref<6x8x16xf32, #tpu.memory_space<vmem>>, vector<1x8x16xf32>
    %70 = vector.shape_cast %69 : vector<1x8x16xf32> to vector<8x16xf32>
    %71 = vector.shape_cast %67 : vector<8x16xf32> to vector<1x8x16xf32>
    tpu.vector_store %arg8[%68, %c0_40, %c0_41], %71 {strides = array<i32>} : memref<6x8x16xf32, #tpu.memory_space<vmem>>, vector<1x8x16xf32>,
    %72 = vector.extract_strided_slice %61 {offsets = [8, 0], sizes = [8, 16], strides = [1, 1]} : vector<16x16xf32> to vector<8x16xf32>
    %73 = arith.index_cast %24 : i32 to index
    %c0_42 = arith.constant 0 : index
    %c0_43 = arith.constant 0 : index
    %74 = vector.load %arg9[%73, %c0_42, %c0_43] : memref<6x8x16xf32, #tpu.memory_space<vmem>>, vector<1x8x16xf32>
    %75 = vector.shape_cast %74 : vector<1x8x16xf32> to vector<8x16xf32>
    %76 = vector.shape_cast %72 : vector<8x16xf32> to vector<1x8x16xf32>
    tpu.vector_store %arg9[%73, %c0_42, %c0_43], %76 {strides = array<i32>} : memref<6x8x16xf32, #tpu.memory_space<vmem>>, vector<1x8x16xf32>,
    %c1_i32 = arith.constant 1 : i32
    %c5_i32_44 = arith.constant 5 : i32
    %77 = arith.subi %c5_i32_44, %c1_i32 : i32
    %c0_45 = arith.constant 0 : index
    %c0_46 = arith.constant 0 : index
    %78 = vector.load %arg10[%c0_45, %c0_46] : memref<16x32xf32, #tpu.memory_space<vmem>>, vector<16x32xf32>
    %79 = arith.truncf %78 : vector<16x32xf32> to vector<16x32xbf16>
    %cst_47 = arith.constant dense<0.000000e+00> : vector<16x64xf32>
    %80 = tpu.matmul %79, %23, %cst_47 {dimension_numbers = #tpu.dot_dimension_numbers<[1], [0], [0], [1], [0, 0, 1, 1], [], []>} : vector<16x32xbf16>, vector<32x64xbf16>, vector<16x64xf32> -> vector<16x64xf32>
    %81 = arith.index_cast %c1_i32 : i32 to index
    %c0_48 = arith.constant 0 : index
    %c0_49 = arith.constant 0 : index
    %82 = vector.load %arg12[%81, %c0_48, %c0_49] : memref<6x8x64xf32, #tpu.memory_space<vmem>>, vector<1x8x64xf32>
    %83 = vector.shape_cast %82 : vector<1x8x64xf32> to vector<8x64xf32>
    %84 = arith.index_cast %77 : i32 to index
    %c0_50 = arith.constant 0 : index
    %c0_51 = arith.constant 0 : index
    %85 = vector.load %arg13[%84, %c0_50, %c0_51] : memref<6x8x64xf32, #tpu.memory_space<vmem>>, vector<1x8x64xf32>
    %86 = vector.shape_cast %85 : vector<1x8x64xf32> to vector<8x64xf32>
    %87 = tpu.concatenate %83, %86 in 0 : vector<8x64xf32>, vector<8x64xf32> -> vector<16x64xf32>
    %88 = arith.addf %87, %80 : vector<16x64xf32>
    %89 = vector.extract_strided_slice %88 {offsets = [0, 0], sizes = [16, 16], strides = [1, 1]} : vector<16x64xf32> to vector<16x16xf32>
    %90 = arith.negf %89 : vector<16x16xf32>
    %91 = math.exp %90 : vector<16x16xf32>
    %cst_52 = arith.constant 1.000000e+00 : f32
    %92 = vector.broadcast %cst_52 : f32 to vector<16x16xf32>
    %93 = arith.addf %92, %91 : vector<16x16xf32>
    %94 = arith.divf %92, %93 : vector<16x16xf32>
    %95 = vector.extract_strided_slice %88 {offsets = [0, 16], sizes = [16, 16], strides = [1, 1]} : vector<16x64xf32> to vector<16x16xf32>
    %96 = arith.negf %95 : vector<16x16xf32>
    %97 = math.exp %96 : vector<16x16xf32>
    %cst_53 = arith.constant 1.000000e+00 : f32
    %98 = vector.broadcast %cst_53 : f32 to vector<16x16xf32>
    %99 = arith.addf %98, %97 : vector<16x16xf32>
    %100 = arith.divf %98, %99 : vector<16x16xf32>
    %101 = vector.extract_strided_slice %88 {offsets = [0, 32], sizes = [16, 16], strides = [1, 1]} : vector<16x64xf32> to vector<16x16xf32>
    %102 = math.tanh %101 : vector<16x16xf32>
    %103 = vector.extract_strided_slice %88 {offsets = [0, 48], sizes = [16, 16], strides = [1, 1]} : vector<16x64xf32> to vector<16x16xf32>
    %104 = arith.negf %103 : vector<16x16xf32>
    %105 = math.exp %104 : vector<16x16xf32>
    %cst_54 = arith.constant 1.000000e+00 : f32
    %106 = vector.broadcast %cst_54 : f32 to vector<16x16xf32>
    %107 = arith.addf %106, %105 : vector<16x16xf32>
    %108 = arith.divf %106, %107 : vector<16x16xf32>
    %c0_55 = arith.constant 0 : index
    %c0_56 = arith.constant 0 : index
    %109 = vector.load %arg11[%c0_55, %c0_56] : memref<16x16xf32, #tpu.memory_space<vmem>>, vector<16x16xf32>
    %110 = arith.mulf %100, %109 : vector<16x16xf32>
    %111 = arith.mulf %94, %102 : vector<16x16xf32>
    %112 = arith.addf %110, %111 : vector<16x16xf32>
    %113 = math.tanh %112 : vector<16x16xf32>
    %114 = arith.mulf %108, %113 : vector<16x16xf32>
    %c0_57 = arith.constant 0 : index
    %c0_58 = arith.constant 0 : index
    %115 = vector.load %arg11[%c0_57, %c0_58] : memref<16x16xf32, #tpu.memory_space<vmem>>, vector<16x16xf32>
    tpu.vector_store %arg11[%c0_57, %c0_58], %112 {strides = array<i32>} : memref<16x16xf32, #tpu.memory_space<vmem>>, vector<16x16xf32>,
    %116 = vector.extract_strided_slice %114 {offsets = [0, 0], sizes = [8, 16], strides = [1, 1]} : vector<16x16xf32> to vector<8x16xf32>
    %c0_59 = arith.constant 0 : index
    %c0_60 = arith.constant 0 : index
    %117 = vector.load %arg10[%c0_59, %c0_60] : memref<16x32xf32, #tpu.memory_space<vmem>>, vector<8x16xf32>
    tpu.vector_store %arg10[%c0_59, %c0_60], %116 {strides = array<i32>} : memref<16x32xf32, #tpu.memory_space<vmem>>, vector<8x16xf32>,
    %118 = vector.extract_strided_slice %114 {offsets = [8, 0], sizes = [8, 16], strides = [1, 1]} : vector<16x16xf32> to vector<8x16xf32>
    %c8_61 = arith.constant 8 : index
    %c16_62 = arith.constant 16 : index
    %119 = vector.load %arg10[%c8_61, %c16_62] : memref<16x32xf32, #tpu.memory_space<vmem>>, vector<8x16xf32>
    tpu.vector_store %arg10[%c8_61, %c16_62], %118 {strides = array<i32>} : memref<16x32xf32, #tpu.memory_space<vmem>>, vector<8x16xf32>,
    %120 = vector.extract_strided_slice %114 {offsets = [0, 0], sizes = [8, 16], strides = [1, 1]} : vector<16x16xf32> to vector<8x16xf32>
    %121 = arith.index_cast %c1_i32 : i32 to index
    %c0_63 = arith.constant 0 : index
    %c0_64 = arith.constant 0 : index
    %122 = vector.load %arg8[%121, %c0_63, %c0_64] : memref<6x8x16xf32, #tpu.memory_space<vmem>>, vector<1x8x16xf32>
    %123 = vector.shape_cast %122 : vector<1x8x16xf32> to vector<8x16xf32>
    %124 = vector.shape_cast %120 : vector<8x16xf32> to vector<1x8x16xf32>
    tpu.vector_store %arg8[%121, %c0_63, %c0_64], %124 {strides = array<i32>} : memref<6x8x16xf32, #tpu.memory_space<vmem>>, vector<1x8x16xf32>,
    %125 = vector.extract_strided_slice %114 {offsets = [8, 0], sizes = [8, 16], strides = [1, 1]} : vector<16x16xf32> to vector<8x16xf32>
    %126 = arith.index_cast %77 : i32 to index
    %c0_65 = arith.constant 0 : index
    %c0_66 = arith.constant 0 : index
    %127 = vector.load %arg9[%126, %c0_65, %c0_66] : memref<6x8x16xf32, #tpu.memory_space<vmem>>, vector<1x8x16xf32>
    %128 = vector.shape_cast %127 : vector<1x8x16xf32> to vector<8x16xf32>
    %129 = vector.shape_cast %125 : vector<8x16xf32> to vector<1x8x16xf32>
    tpu.vector_store %arg9[%126, %c0_65, %c0_66], %129 {strides = array<i32>} : memref<6x8x16xf32, #tpu.memory_space<vmem>>, vector<1x8x16xf32>,
    %c2_i32 = arith.constant 2 : i32
    %c5_i32_67 = arith.constant 5 : i32
    %130 = arith.subi %c5_i32_67, %c2_i32 : i32
    %c0_68 = arith.constant 0 : index
    %c0_69 = arith.constant 0 : index
    %131 = vector.load %arg10[%c0_68, %c0_69] : memref<16x32xf32, #tpu.memory_space<vmem>>, vector<16x32xf32>
    %132 = arith.truncf %131 : vector<16x32xf32> to vector<16x32xbf16>
    %cst_70 = arith.constant dense<0.000000e+00> : vector<16x64xf32>
    %133 = tpu.matmul %132, %23, %cst_70 {dimension_numbers = #tpu.dot_dimension_numbers<[1], [0], [0], [1], [0, 0, 1, 1], [], []>} : vector<16x32xbf16>, vector<32x64xbf16>, vector<16x64xf32> -> vector<16x64xf32>
    %134 = arith.index_cast %c2_i32 : i32 to index
    %c0_71 = arith.constant 0 : index
    %c0_72 = arith.constant 0 : index
    %135 = vector.load %arg12[%134, %c0_71, %c0_72] : memref<6x8x64xf32, #tpu.memory_space<vmem>>, vector<1x8x64xf32>
    %136 = vector.shape_cast %135 : vector<1x8x64xf32> to vector<8x64xf32>
    %137 = arith.index_cast %130 : i32 to index
    %c0_73 = arith.constant 0 : index
    %c0_74 = arith.constant 0 : index
    %138 = vector.load %arg13[%137, %c0_73, %c0_74] : memref<6x8x64xf32, #tpu.memory_space<vmem>>, vector<1x8x64xf32>
    %139 = vector.shape_cast %138 : vector<1x8x64xf32> to vector<8x64xf32>
    %140 = tpu.concatenate %136, %139 in 0 : vector<8x64xf32>, vector<8x64xf32> -> vector<16x64xf32>
    %141 = arith.addf %140, %133 : vector<16x64xf32>
    %142 = vector.extract_strided_slice %141 {offsets = [0, 0], sizes = [16, 16], strides = [1, 1]} : vector<16x64xf32> to vector<16x16xf32>
    %143 = arith.negf %142 : vector<16x16xf32>
    %144 = math.exp %143 : vector<16x16xf32>
    %cst_75 = arith.constant 1.000000e+00 : f32
    %145 = vector.broadcast %cst_75 : f32 to vector<16x16xf32>
    %146 = arith.addf %145, %144 : vector<16x16xf32>
    %147 = arith.divf %145, %146 : vector<16x16xf32>
    %148 = vector.extract_strided_slice %141 {offsets = [0, 16], sizes = [16, 16], strides = [1, 1]} : vector<16x64xf32> to vector<16x16xf32>
    %149 = arith.negf %148 : vector<16x16xf32>
    %150 = math.exp %149 : vector<16x16xf32>
    %cst_76 = arith.constant 1.000000e+00 : f32
    %151 = vector.broadcast %cst_76 : f32 to vector<16x16xf32>
    %152 = arith.addf %151, %150 : vector<16x16xf32>
    %153 = arith.divf %151, %152 : vector<16x16xf32>
    %154 = vector.extract_strided_slice %141 {offsets = [0, 32], sizes = [16, 16], strides = [1, 1]} : vector<16x64xf32> to vector<16x16xf32>
    %155 = math.tanh %154 : vector<16x16xf32>
    %156 = vector.extract_strided_slice %141 {offsets = [0, 48], sizes = [16, 16], strides = [1, 1]} : vector<16x64xf32> to vector<16x16xf32>
    %157 = arith.negf %156 : vector<16x16xf32>
    %158 = math.exp %157 : vector<16x16xf32>
    %cst_77 = arith.constant 1.000000e+00 : f32
    %159 = vector.broadcast %cst_77 : f32 to vector<16x16xf32>
    %160 = arith.addf %159, %158 : vector<16x16xf32>
    %161 = arith.divf %159, %160 : vector<16x16xf32>
    %c0_78 = arith.constant 0 : index
    %c0_79 = arith.constant 0 : index
    %162 = vector.load %arg11[%c0_78, %c0_79] : memref<16x16xf32, #tpu.memory_space<vmem>>, vector<16x16xf32>
    %163 = arith.mulf %153, %162 : vector<16x16xf32>
    %164 = arith.mulf %147, %155 : vector<16x16xf32>
    %165 = arith.addf %163, %164 : vector<16x16xf32>
    %166 = math.tanh %165 : vector<16x16xf32>
    %167 = arith.mulf %161, %166 : vector<16x16xf32>
    %c0_80 = arith.constant 0 : index
    %c0_81 = arith.constant 0 : index
    %168 = vector.load %arg11[%c0_80, %c0_81] : memref<16x16xf32, #tpu.memory_space<vmem>>, vector<16x16xf32>
    tpu.vector_store %arg11[%c0_80, %c0_81], %165 {strides = array<i32>} : memref<16x16xf32, #tpu.memory_space<vmem>>, vector<16x16xf32>,
    %169 = vector.extract_strided_slice %167 {offsets = [0, 0], sizes = [8, 16], strides = [1, 1]} : vector<16x16xf32> to vector<8x16xf32>
    %c0_82 = arith.constant 0 : index
    %c0_83 = arith.constant 0 : index
    %170 = vector.load %arg10[%c0_82, %c0_83] : memref<16x32xf32, #tpu.memory_space<vmem>>, vector<8x16xf32>
    tpu.vector_store %arg10[%c0_82, %c0_83], %169 {strides = array<i32>} : memref<16x32xf32, #tpu.memory_space<vmem>>, vector<8x16xf32>,
    %171 = vector.extract_strided_slice %167 {offsets = [8, 0], sizes = [8, 16], strides = [1, 1]} : vector<16x16xf32> to vector<8x16xf32>
    %c8_84 = arith.constant 8 : index
    %c16_85 = arith.constant 16 : index
    %172 = vector.load %arg10[%c8_84, %c16_85] : memref<16x32xf32, #tpu.memory_space<vmem>>, vector<8x16xf32>
    tpu.vector_store %arg10[%c8_84, %c16_85], %171 {strides = array<i32>} : memref<16x32xf32, #tpu.memory_space<vmem>>, vector<8x16xf32>,
    %173 = vector.extract_strided_slice %167 {offsets = [0, 0], sizes = [8, 16], strides = [1, 1]} : vector<16x16xf32> to vector<8x16xf32>
    %174 = arith.index_cast %c2_i32 : i32 to index
    %c0_86 = arith.constant 0 : index
    %c0_87 = arith.constant 0 : index
    %175 = vector.load %arg8[%174, %c0_86, %c0_87] : memref<6x8x16xf32, #tpu.memory_space<vmem>>, vector<1x8x16xf32>
    %176 = vector.shape_cast %175 : vector<1x8x16xf32> to vector<8x16xf32>
    %177 = vector.shape_cast %173 : vector<8x16xf32> to vector<1x8x16xf32>
    tpu.vector_store %arg8[%174, %c0_86, %c0_87], %177 {strides = array<i32>} : memref<6x8x16xf32, #tpu.memory_space<vmem>>, vector<1x8x16xf32>,
    %178 = vector.extract_strided_slice %167 {offsets = [8, 0], sizes = [8, 16], strides = [1, 1]} : vector<16x16xf32> to vector<8x16xf32>
    %179 = arith.index_cast %130 : i32 to index
    %c0_88 = arith.constant 0 : index
    %c0_89 = arith.constant 0 : index
    %180 = vector.load %arg9[%179, %c0_88, %c0_89] : memref<6x8x16xf32, #tpu.memory_space<vmem>>, vector<1x8x16xf32>
    %181 = vector.shape_cast %180 : vector<1x8x16xf32> to vector<8x16xf32>
    %182 = vector.shape_cast %178 : vector<8x16xf32> to vector<1x8x16xf32>
    tpu.vector_store %arg9[%179, %c0_88, %c0_89], %182 {strides = array<i32>} : memref<6x8x16xf32, #tpu.memory_space<vmem>>, vector<1x8x16xf32>,
    %c3_i32 = arith.constant 3 : i32
    %c5_i32_90 = arith.constant 5 : i32
    %183 = arith.subi %c5_i32_90, %c3_i32 : i32
    %c0_91 = arith.constant 0 : index
    %c0_92 = arith.constant 0 : index
    %184 = vector.load %arg10[%c0_91, %c0_92] : memref<16x32xf32, #tpu.memory_space<vmem>>, vector<16x32xf32>
    %185 = arith.truncf %184 : vector<16x32xf32> to vector<16x32xbf16>
    %cst_93 = arith.constant dense<0.000000e+00> : vector<16x64xf32>
    %186 = tpu.matmul %185, %23, %cst_93 {dimension_numbers = #tpu.dot_dimension_numbers<[1], [0], [0], [1], [0, 0, 1, 1], [], []>} : vector<16x32xbf16>, vector<32x64xbf16>, vector<16x64xf32> -> vector<16x64xf32>
    %187 = arith.index_cast %c3_i32 : i32 to index
    %c0_94 = arith.constant 0 : index
    %c0_95 = arith.constant 0 : index
    %188 = vector.load %arg12[%187, %c0_94, %c0_95] : memref<6x8x64xf32, #tpu.memory_space<vmem>>, vector<1x8x64xf32>
    %189 = vector.shape_cast %188 : vector<1x8x64xf32> to vector<8x64xf32>
    %190 = arith.index_cast %183 : i32 to index
    %c0_96 = arith.constant 0 : index
    %c0_97 = arith.constant 0 : index
    %191 = vector.load %arg13[%190, %c0_96, %c0_97] : memref<6x8x64xf32, #tpu.memory_space<vmem>>, vector<1x8x64xf32>
    %192 = vector.shape_cast %191 : vector<1x8x64xf32> to vector<8x64xf32>
    %193 = tpu.concatenate %189, %192 in 0 : vector<8x64xf32>, vector<8x64xf32> -> vector<16x64xf32>
    %194 = arith.addf %193, %186 : vector<16x64xf32>
    %195 = vector.extract_strided_slice %194 {offsets = [0, 0], sizes = [16, 16], strides = [1, 1]} : vector<16x64xf32> to vector<16x16xf32>
    %196 = arith.negf %195 : vector<16x16xf32>
    %197 = math.exp %196 : vector<16x16xf32>
    %cst_98 = arith.constant 1.000000e+00 : f32
    %198 = vector.broadcast %cst_98 : f32 to vector<16x16xf32>
    %199 = arith.addf %198, %197 : vector<16x16xf32>
    %200 = arith.divf %198, %199 : vector<16x16xf32>
    %201 = vector.extract_strided_slice %194 {offsets = [0, 16], sizes = [16, 16], strides = [1, 1]} : vector<16x64xf32> to vector<16x16xf32>
    %202 = arith.negf %201 : vector<16x16xf32>
    %203 = math.exp %202 : vector<16x16xf32>
    %cst_99 = arith.constant 1.000000e+00 : f32
    %204 = vector.broadcast %cst_99 : f32 to vector<16x16xf32>
    %205 = arith.addf %204, %203 : vector<16x16xf32>
    %206 = arith.divf %204, %205 : vector<16x16xf32>
    %207 = vector.extract_strided_slice %194 {offsets = [0, 32], sizes = [16, 16], strides = [1, 1]} : vector<16x64xf32> to vector<16x16xf32>
    %208 = math.tanh %207 : vector<16x16xf32>
    %209 = vector.extract_strided_slice %194 {offsets = [0, 48], sizes = [16, 16], strides = [1, 1]} : vector<16x64xf32> to vector<16x16xf32>
    %210 = arith.negf %209 : vector<16x16xf32>
    %211 = math.exp %210 : vector<16x16xf32>
    %cst_100 = arith.constant 1.000000e+00 : f32
    %212 = vector.broadcast %cst_100 : f32 to vector<16x16xf32>
    %213 = arith.addf %212, %211 : vector<16x16xf32>
    %214 = arith.divf %212, %213 : vector<16x16xf32>
    %c0_101 = arith.constant 0 : index
    %c0_102 = arith.constant 0 : index
    %215 = vector.load %arg11[%c0_101, %c0_102] : memref<16x16xf32, #tpu.memory_space<vmem>>, vector<16x16xf32>
    %216 = arith.mulf %206, %215 : vector<16x16xf32>
    %217 = arith.mulf %200, %208 : vector<16x16xf32>
    %218 = arith.addf %216, %217 : vector<16x16xf32>
    %219 = math.tanh %218 : vector<16x16xf32>
    %220 = arith.mulf %214, %219 : vector<16x16xf32>
    %c0_103 = arith.constant 0 : index
    %c0_104 = arith.constant 0 : index
    %221 = vector.load %arg11[%c0_103, %c0_104] : memref<16x16xf32, #tpu.memory_space<vmem>>, vector<16x16xf32>
    tpu.vector_store %arg11[%c0_103, %c0_104], %218 {strides = array<i32>} : memref<16x16xf32, #tpu.memory_space<vmem>>, vector<16x16xf32>,
    %222 = vector.extract_strided_slice %220 {offsets = [0, 0], sizes = [8, 16], strides = [1, 1]} : vector<16x16xf32> to vector<8x16xf32>
    %c0_105 = arith.constant 0 : index
    %c0_106 = arith.constant 0 : index
    %223 = vector.load %arg10[%c0_105, %c0_106] : memref<16x32xf32, #tpu.memory_space<vmem>>, vector<8x16xf32>
    tpu.vector_store %arg10[%c0_105, %c0_106], %222 {strides = array<i32>} : memref<16x32xf32, #tpu.memory_space<vmem>>, vector<8x16xf32>,
    %224 = vector.extract_strided_slice %220 {offsets = [8, 0], sizes = [8, 16], strides = [1, 1]} : vector<16x16xf32> to vector<8x16xf32>
    %c8_107 = arith.constant 8 : index
    %c16_108 = arith.constant 16 : index
    %225 = vector.load %arg10[%c8_107, %c16_108] : memref<16x32xf32, #tpu.memory_space<vmem>>, vector<8x16xf32>
    tpu.vector_store %arg10[%c8_107, %c16_108], %224 {strides = array<i32>} : memref<16x32xf32, #tpu.memory_space<vmem>>, vector<8x16xf32>,
    %226 = vector.extract_strided_slice %220 {offsets = [0, 0], sizes = [8, 16], strides = [1, 1]} : vector<16x16xf32> to vector<8x16xf32>
    %227 = arith.index_cast %c3_i32 : i32 to index
    %c0_109 = arith.constant 0 : index
    %c0_110 = arith.constant 0 : index
    %228 = vector.load %arg8[%227, %c0_109, %c0_110] : memref<6x8x16xf32, #tpu.memory_space<vmem>>, vector<1x8x16xf32>
    %229 = vector.shape_cast %228 : vector<1x8x16xf32> to vector<8x16xf32>
    %230 = vector.shape_cast %226 : vector<8x16xf32> to vector<1x8x16xf32>
    tpu.vector_store %arg8[%227, %c0_109, %c0_110], %230 {strides = array<i32>} : memref<6x8x16xf32, #tpu.memory_space<vmem>>, vector<1x8x16xf32>,
    %231 = vector.extract_strided_slice %220 {offsets = [8, 0], sizes = [8, 16], strides = [1, 1]} : vector<16x16xf32> to vector<8x16xf32>
    %232 = arith.index_cast %183 : i32 to index
    %c0_111 = arith.constant 0 : index
    %c0_112 = arith.constant 0 : index
    %233 = vector.load %arg9[%232, %c0_111, %c0_112] : memref<6x8x16xf32, #tpu.memory_space<vmem>>, vector<1x8x16xf32>
    %234 = vector.shape_cast %233 : vector<1x8x16xf32> to vector<8x16xf32>
    %235 = vector.shape_cast %231 : vector<8x16xf32> to vector<1x8x16xf32>
    tpu.vector_store %arg9[%232, %c0_111, %c0_112], %235 {strides = array<i32>} : memref<6x8x16xf32, #tpu.memory_space<vmem>>, vector<1x8x16xf32>,
    %c4_i32 = arith.constant 4 : i32
    %c5_i32_113 = arith.constant 5 : i32
    %236 = arith.subi %c5_i32_113, %c4_i32 : i32
    %c0_114 = arith.constant 0 : index
    %c0_115 = arith.constant 0 : index
    %237 = vector.load %arg10[%c0_114, %c0_115] : memref<16x32xf32, #tpu.memory_space<vmem>>, vector<16x32xf32>
    %238 = arith.truncf %237 : vector<16x32xf32> to vector<16x32xbf16>
    %cst_116 = arith.constant dense<0.000000e+00> : vector<16x64xf32>
    %239 = tpu.matmul %238, %23, %cst_116 {dimension_numbers = #tpu.dot_dimension_numbers<[1], [0], [0], [1], [0, 0, 1, 1], [], []>} : vector<16x32xbf16>, vector<32x64xbf16>, vector<16x64xf32> -> vector<16x64xf32>
    %240 = arith.index_cast %c4_i32 : i32 to index
    %c0_117 = arith.constant 0 : index
    %c0_118 = arith.constant 0 : index
    %241 = vector.load %arg12[%240, %c0_117, %c0_118] : memref<6x8x64xf32, #tpu.memory_space<vmem>>, vector<1x8x64xf32>
    %242 = vector.shape_cast %241 : vector<1x8x64xf32> to vector<8x64xf32>
    %243 = arith.index_cast %236 : i32 to index
    %c0_119 = arith.constant 0 : index
    %c0_120 = arith.constant 0 : index
    %244 = vector.load %arg13[%243, %c0_119, %c0_120] : memref<6x8x64xf32, #tpu.memory_space<vmem>>, vector<1x8x64xf32>
    %245 = vector.shape_cast %244 : vector<1x8x64xf32> to vector<8x64xf32>
    %246 = tpu.concatenate %242, %245 in 0 : vector<8x64xf32>, vector<8x64xf32> -> vector<16x64xf32>
    %247 = arith.addf %246, %239 : vector<16x64xf32>
    %248 = vector.extract_strided_slice %247 {offsets = [0, 0], sizes = [16, 16], strides = [1, 1]} : vector<16x64xf32> to vector<16x16xf32>
    %249 = arith.negf %248 : vector<16x16xf32>
    %250 = math.exp %249 : vector<16x16xf32>
    %cst_121 = arith.constant 1.000000e+00 : f32
    %251 = vector.broadcast %cst_121 : f32 to vector<16x16xf32>
    %252 = arith.addf %251, %250 : vector<16x16xf32>
    %253 = arith.divf %251, %252 : vector<16x16xf32>
    %254 = vector.extract_strided_slice %247 {offsets = [0, 16], sizes = [16, 16], strides = [1, 1]} : vector<16x64xf32> to vector<16x16xf32>
    %255 = arith.negf %254 : vector<16x16xf32>
    %256 = math.exp %255 : vector<16x16xf32>
    %cst_122 = arith.constant 1.000000e+00 : f32
    %257 = vector.broadcast %cst_122 : f32 to vector<16x16xf32>
    %258 = arith.addf %257, %256 : vector<16x16xf32>
    %259 = arith.divf %257, %258 : vector<16x16xf32>
    %260 = vector.extract_strided_slice %247 {offsets = [0, 32], sizes = [16, 16], strides = [1, 1]} : vector<16x64xf32> to vector<16x16xf32>
    %261 = math.tanh %260 : vector<16x16xf32>
    %262 = vector.extract_strided_slice %247 {offsets = [0, 48], sizes = [16, 16], strides = [1, 1]} : vector<16x64xf32> to vector<16x16xf32>
    %263 = arith.negf %262 : vector<16x16xf32>
    %264 = math.exp %263 : vector<16x16xf32>
    %cst_123 = arith.constant 1.000000e+00 : f32
    %265 = vector.broadcast %cst_123 : f32 to vector<16x16xf32>
    %266 = arith.addf %265, %264 : vector<16x16xf32>
    %267 = arith.divf %265, %266 : vector<16x16xf32>
    %c0_124 = arith.constant 0 : index
    %c0_125 = arith.constant 0 : index
    %268 = vector.load %arg11[%c0_124, %c0_125] : memref<16x16xf32, #tpu.memory_space<vmem>>, vector<16x16xf32>
    %269 = arith.mulf %259, %268 : vector<16x16xf32>
    %270 = arith.mulf %253, %261 : vector<16x16xf32>
    %271 = arith.addf %269, %270 : vector<16x16xf32>
    %272 = math.tanh %271 : vector<16x16xf32>
    %273 = arith.mulf %267, %272 : vector<16x16xf32>
    %c0_126 = arith.constant 0 : index
    %c0_127 = arith.constant 0 : index
    %274 = vector.load %arg11[%c0_126, %c0_127] : memref<16x16xf32, #tpu.memory_space<vmem>>, vector<16x16xf32>
    tpu.vector_store %arg11[%c0_126, %c0_127], %271 {strides = array<i32>} : memref<16x16xf32, #tpu.memory_space<vmem>>, vector<16x16xf32>,
    %275 = vector.extract_strided_slice %273 {offsets = [0, 0], sizes = [8, 16], strides = [1, 1]} : vector<16x16xf32> to vector<8x16xf32>
    %c0_128 = arith.constant 0 : index
    %c0_129 = arith.constant 0 : index
    %276 = vector.load %arg10[%c0_128, %c0_129] : memref<16x32xf32, #tpu.memory_space<vmem>>, vector<8x16xf32>
    tpu.vector_store %arg10[%c0_128, %c0_129], %275 {strides = array<i32>} : memref<16x32xf32, #tpu.memory_space<vmem>>, vector<8x16xf32>,
    %277 = vector.extract_strided_slice %273 {offsets = [8, 0], sizes = [8, 16], strides = [1, 1]} : vector<16x16xf32> to vector<8x16xf32>
    %c8_130 = arith.constant 8 : index
    %c16_131 = arith.constant 16 : index
    %278 = vector.load %arg10[%c8_130, %c16_131] : memref<16x32xf32, #tpu.memory_space<vmem>>, vector<8x16xf32>
    tpu.vector_store %arg10[%c8_130, %c16_131], %277 {strides = array<i32>} : memref<16x32xf32, #tpu.memory_space<vmem>>, vector<8x16xf32>,
    %279 = vector.extract_strided_slice %273 {offsets = [0, 0], sizes = [8, 16], strides = [1, 1]} : vector<16x16xf32> to vector<8x16xf32>
    %280 = arith.index_cast %c4_i32 : i32 to index
    %c0_132 = arith.constant 0 : index
    %c0_133 = arith.constant 0 : index
    %281 = vector.load %arg8[%280, %c0_132, %c0_133] : memref<6x8x16xf32, #tpu.memory_space<vmem>>, vector<1x8x16xf32>
    %282 = vector.shape_cast %281 : vector<1x8x16xf32> to vector<8x16xf32>
    %283 = vector.shape_cast %279 : vector<8x16xf32> to vector<1x8x16xf32>
    tpu.vector_store %arg8[%280, %c0_132, %c0_133], %283 {strides = array<i32>} : memref<6x8x16xf32, #tpu.memory_space<vmem>>, vector<1x8x16xf32>,
    %284 = vector.extract_strided_slice %273 {offsets = [8, 0], sizes = [8, 16], strides = [1, 1]} : vector<16x16xf32> to vector<8x16xf32>
    %285 = arith.index_cast %236 : i32 to index
    %c0_134 = arith.constant 0 : index
    %c0_135 = arith.constant 0 : index
    %286 = vector.load %arg9[%285, %c0_134, %c0_135] : memref<6x8x16xf32, #tpu.memory_space<vmem>>, vector<1x8x16xf32>
    %287 = vector.shape_cast %286 : vector<1x8x16xf32> to vector<8x16xf32>
    %288 = vector.shape_cast %284 : vector<8x16xf32> to vector<1x8x16xf32>
    tpu.vector_store %arg9[%285, %c0_134, %c0_135], %288 {strides = array<i32>} : memref<6x8x16xf32, #tpu.memory_space<vmem>>, vector<1x8x16xf32>,
    %c5_i32_136 = arith.constant 5 : i32
    %c5_i32_137 = arith.constant 5 : i32
    %289 = arith.subi %c5_i32_137, %c5_i32_136 : i32
    %c0_138 = arith.constant 0 : index
    %c0_139 = arith.constant 0 : index
    %290 = vector.load %arg10[%c0_138, %c0_139] : memref<16x32xf32, #tpu.memory_space<vmem>>, vector<16x32xf32>
    %291 = arith.truncf %290 : vector<16x32xf32> to vector<16x32xbf16>
    %cst_140 = arith.constant dense<0.000000e+00> : vector<16x64xf32>
    %292 = tpu.matmul %291, %23, %cst_140 {dimension_numbers = #tpu.dot_dimension_numbers<[1], [0], [0], [1], [0, 0, 1, 1], [], []>} : vector<16x32xbf16>, vector<32x64xbf16>, vector<16x64xf32> -> vector<16x64xf32>
    %293 = arith.index_cast %c5_i32_136 : i32 to index
    %c0_141 = arith.constant 0 : index
    %c0_142 = arith.constant 0 : index
    %294 = vector.load %arg12[%293, %c0_141, %c0_142] : memref<6x8x64xf32, #tpu.memory_space<vmem>>, vector<1x8x64xf32>
    %295 = vector.shape_cast %294 : vector<1x8x64xf32> to vector<8x64xf32>
    %296 = arith.index_cast %289 : i32 to index
    %c0_143 = arith.constant 0 : index
    %c0_144 = arith.constant 0 : index
    %297 = vector.load %arg13[%296, %c0_143, %c0_144] : memref<6x8x64xf32, #tpu.memory_space<vmem>>, vector<1x8x64xf32>
    %298 = vector.shape_cast %297 : vector<1x8x64xf32> to vector<8x64xf32>
    %299 = tpu.concatenate %295, %298 in 0 : vector<8x64xf32>, vector<8x64xf32> -> vector<16x64xf32>
    %300 = arith.addf %299, %292 : vector<16x64xf32>
    %301 = vector.extract_strided_slice %300 {offsets = [0, 0], sizes = [16, 16], strides = [1, 1]} : vector<16x64xf32> to vector<16x16xf32>
    %302 = arith.negf %301 : vector<16x16xf32>
    %303 = math.exp %302 : vector<16x16xf32>
    %cst_145 = arith.constant 1.000000e+00 : f32
    %304 = vector.broadcast %cst_145 : f32 to vector<16x16xf32>
    %305 = arith.addf %304, %303 : vector<16x16xf32>
    %306 = arith.divf %304, %305 : vector<16x16xf32>
    %307 = vector.extract_strided_slice %300 {offsets = [0, 16], sizes = [16, 16], strides = [1, 1]} : vector<16x64xf32> to vector<16x16xf32>
    %308 = arith.negf %307 : vector<16x16xf32>
    %309 = math.exp %308 : vector<16x16xf32>
    %cst_146 = arith.constant 1.000000e+00 : f32
    %310 = vector.broadcast %cst_146 : f32 to vector<16x16xf32>
    %311 = arith.addf %310, %309 : vector<16x16xf32>
    %312 = arith.divf %310, %311 : vector<16x16xf32>
    %313 = vector.extract_strided_slice %300 {offsets = [0, 32], sizes = [16, 16], strides = [1, 1]} : vector<16x64xf32> to vector<16x16xf32>
    %314 = math.tanh %313 : vector<16x16xf32>
    %315 = vector.extract_strided_slice %300 {offsets = [0, 48], sizes = [16, 16], strides = [1, 1]} : vector<16x64xf32> to vector<16x16xf32>
    %316 = arith.negf %315 : vector<16x16xf32>
    %317 = math.exp %316 : vector<16x16xf32>
    %cst_147 = arith.constant 1.000000e+00 : f32
    %318 = vector.broadcast %cst_147 : f32 to vector<16x16xf32>
    %319 = arith.addf %318, %317 : vector<16x16xf32>
    %320 = arith.divf %318, %319 : vector<16x16xf32>
    %c0_148 = arith.constant 0 : index
    %c0_149 = arith.constant 0 : index
    %321 = vector.load %arg11[%c0_148, %c0_149] : memref<16x16xf32, #tpu.memory_space<vmem>>, vector<16x16xf32>
    %322 = arith.mulf %312, %321 : vector<16x16xf32>
    %323 = arith.mulf %306, %314 : vector<16x16xf32>
    %324 = arith.addf %322, %323 : vector<16x16xf32>
    %325 = math.tanh %324 : vector<16x16xf32>
    %326 = arith.mulf %320, %325 : vector<16x16xf32>
    %c0_150 = arith.constant 0 : index
    %c0_151 = arith.constant 0 : index
    %327 = vector.load %arg11[%c0_150, %c0_151] : memref<16x16xf32, #tpu.memory_space<vmem>>, vector<16x16xf32>
    tpu.vector_store %arg11[%c0_150, %c0_151], %324 {strides = array<i32>} : memref<16x16xf32, #tpu.memory_space<vmem>>, vector<16x16xf32>,
    %328 = vector.extract_strided_slice %326 {offsets = [0, 0], sizes = [8, 16], strides = [1, 1]} : vector<16x16xf32> to vector<8x16xf32>
    %c0_152 = arith.constant 0 : index
    %c0_153 = arith.constant 0 : index
    %329 = vector.load %arg10[%c0_152, %c0_153] : memref<16x32xf32, #tpu.memory_space<vmem>>, vector<8x16xf32>
    tpu.vector_store %arg10[%c0_152, %c0_153], %328 {strides = array<i32>} : memref<16x32xf32, #tpu.memory_space<vmem>>, vector<8x16xf32>,
    %330 = vector.extract_strided_slice %326 {offsets = [8, 0], sizes = [8, 16], strides = [1, 1]} : vector<16x16xf32> to vector<8x16xf32>
    %c8_154 = arith.constant 8 : index
    %c16_155 = arith.constant 16 : index
    %331 = vector.load %arg10[%c8_154, %c16_155] : memref<16x32xf32, #tpu.memory_space<vmem>>, vector<8x16xf32>
    tpu.vector_store %arg10[%c8_154, %c16_155], %330 {strides = array<i32>} : memref<16x32xf32, #tpu.memory_space<vmem>>, vector<8x16xf32>,
    %332 = vector.extract_strided_slice %326 {offsets = [0, 0], sizes = [8, 16], strides = [1, 1]} : vector<16x16xf32> to vector<8x16xf32>
    %333 = arith.index_cast %c5_i32_136 : i32 to index
    %c0_156 = arith.constant 0 : index
    %c0_157 = arith.constant 0 : index
    %334 = vector.load %arg8[%333, %c0_156, %c0_157] : memref<6x8x16xf32, #tpu.memory_space<vmem>>, vector<1x8x16xf32>
    %335 = vector.shape_cast %334 : vector<1x8x16xf32> to vector<8x16xf32>
    %336 = vector.shape_cast %332 : vector<8x16xf32> to vector<1x8x16xf32>
    tpu.vector_store %arg8[%333, %c0_156, %c0_157], %336 {strides = array<i32>} : memref<6x8x16xf32, #tpu.memory_space<vmem>>, vector<1x8x16xf32>,
    %337 = vector.extract_strided_slice %326 {offsets = [8, 0], sizes = [8, 16], strides = [1, 1]} : vector<16x16xf32> to vector<8x16xf32>
    %338 = arith.index_cast %289 : i32 to index
    %c0_158 = arith.constant 0 : index
    %c0_159 = arith.constant 0 : index
    %339 = vector.load %arg9[%338, %c0_158, %c0_159] : memref<6x8x16xf32, #tpu.memory_space<vmem>>, vector<1x8x16xf32>
    %340 = vector.shape_cast %339 : vector<1x8x16xf32> to vector<8x16xf32>
    %341 = vector.shape_cast %337 : vector<8x16xf32> to vector<1x8x16xf32>
    tpu.vector_store %arg9[%338, %c0_158, %c0_159], %341 {strides = array<i32>} : memref<6x8x16xf32, #tpu.memory_space<vmem>>, vector<1x8x16xf32>,
    %c6_i32 = arith.constant 6 : i32
    return
  }
  func.func @transform_0(%arg0: i32) -> (i32, i32, i32) {
    %c0_i32 = arith.constant 0 : i32
    %c0_i32_0 = arith.constant 0 : i32
    %c0_i32_1 = arith.constant 0 : i32
    return %arg0, %c0_i32, %c0_i32_0 : i32, i32, i32
  }
  func.func @transform_1(%arg0: i32) -> (i32, i32, i32) {
    %c0_i32 = arith.constant 0 : i32
    %0 = arith.subi %c0_i32, %arg0 : i32
    %c0_i32_0 = arith.constant 0 : i32
    %c0_i32_1 = arith.constant 0 : i32
    %c0_i32_2 = arith.constant 0 : i32
    return %0, %c0_i32_0, %c0_i32_1 : i32, i32, i32
  }
  func.func @transform_2(%arg0: i32) -> (i32, i32) {
    %c0_i32 = arith.constant 0 : i32
    %c0_i32_0 = arith.constant 0 : i32
    %c0_i32_1 = arith.constant 0 : i32
    return %c0_i32, %c0_i32_0 : i32, i32
  }
  func.func @transform_3(%arg0: i32) -> (i32, i32) {
    %c0_i32 = arith.constant 0 : i32
    %c0_i32_0 = arith.constant 0 : i32
    %c0_i32_1 = arith.constant 0 : i32
    return %c0_i32, %c0_i32_0 : i32, i32
  }
  func.func @transform_4(%arg0: i32) -> (i32, i32) {
    %c0_i32 = arith.constant 0 : i32
    %c0_i32_0 = arith.constant 0 : i32
    %c0_i32_1 = arith.constant 0 : i32
    return %c0_i32, %c0_i32_0 : i32, i32
  }
  func.func @transform_5(%arg0: i32) -> (i32, i32) {
    %c0_i32 = arith.constant 0 : i32
    %c0_i32_0 = arith.constant 0 : i32
    %c0_i32_1 = arith.constant 0 : i32
    return %c0_i32, %c0_i32_0 : i32, i32
  }
  func.func @transform_6(%arg0: i32) -> (i32, i32) {
    %c0_i32 = arith.constant 0 : i32
    %c0_i32_0 = arith.constant 0 : i32
    %c0_i32_1 = arith.constant 0 : i32
    return %c0_i32, %c0_i32_0 : i32, i32
  }
  func.func @transform_7(%arg0: i32) -> (i32, i32, i32) {
    %c0_i32 = arith.constant 0 : i32
    %c0_i32_0 = arith.constant 0 : i32
    %c0_i32_1 = arith.constant 0 : i32
    return %arg0, %c0_i32, %c0_i32_0 : i32, i32, i32
  }
  func.func @transform_8(%arg0: i32) -> (i32, i32, i32) {
    %c0_i32 = arith.constant 0 : i32
    %0 = arith.subi %c0_i32, %arg0 : i32
    %c0_i32_0 = arith.constant 0 : i32
    %c0_i32_1 = arith.constant 0 : i32
    %c0_i32_2 = arith.constant 0 : i32
    return %0, %c0_i32_0, %c0_i32_1 : i32, i32, i32
  }
}

module attributes {stable_mosaic.version = 11 : i64} {
  func.func @_bilstm_kernel(%arg0: i32, %arg1: memref<2x3x32xf32, #tpu.memory_space<vmem>>, %arg2: memref<2x3x32xf32, #tpu.memory_space<vmem>>, %arg3: memref<32x64xbf16, #tpu.memory_space<vmem>>, %arg4: memref<32x64xbf16, #tpu.memory_space<vmem>>, %arg5: memref<1x64xf32, #tpu.memory_space<vmem>>, %arg6: memref<1x64xf32, #tpu.memory_space<vmem>>, %arg7: memref<32x64xbf16, #tpu.memory_space<vmem>>, %arg8: memref<2x3x16xf32, #tpu.memory_space<vmem>>, %arg9: memref<2x3x16xf32, #tpu.memory_space<vmem>>, %arg10: memref<6x32xf32, #tpu.memory_space<vmem>>, %arg11: memref<6x16xf32, #tpu.memory_space<vmem>>, %arg12: memref<2x3x64xf32, #tpu.memory_space<vmem>>, %arg13: memref<2x3x64xf32, #tpu.memory_space<vmem>>) attributes {dimension_semantics = [#tpu.dimension_semantics<arbitrary>], iteration_bounds = array<i64: 1>, scalar_prefetch = 0 : i64, scratch_operands = 4 : i64, tpu.core_type = #tpu.core_type<tc>, window_params = [{transform_indices = @transform_0, window_bounds = array<i64: 2, 3, 32>}, {transform_indices = @transform_1, window_bounds = array<i64: 2, 3, 32>}, {pipeline_mode = #tpu.pipeline_mode<synchronous>, transform_indices = @transform_2, window_bounds = array<i64: 32, 64>}, {pipeline_mode = #tpu.pipeline_mode<synchronous>, transform_indices = @transform_3, window_bounds = array<i64: 32, 64>}, {pipeline_mode = #tpu.pipeline_mode<synchronous>, transform_indices = @transform_4, window_bounds = array<i64: 1, 64>}, {pipeline_mode = #tpu.pipeline_mode<synchronous>, transform_indices = @transform_5, window_bounds = array<i64: 1, 64>}, {pipeline_mode = #tpu.pipeline_mode<synchronous>, transform_indices = @transform_6, window_bounds = array<i64: 32, 64>}, {transform_indices = @transform_7, window_bounds = array<i64: 2, 3, 16>}, {transform_indices = @transform_8, window_bounds = array<i64: 2, 3, 16>}]} {
    %c0_i32 = arith.constant 0 : i32
    %0 = arith.cmpi eq, %arg0, %c0_i32 : i32
    %1 = arith.extui %0 : i1 to i32
    %c0_i32_0 = arith.constant 0 : i32
    %2 = arith.cmpi ne, %1, %c0_i32_0 : i32
    scf.if %2 {
      %cst_68 = arith.constant 0.000000e+00 : f32
      %130 = vector.broadcast %cst_68 : f32 to vector<6x32xf32>
      %c0_69 = arith.constant 0 : index
      %c0_70 = arith.constant 0 : index
      %131 = vector.load %arg10[%c0_69, %c0_70] : memref<6x32xf32, #tpu.memory_space<vmem>>, vector<6x32xf32>
      tpu.vector_store %arg10[%c0_69, %c0_70], %130 {strides = array<i32>} : memref<6x32xf32, #tpu.memory_space<vmem>>, vector<6x32xf32>,
      %cst_71 = arith.constant 0.000000e+00 : f32
      %132 = vector.broadcast %cst_71 : f32 to vector<6x16xf32>
      %c0_72 = arith.constant 0 : index
      %c0_73 = arith.constant 0 : index
      %133 = vector.load %arg11[%c0_72, %c0_73] : memref<6x16xf32, #tpu.memory_space<vmem>>, vector<6x16xf32>
      tpu.vector_store %arg11[%c0_72, %c0_73], %132 {strides = array<i32>} : memref<6x16xf32, #tpu.memory_space<vmem>>, vector<6x16xf32>,
    } else {
    }
    %c0 = arith.constant 0 : index
    %c0_1 = arith.constant 0 : index
    %c0_2 = arith.constant 0 : index
    %3 = vector.load %arg1[%c0, %c0_1, %c0_2] : memref<2x3x32xf32, #tpu.memory_space<vmem>>, vector<2x3x32xf32>
    %4 = vector.shape_cast %3 : vector<2x3x32xf32> to vector<6x32xf32>
    %5 = arith.truncf %4 : vector<6x32xf32> to vector<6x32xbf16>
    %c0_3 = arith.constant 0 : index
    %c0_4 = arith.constant 0 : index
    %c0_5 = arith.constant 0 : index
    %6 = vector.load %arg2[%c0_3, %c0_4, %c0_5] : memref<2x3x32xf32, #tpu.memory_space<vmem>>, vector<2x3x32xf32>
    %7 = vector.shape_cast %6 : vector<2x3x32xf32> to vector<6x32xf32>
    %8 = arith.truncf %7 : vector<6x32xf32> to vector<6x32xbf16>
    %c0_6 = arith.constant 0 : index
    %c0_7 = arith.constant 0 : index
    %9 = vector.load %arg3[%c0_6, %c0_7] : memref<32x64xbf16, #tpu.memory_space<vmem>>, vector<32x64xbf16>
    %cst = arith.constant dense<0.000000e+00> : vector<6x64xf32>
    %10 = tpu.matmul %5, %9, %cst {dimension_numbers = #tpu.dot_dimension_numbers<[1], [0], [0], [1], [0, 0, 1, 1], [], []>} : vector<6x32xbf16>, vector<32x64xbf16>, vector<6x64xf32> -> vector<6x64xf32>
    %c0_8 = arith.constant 0 : index
    %c0_9 = arith.constant 0 : index
    %11 = vector.load %arg5[%c0_8, %c0_9] : memref<1x64xf32, #tpu.memory_space<vmem>>, vector<1x64xf32>
    %12 = vector.broadcast %11 : vector<1x64xf32> to vector<6x64xf32>
    %13 = arith.addf %10, %12 : vector<6x64xf32>
    %14 = vector.shape_cast %13 : vector<6x64xf32> to vector<2x3x64xf32>
    %c0_10 = arith.constant 0 : index
    %c0_11 = arith.constant 0 : index
    %c0_12 = arith.constant 0 : index
    %15 = vector.load %arg12[%c0_10, %c0_11, %c0_12] : memref<2x3x64xf32, #tpu.memory_space<vmem>>, vector<2x3x64xf32>
    tpu.vector_store %arg12[%c0_10, %c0_11, %c0_12], %14 {strides = array<i32>} : memref<2x3x64xf32, #tpu.memory_space<vmem>>, vector<2x3x64xf32>,
    %c0_13 = arith.constant 0 : index
    %c0_14 = arith.constant 0 : index
    %16 = vector.load %arg4[%c0_13, %c0_14] : memref<32x64xbf16, #tpu.memory_space<vmem>>, vector<32x64xbf16>
    %cst_15 = arith.constant dense<0.000000e+00> : vector<6x64xf32>
    %17 = tpu.matmul %8, %16, %cst_15 {dimension_numbers = #tpu.dot_dimension_numbers<[1], [0], [0], [1], [0, 0, 1, 1], [], []>} : vector<6x32xbf16>, vector<32x64xbf16>, vector<6x64xf32> -> vector<6x64xf32>
    %c0_16 = arith.constant 0 : index
    %c0_17 = arith.constant 0 : index
    %18 = vector.load %arg6[%c0_16, %c0_17] : memref<1x64xf32, #tpu.memory_space<vmem>>, vector<1x64xf32>
    %19 = vector.broadcast %18 : vector<1x64xf32> to vector<6x64xf32>
    %20 = arith.addf %17, %19 : vector<6x64xf32>
    %21 = vector.shape_cast %20 : vector<6x64xf32> to vector<2x3x64xf32>
    %c0_18 = arith.constant 0 : index
    %c0_19 = arith.constant 0 : index
    %c0_20 = arith.constant 0 : index
    %22 = vector.load %arg13[%c0_18, %c0_19, %c0_20] : memref<2x3x64xf32, #tpu.memory_space<vmem>>, vector<2x3x64xf32>
    tpu.vector_store %arg13[%c0_18, %c0_19, %c0_20], %21 {strides = array<i32>} : memref<2x3x64xf32, #tpu.memory_space<vmem>>, vector<2x3x64xf32>,
    %c0_21 = arith.constant 0 : index
    %c0_22 = arith.constant 0 : index
    %23 = vector.load %arg7[%c0_21, %c0_22] : memref<32x64xbf16, #tpu.memory_space<vmem>>, vector<32x64xbf16>
    %c0_i32_23 = arith.constant 0 : i32
    %c1_i32 = arith.constant 1 : i32
    %24 = arith.subi %c1_i32, %c0_i32_23 : i32
    %c0_24 = arith.constant 0 : index
    %c0_25 = arith.constant 0 : index
    %25 = vector.load %arg10[%c0_24, %c0_25] : memref<6x32xf32, #tpu.memory_space<vmem>>, vector<6x32xf32>
    %26 = arith.truncf %25 : vector<6x32xf32> to vector<6x32xbf16>
    %cst_26 = arith.constant dense<0.000000e+00> : vector<6x64xf32>
    %27 = tpu.matmul %26, %23, %cst_26 {dimension_numbers = #tpu.dot_dimension_numbers<[1], [0], [0], [1], [0, 0, 1, 1], [], []>} : vector<6x32xbf16>, vector<32x64xbf16>, vector<6x64xf32> -> vector<6x64xf32>
    %28 = arith.index_cast %c0_i32_23 : i32 to index
    %c0_27 = arith.constant 0 : index
    %c0_28 = arith.constant 0 : index
    %29 = vector.load %arg12[%28, %c0_27, %c0_28] : memref<2x3x64xf32, #tpu.memory_space<vmem>>, vector<1x3x64xf32>
    %30 = vector.shape_cast %29 : vector<1x3x64xf32> to vector<3x64xf32>
    %31 = arith.index_cast %24 : i32 to index
    %c0_29 = arith.constant 0 : index
    %c0_30 = arith.constant 0 : index
    %32 = vector.load %arg13[%31, %c0_29, %c0_30] : memref<2x3x64xf32, #tpu.memory_space<vmem>>, vector<1x3x64xf32>
    %33 = vector.shape_cast %32 : vector<1x3x64xf32> to vector<3x64xf32>
    %34 = tpu.concatenate %30, %33 in 0 : vector<3x64xf32>, vector<3x64xf32> -> vector<6x64xf32>
    %35 = arith.addf %34, %27 : vector<6x64xf32>
    %36 = vector.extract_strided_slice %35 {offsets = [0, 0], sizes = [6, 16], strides = [1, 1]} : vector<6x64xf32> to vector<6x16xf32>
    %37 = arith.negf %36 : vector<6x16xf32>
    %38 = math.exp %37 : vector<6x16xf32>
    %cst_31 = arith.constant 1.000000e+00 : f32
    %39 = vector.broadcast %cst_31 : f32 to vector<6x16xf32>
    %40 = arith.addf %39, %38 : vector<6x16xf32>
    %41 = arith.divf %39, %40 : vector<6x16xf32>
    %42 = vector.extract_strided_slice %35 {offsets = [0, 16], sizes = [6, 16], strides = [1, 1]} : vector<6x64xf32> to vector<6x16xf32>
    %43 = arith.negf %42 : vector<6x16xf32>
    %44 = math.exp %43 : vector<6x16xf32>
    %cst_32 = arith.constant 1.000000e+00 : f32
    %45 = vector.broadcast %cst_32 : f32 to vector<6x16xf32>
    %46 = arith.addf %45, %44 : vector<6x16xf32>
    %47 = arith.divf %45, %46 : vector<6x16xf32>
    %48 = vector.extract_strided_slice %35 {offsets = [0, 32], sizes = [6, 16], strides = [1, 1]} : vector<6x64xf32> to vector<6x16xf32>
    %49 = math.tanh %48 : vector<6x16xf32>
    %50 = vector.extract_strided_slice %35 {offsets = [0, 48], sizes = [6, 16], strides = [1, 1]} : vector<6x64xf32> to vector<6x16xf32>
    %51 = arith.negf %50 : vector<6x16xf32>
    %52 = math.exp %51 : vector<6x16xf32>
    %cst_33 = arith.constant 1.000000e+00 : f32
    %53 = vector.broadcast %cst_33 : f32 to vector<6x16xf32>
    %54 = arith.addf %53, %52 : vector<6x16xf32>
    %55 = arith.divf %53, %54 : vector<6x16xf32>
    %c0_34 = arith.constant 0 : index
    %c0_35 = arith.constant 0 : index
    %56 = vector.load %arg11[%c0_34, %c0_35] : memref<6x16xf32, #tpu.memory_space<vmem>>, vector<6x16xf32>
    %57 = arith.mulf %47, %56 : vector<6x16xf32>
    %58 = arith.mulf %41, %49 : vector<6x16xf32>
    %59 = arith.addf %57, %58 : vector<6x16xf32>
    %60 = math.tanh %59 : vector<6x16xf32>
    %61 = arith.mulf %55, %60 : vector<6x16xf32>
    %c0_36 = arith.constant 0 : index
    %c0_37 = arith.constant 0 : index
    %62 = vector.load %arg11[%c0_36, %c0_37] : memref<6x16xf32, #tpu.memory_space<vmem>>, vector<6x16xf32>
    tpu.vector_store %arg11[%c0_36, %c0_37], %59 {strides = array<i32>} : memref<6x16xf32, #tpu.memory_space<vmem>>, vector<6x16xf32>,
    %63 = vector.extract_strided_slice %61 {offsets = [0, 0], sizes = [3, 16], strides = [1, 1]} : vector<6x16xf32> to vector<3x16xf32>
    %c0_38 = arith.constant 0 : index
    %c0_39 = arith.constant 0 : index
    %64 = vector.load %arg10[%c0_38, %c0_39] : memref<6x32xf32, #tpu.memory_space<vmem>>, vector<3x16xf32>
    tpu.vector_store %arg10[%c0_38, %c0_39], %63 {strides = array<i32>} : memref<6x32xf32, #tpu.memory_space<vmem>>, vector<3x16xf32>,
    %65 = vector.extract_strided_slice %61 {offsets = [3, 0], sizes = [3, 16], strides = [1, 1]} : vector<6x16xf32> to vector<3x16xf32>
    %c3 = arith.constant 3 : index
    %c16 = arith.constant 16 : index
    %66 = vector.load %arg10[%c3, %c16] : memref<6x32xf32, #tpu.memory_space<vmem>>, vector<3x16xf32>
    tpu.vector_store %arg10[%c3, %c16], %65 {strides = array<i32>} : memref<6x32xf32, #tpu.memory_space<vmem>>, vector<3x16xf32>,
    %67 = vector.extract_strided_slice %61 {offsets = [0, 0], sizes = [3, 16], strides = [1, 1]} : vector<6x16xf32> to vector<3x16xf32>
    %68 = arith.index_cast %c0_i32_23 : i32 to index
    %c0_40 = arith.constant 0 : index
    %c0_41 = arith.constant 0 : index
    %69 = vector.load %arg8[%68, %c0_40, %c0_41] : memref<2x3x16xf32, #tpu.memory_space<vmem>>, vector<1x3x16xf32>
    %70 = vector.shape_cast %69 : vector<1x3x16xf32> to vector<3x16xf32>
    %71 = vector.shape_cast %67 : vector<3x16xf32> to vector<1x3x16xf32>
    tpu.vector_store %arg8[%68, %c0_40, %c0_41], %71 {strides = array<i32>} : memref<2x3x16xf32, #tpu.memory_space<vmem>>, vector<1x3x16xf32>,
    %72 = vector.extract_strided_slice %61 {offsets = [3, 0], sizes = [3, 16], strides = [1, 1]} : vector<6x16xf32> to vector<3x16xf32>
    %73 = arith.index_cast %24 : i32 to index
    %c0_42 = arith.constant 0 : index
    %c0_43 = arith.constant 0 : index
    %74 = vector.load %arg9[%73, %c0_42, %c0_43] : memref<2x3x16xf32, #tpu.memory_space<vmem>>, vector<1x3x16xf32>
    %75 = vector.shape_cast %74 : vector<1x3x16xf32> to vector<3x16xf32>
    %76 = vector.shape_cast %72 : vector<3x16xf32> to vector<1x3x16xf32>
    tpu.vector_store %arg9[%73, %c0_42, %c0_43], %76 {strides = array<i32>} : memref<2x3x16xf32, #tpu.memory_space<vmem>>, vector<1x3x16xf32>,
    %c1_i32_44 = arith.constant 1 : i32
    %c1_i32_45 = arith.constant 1 : i32
    %77 = arith.subi %c1_i32_45, %c1_i32_44 : i32
    %c0_46 = arith.constant 0 : index
    %c0_47 = arith.constant 0 : index
    %78 = vector.load %arg10[%c0_46, %c0_47] : memref<6x32xf32, #tpu.memory_space<vmem>>, vector<6x32xf32>
    %79 = arith.truncf %78 : vector<6x32xf32> to vector<6x32xbf16>
    %cst_48 = arith.constant dense<0.000000e+00> : vector<6x64xf32>
    %80 = tpu.matmul %79, %23, %cst_48 {dimension_numbers = #tpu.dot_dimension_numbers<[1], [0], [0], [1], [0, 0, 1, 1], [], []>} : vector<6x32xbf16>, vector<32x64xbf16>, vector<6x64xf32> -> vector<6x64xf32>
    %81 = arith.index_cast %c1_i32_44 : i32 to index
    %c0_49 = arith.constant 0 : index
    %c0_50 = arith.constant 0 : index
    %82 = vector.load %arg12[%81, %c0_49, %c0_50] : memref<2x3x64xf32, #tpu.memory_space<vmem>>, vector<1x3x64xf32>
    %83 = vector.shape_cast %82 : vector<1x3x64xf32> to vector<3x64xf32>
    %84 = arith.index_cast %77 : i32 to index
    %c0_51 = arith.constant 0 : index
    %c0_52 = arith.constant 0 : index
    %85 = vector.load %arg13[%84, %c0_51, %c0_52] : memref<2x3x64xf32, #tpu.memory_space<vmem>>, vector<1x3x64xf32>
    %86 = vector.shape_cast %85 : vector<1x3x64xf32> to vector<3x64xf32>
    %87 = tpu.concatenate %83, %86 in 0 : vector<3x64xf32>, vector<3x64xf32> -> vector<6x64xf32>
    %88 = arith.addf %87, %80 : vector<6x64xf32>
    %89 = vector.extract_strided_slice %88 {offsets = [0, 0], sizes = [6, 16], strides = [1, 1]} : vector<6x64xf32> to vector<6x16xf32>
    %90 = arith.negf %89 : vector<6x16xf32>
    %91 = math.exp %90 : vector<6x16xf32>
    %cst_53 = arith.constant 1.000000e+00 : f32
    %92 = vector.broadcast %cst_53 : f32 to vector<6x16xf32>
    %93 = arith.addf %92, %91 : vector<6x16xf32>
    %94 = arith.divf %92, %93 : vector<6x16xf32>
    %95 = vector.extract_strided_slice %88 {offsets = [0, 16], sizes = [6, 16], strides = [1, 1]} : vector<6x64xf32> to vector<6x16xf32>
    %96 = arith.negf %95 : vector<6x16xf32>
    %97 = math.exp %96 : vector<6x16xf32>
    %cst_54 = arith.constant 1.000000e+00 : f32
    %98 = vector.broadcast %cst_54 : f32 to vector<6x16xf32>
    %99 = arith.addf %98, %97 : vector<6x16xf32>
    %100 = arith.divf %98, %99 : vector<6x16xf32>
    %101 = vector.extract_strided_slice %88 {offsets = [0, 32], sizes = [6, 16], strides = [1, 1]} : vector<6x64xf32> to vector<6x16xf32>
    %102 = math.tanh %101 : vector<6x16xf32>
    %103 = vector.extract_strided_slice %88 {offsets = [0, 48], sizes = [6, 16], strides = [1, 1]} : vector<6x64xf32> to vector<6x16xf32>
    %104 = arith.negf %103 : vector<6x16xf32>
    %105 = math.exp %104 : vector<6x16xf32>
    %cst_55 = arith.constant 1.000000e+00 : f32
    %106 = vector.broadcast %cst_55 : f32 to vector<6x16xf32>
    %107 = arith.addf %106, %105 : vector<6x16xf32>
    %108 = arith.divf %106, %107 : vector<6x16xf32>
    %c0_56 = arith.constant 0 : index
    %c0_57 = arith.constant 0 : index
    %109 = vector.load %arg11[%c0_56, %c0_57] : memref<6x16xf32, #tpu.memory_space<vmem>>, vector<6x16xf32>
    %110 = arith.mulf %100, %109 : vector<6x16xf32>
    %111 = arith.mulf %94, %102 : vector<6x16xf32>
    %112 = arith.addf %110, %111 : vector<6x16xf32>
    %113 = math.tanh %112 : vector<6x16xf32>
    %114 = arith.mulf %108, %113 : vector<6x16xf32>
    %c0_58 = arith.constant 0 : index
    %c0_59 = arith.constant 0 : index
    %115 = vector.load %arg11[%c0_58, %c0_59] : memref<6x16xf32, #tpu.memory_space<vmem>>, vector<6x16xf32>
    tpu.vector_store %arg11[%c0_58, %c0_59], %112 {strides = array<i32>} : memref<6x16xf32, #tpu.memory_space<vmem>>, vector<6x16xf32>,
    %116 = vector.extract_strided_slice %114 {offsets = [0, 0], sizes = [3, 16], strides = [1, 1]} : vector<6x16xf32> to vector<3x16xf32>
    %c0_60 = arith.constant 0 : index
    %c0_61 = arith.constant 0 : index
    %117 = vector.load %arg10[%c0_60, %c0_61] : memref<6x32xf32, #tpu.memory_space<vmem>>, vector<3x16xf32>
    tpu.vector_store %arg10[%c0_60, %c0_61], %116 {strides = array<i32>} : memref<6x32xf32, #tpu.memory_space<vmem>>, vector<3x16xf32>,
    %118 = vector.extract_strided_slice %114 {offsets = [3, 0], sizes = [3, 16], strides = [1, 1]} : vector<6x16xf32> to vector<3x16xf32>
    %c3_62 = arith.constant 3 : index
    %c16_63 = arith.constant 16 : index
    %119 = vector.load %arg10[%c3_62, %c16_63] : memref<6x32xf32, #tpu.memory_space<vmem>>, vector<3x16xf32>
    tpu.vector_store %arg10[%c3_62, %c16_63], %118 {strides = array<i32>} : memref<6x32xf32, #tpu.memory_space<vmem>>, vector<3x16xf32>,
    %120 = vector.extract_strided_slice %114 {offsets = [0, 0], sizes = [3, 16], strides = [1, 1]} : vector<6x16xf32> to vector<3x16xf32>
    %121 = arith.index_cast %c1_i32_44 : i32 to index
    %c0_64 = arith.constant 0 : index
    %c0_65 = arith.constant 0 : index
    %122 = vector.load %arg8[%121, %c0_64, %c0_65] : memref<2x3x16xf32, #tpu.memory_space<vmem>>, vector<1x3x16xf32>
    %123 = vector.shape_cast %122 : vector<1x3x16xf32> to vector<3x16xf32>
    %124 = vector.shape_cast %120 : vector<3x16xf32> to vector<1x3x16xf32>
    tpu.vector_store %arg8[%121, %c0_64, %c0_65], %124 {strides = array<i32>} : memref<2x3x16xf32, #tpu.memory_space<vmem>>, vector<1x3x16xf32>,
    %125 = vector.extract_strided_slice %114 {offsets = [3, 0], sizes = [3, 16], strides = [1, 1]} : vector<6x16xf32> to vector<3x16xf32>
    %126 = arith.index_cast %77 : i32 to index
    %c0_66 = arith.constant 0 : index
    %c0_67 = arith.constant 0 : index
    %127 = vector.load %arg9[%126, %c0_66, %c0_67] : memref<2x3x16xf32, #tpu.memory_space<vmem>>, vector<1x3x16xf32>
    %128 = vector.shape_cast %127 : vector<1x3x16xf32> to vector<3x16xf32>
    %129 = vector.shape_cast %125 : vector<3x16xf32> to vector<1x3x16xf32>
    tpu.vector_store %arg9[%126, %c0_66, %c0_67], %129 {strides = array<i32>} : memref<2x3x16xf32, #tpu.memory_space<vmem>>, vector<1x3x16xf32>,
    %c2_i32 = arith.constant 2 : i32
    return
  }
  func.func @transform_0(%arg0: i32) -> (i32, i32, i32) {
    %c0_i32 = arith.constant 0 : i32
    %c0_i32_0 = arith.constant 0 : i32
    %c0_i32_1 = arith.constant 0 : i32
    return %arg0, %c0_i32, %c0_i32_0 : i32, i32, i32
  }
  func.func @transform_1(%arg0: i32) -> (i32, i32, i32) {
    %c0_i32 = arith.constant 0 : i32
    %0 = arith.subi %c0_i32, %arg0 : i32
    %c0_i32_0 = arith.constant 0 : i32
    %c0_i32_1 = arith.constant 0 : i32
    %c0_i32_2 = arith.constant 0 : i32
    return %0, %c0_i32_0, %c0_i32_1 : i32, i32, i32
  }
  func.func @transform_2(%arg0: i32) -> (i32, i32) {
    %c0_i32 = arith.constant 0 : i32
    %c0_i32_0 = arith.constant 0 : i32
    %c0_i32_1 = arith.constant 0 : i32
    return %c0_i32, %c0_i32_0 : i32, i32
  }
  func.func @transform_3(%arg0: i32) -> (i32, i32) {
    %c0_i32 = arith.constant 0 : i32
    %c0_i32_0 = arith.constant 0 : i32
    %c0_i32_1 = arith.constant 0 : i32
    return %c0_i32, %c0_i32_0 : i32, i32
  }
  func.func @transform_4(%arg0: i32) -> (i32, i32) {
    %c0_i32 = arith.constant 0 : i32
    %c0_i32_0 = arith.constant 0 : i32
    %c0_i32_1 = arith.constant 0 : i32
    return %c0_i32, %c0_i32_0 : i32, i32
  }
  func.func @transform_5(%arg0: i32) -> (i32, i32) {
    %c0_i32 = arith.constant 0 : i32
    %c0_i32_0 = arith.constant 0 : i32
    %c0_i32_1 = arith.constant 0 : i32
    return %c0_i32, %c0_i32_0 : i32, i32
  }
  func.func @transform_6(%arg0: i32) -> (i32, i32) {
    %c0_i32 = arith.constant 0 : i32
    %c0_i32_0 = arith.constant 0 : i32
    %c0_i32_1 = arith.constant 0 : i32
    return %c0_i32, %c0_i32_0 : i32, i32
  }
  func.func @transform_7(%arg0: i32) -> (i32, i32, i32) {
    %c0_i32 = arith.constant 0 : i32
    %c0_i32_0 = arith.constant 0 : i32
    %c0_i32_1 = arith.constant 0 : i32
    return %arg0, %c0_i32, %c0_i32_0 : i32, i32, i32
  }
  func.func @transform_8(%arg0: i32) -> (i32, i32, i32) {
    %c0_i32 = arith.constant 0 : i32
    %0 = arith.subi %c0_i32, %arg0 : i32
    %c0_i32_0 = arith.constant 0 : i32
    %c0_i32_1 = arith.constant 0 : i32
    %c0_i32_2 = arith.constant 0 : i32
    return %0, %c0_i32_0, %c0_i32_1 : i32, i32, i32
  }
}

module attributes {stable_mosaic.version = 11 : i64} {
  func.func @_attention_kernel(%arg0: i32, %arg1: memref<2x3x16xf32, #tpu.memory_space<vmem>>, %arg2: memref<2x3x16xf32, #tpu.memory_space<vmem>>, %arg3: memref<32x32xbf16, #tpu.memory_space<vmem>>, %arg4: memref<1x32xf32, #tpu.memory_space<vmem>>, %arg5: memref<1x32xf32, #tpu.memory_space<vmem>>, %arg6: memref<32x4xbf16, #tpu.memory_space<vmem>>, %arg7: memref<1x4xf32, #tpu.memory_space<vmem>>, %arg8: memref<2x4xf32, #tpu.memory_space<vmem>>) attributes {dimension_semantics = [#tpu.dimension_semantics<parallel>], iteration_bounds = array<i64: 1>, scalar_prefetch = 0 : i64, scratch_operands = 0 : i64, tpu.core_type = #tpu.core_type<tc>, window_params = [{transform_indices = @transform_0, window_bounds = array<i64: 2, 3, 16>}, {transform_indices = @transform_1, window_bounds = array<i64: 2, 3, 16>}, {pipeline_mode = #tpu.pipeline_mode<synchronous>, transform_indices = @transform_2, window_bounds = array<i64: 32, 32>}, {pipeline_mode = #tpu.pipeline_mode<synchronous>, transform_indices = @transform_3, window_bounds = array<i64: 1, 32>}, {pipeline_mode = #tpu.pipeline_mode<synchronous>, transform_indices = @transform_4, window_bounds = array<i64: 1, 32>}, {pipeline_mode = #tpu.pipeline_mode<synchronous>, transform_indices = @transform_5, window_bounds = array<i64: 32, 4>}, {pipeline_mode = #tpu.pipeline_mode<synchronous>, transform_indices = @transform_6, window_bounds = array<i64: 1, 4>}, {transform_indices = @transform_7, window_bounds = array<i64: 2, 4>}]} {
    %c0 = arith.constant 0 : index
    %c0_0 = arith.constant 0 : index
    %c0_1 = arith.constant 0 : index
    %0 = vector.load %arg1[%c0, %c0_0, %c0_1] : memref<2x3x16xf32, #tpu.memory_space<vmem>>, vector<2x3x16xf32>
    %c0_2 = arith.constant 0 : index
    %c0_3 = arith.constant 0 : index
    %c0_4 = arith.constant 0 : index
    %1 = vector.load %arg2[%c0_2, %c0_3, %c0_4] : memref<2x3x16xf32, #tpu.memory_space<vmem>>, vector<2x3x16xf32>
    %2 = tpu.concatenate %0, %1 in 2 : vector<2x3x16xf32>, vector<2x3x16xf32> -> vector<2x3x32xf32>
    %3 = vector.shape_cast %2 : vector<2x3x32xf32> to vector<6x32xf32>
    %4 = arith.truncf %3 : vector<6x32xf32> to vector<6x32xbf16>
    %c0_5 = arith.constant 0 : index
    %c0_6 = arith.constant 0 : index
    %5 = vector.load %arg3[%c0_5, %c0_6] : memref<32x32xbf16, #tpu.memory_space<vmem>>, vector<32x32xbf16>
    %cst = arith.constant dense<0.000000e+00> : vector<6x32xf32>
    %6 = tpu.matmul %4, %5, %cst {dimension_numbers = #tpu.dot_dimension_numbers<[1], [0], [0], [1], [0, 0, 1, 1], [], []>} : vector<6x32xbf16>, vector<32x32xbf16>, vector<6x32xf32> -> vector<6x32xf32>
    %c0_7 = arith.constant 0 : index
    %c0_8 = arith.constant 0 : index
    %7 = vector.load %arg4[%c0_7, %c0_8] : memref<1x32xf32, #tpu.memory_space<vmem>>, vector<1x32xf32>
    %8 = vector.broadcast %7 : vector<1x32xf32> to vector<6x32xf32>
    %9 = arith.addf %6, %8 : vector<6x32xf32>
    %10 = math.tanh %9 : vector<6x32xf32>
    %11 = vector.shape_cast %10 : vector<6x32xf32> to vector<2x3x32xf32>
    %c0_9 = arith.constant 0 : index
    %c0_10 = arith.constant 0 : index
    %12 = vector.load %arg5[%c0_9, %c0_10] : memref<1x32xf32, #tpu.memory_space<vmem>>, vector<1x32xf32>
    %13 = vector.shape_cast %12 : vector<1x32xf32> to vector<1x1x32xf32>
    %14 = vector.broadcast %13 : vector<1x1x32xf32> to vector<2x3x32xf32>
    %15 = arith.mulf %11, %14 : vector<2x3x32xf32>
    %cst_11 = arith.constant dense<0.000000e+00> : vector<2x3xf32>
    %16 = vector.multi_reduction <add>, %15, %cst_11 [2] : vector<2x3x32xf32> to vector<2x3xf32>
    %cst_12 = arith.constant dense<0xFF800000> : vector<2xf32>
    %17 = vector.multi_reduction <maximumf>, %16, %cst_12 [1] : vector<2x3xf32> to vector<2xf32>
    %18 = vector.shape_cast %17 : vector<2xf32> to vector<2x1xf32>
    %19 = vector.broadcast %18 : vector<2x1xf32> to vector<2x3xf32>
    %20 = arith.subf %16, %19 : vector<2x3xf32>
    %21 = math.exp %20 : vector<2x3xf32>
    %cst_13 = arith.constant dense<0.000000e+00> : vector<2xf32>
    %22 = vector.multi_reduction <add>, %21, %cst_13 [1] : vector<2x3xf32> to vector<2xf32>
    %23 = vector.shape_cast %22 : vector<2xf32> to vector<2x1xf32>
    %24 = vector.broadcast %23 : vector<2x1xf32> to vector<2x3xf32>
    %25 = arith.divf %21, %24 : vector<2x3xf32>
    %26 = vector.shape_cast %25 : vector<2x3xf32> to vector<2x3x1xf32>
    %27 = vector.broadcast %26 : vector<2x3x1xf32> to vector<2x3x32xf32>
    %28 = arith.mulf %2, %27 : vector<2x3x32xf32>
    %cst_14 = arith.constant dense<0.000000e+00> : vector<2x32xf32>
    %29 = vector.multi_reduction <add>, %28, %cst_14 [1] : vector<2x3x32xf32> to vector<2x32xf32>
    %30 = arith.truncf %29 : vector<2x32xf32> to vector<2x32xbf16>
    %c0_15 = arith.constant 0 : index
    %c0_16 = arith.constant 0 : index
    %31 = vector.load %arg6[%c0_15, %c0_16] : memref<32x4xbf16, #tpu.memory_space<vmem>>, vector<32x4xbf16>
    %cst_17 = arith.constant dense<0.000000e+00> : vector<2x4xf32>
    %32 = tpu.matmul %30, %31, %cst_17 {dimension_numbers = #tpu.dot_dimension_numbers<[1], [0], [0], [1], [0, 0, 1, 1], [], []>} : vector<2x32xbf16>, vector<32x4xbf16>, vector<2x4xf32> -> vector<2x4xf32>
    %c0_18 = arith.constant 0 : index
    %c0_19 = arith.constant 0 : index
    %33 = vector.load %arg7[%c0_18, %c0_19] : memref<1x4xf32, #tpu.memory_space<vmem>>, vector<1x4xf32>
    %34 = vector.broadcast %33 : vector<1x4xf32> to vector<2x4xf32>
    %35 = arith.addf %32, %34 : vector<2x4xf32>
    %c0_20 = arith.constant 0 : index
    %c0_21 = arith.constant 0 : index
    %36 = vector.load %arg8[%c0_20, %c0_21] : memref<2x4xf32, #tpu.memory_space<vmem>>, vector<2x4xf32>
    tpu.vector_store %arg8[%c0_20, %c0_21], %35 {strides = array<i32>} : memref<2x4xf32, #tpu.memory_space<vmem>>, vector<2x4xf32>,
    return
  }
  func.func @transform_0(%arg0: i32) -> (i32, i32, i32) {
    %c0_i32 = arith.constant 0 : i32
    %c0_i32_0 = arith.constant 0 : i32
    %c0_i32_1 = arith.constant 0 : i32
    return %arg0, %c0_i32, %c0_i32_0 : i32, i32, i32
  }
  func.func @transform_1(%arg0: i32) -> (i32, i32, i32) {
    %c0_i32 = arith.constant 0 : i32
    %c0_i32_0 = arith.constant 0 : i32
    %c0_i32_1 = arith.constant 0 : i32
    return %arg0, %c0_i32, %c0_i32_0 : i32, i32, i32
  }
  func.func @transform_2(%arg0: i32) -> (i32, i32) {
    %c0_i32 = arith.constant 0 : i32
    %c0_i32_0 = arith.constant 0 : i32
    %c0_i32_1 = arith.constant 0 : i32
    return %c0_i32, %c0_i32_0 : i32, i32
  }
  func.func @transform_3(%arg0: i32) -> (i32, i32) {
    %c0_i32 = arith.constant 0 : i32
    %c0_i32_0 = arith.constant 0 : i32
    %c0_i32_1 = arith.constant 0 : i32
    return %c0_i32, %c0_i32_0 : i32, i32
  }
  func.func @transform_4(%arg0: i32) -> (i32, i32) {
    %c0_i32 = arith.constant 0 : i32
    %c0_i32_0 = arith.constant 0 : i32
    %c0_i32_1 = arith.constant 0 : i32
    return %c0_i32, %c0_i32_0 : i32, i32
  }
  func.func @transform_5(%arg0: i32) -> (i32, i32) {
    %c0_i32 = arith.constant 0 : i32
    %c0_i32_0 = arith.constant 0 : i32
    %c0_i32_1 = arith.constant 0 : i32
    return %c0_i32, %c0_i32_0 : i32, i32
  }
  func.func @transform_6(%arg0: i32) -> (i32, i32) {
    %c0_i32 = arith.constant 0 : i32
    %c0_i32_0 = arith.constant 0 : i32
    %c0_i32_1 = arith.constant 0 : i32
    return %c0_i32, %c0_i32_0 : i32, i32
  }
  func.func @transform_7(%arg0: i32) -> (i32, i32) {
    %c0_i32 = arith.constant 0 : i32
    %c0_i32_0 = arith.constant 0 : i32
    return %arg0, %c0_i32 : i32, i32
  }
}

</mosaic_0001>

<llo_original>
// kernel: han_forward.5
$region0: #{han_forward.5}
  #allocation0 [shape = 'u32[]', space=smem, size = 0x4, offset = 0x4, fixed_abs, tag = 'smem constant byte address 0x4 - core index']
  #allocation1 [shape = 'u32[144,128]{1,0:T(1,128)}', space=vmem, size = 0x12000, scoped, tag = 'internal scratch']
  %s0 = inlined_call_operand.vmem [shape: f32[6,8,16], index: 0, kind: input, shape index: {}]
  %s1 = inlined_call_operand.vmem [shape: f32[6,8,16], index: 1, kind: input, shape index: {}]
  %s2 = inlined_call_operand.vmem [shape: bf16[32,32], index: 2, kind: input, shape index: {}]
  %s3 = inlined_call_operand.vmem [shape: f32[1,32], index: 3, kind: input, shape index: {}]
  %s4 = inlined_call_operand.vmem [shape: f32[1,32], index: 4, kind: input, shape index: {}]
  %s5 = inlined_call_operand.vmem [shape: f32[6,32], index: 5, kind: output, shape index: {}]
  %s6 = sld [smem:[#allocation0]]
  $region30: #{han_forward.5} parent=0
    _
  %s8 = ssub.s32 1, %s6
  %s9 = scalar_select 0, %s8, %s6
  // Predicated region
  $region2: #{han_forward.5} parent=0 // pred_check
    _
  $region3: #{han_forward.5} parent=0 // pred_check_branch
    %11 = sbr.rel (0) target = $region5
  $region4: #{han_forward.5} parent=0 // pred_region
    _
  $region5: #{han_forward.5} parent=0 // pred_fallthru
    _
  // Predicated region
  $region6: #{han_forward.5} parent=0 // pred_check
    _
  $region7: #{han_forward.5} parent=0 // pred_check_branch
    %13 = sbr.rel (0) target = $region9
  $region8: #{han_forward.5} parent=0 // pred_region
    _
  $region9: #{han_forward.5} parent=0 // pred_fallthru
    _
  // Predicated region
  $region10: #{han_forward.5} parent=0 // pred_check
    _
  $region11: #{han_forward.5} parent=0 // pred_check_branch
    %15 = sbr.rel (0) target = $region13
  $region12: #{han_forward.5} parent=0 // pred_region
    _
  $region13: #{han_forward.5} parent=0 // pred_fallthru
    _
  // Predicated region
  $region14: #{han_forward.5} parent=0 // pred_check
    _
  $region15: #{han_forward.5} parent=0 // pred_check_branch
    %17 = sbr.rel (0) target = $region17
  $region16: #{han_forward.5} parent=0 // pred_region
    _
  $region17: #{han_forward.5} parent=0 // pred_fallthru
    _
  // Predicated region
  $region18: #{han_forward.5} parent=0 // pred_check
    _
  $region19: #{han_forward.5} parent=0 // pred_check_branch
    %19 = sbr.rel (0) target = $region21
  $region20: #{han_forward.5} parent=0 // pred_region
    _
  $region21: #{han_forward.5} parent=0 // pred_fallthru
    _
  %v21 = vld [vmem:[%s0] sm:$0xff]
  %v22 = vld [vmem:[%s0 + $0x8] sm:$0xff]
  %v23 = vld [vmem:[%s0 + $0x10] sm:$0xff]
  %v24 = vld [vmem:[%s0 + $0x18] sm:$0xff]
  %v25 = vld [vmem:[%s0 + $0x20] sm:$0xff]
  %v26 = vld [vmem:[%s0 + $0x28] sm:$0xff]
  %v27 = vld [vmem:[%s1] sm:$0xff]
  %v28 = vld [vmem:[%s1 + $0x8] sm:$0xff]
  %v29 = vld [vmem:[%s1 + $0x10] sm:$0xff]
  %v30 = vld [vmem:[%s1 + $0x18] sm:$0xff]
  %v31 = vld [vmem:[%s1 + $0x20] sm:$0xff]
  %v32 = vld [vmem:[%s1 + $0x28] sm:$0xff]
  %39 = vrot.lane.b32.xlu0 %v27, 16
  %v40 = vpop.permute.xlu0 %39
  %41 = vrot.lane.b32.xlu0 %v28, 16
  %v42 = vpop.permute.xlu0 %41
  %43 = vrot.lane.b32.xlu0 %v29, 16
  %v44 = vpop.permute.xlu0 %43
  %45 = vrot.lane.b32.xlu0 %v30, 16
  %v46 = vpop.permute.xlu0 %45
  %47 = vrot.lane.b32.xlu0 %v31, 16
  %v48 = vpop.permute.xlu0 %47
  %49 = vrot.lane.b32.xlu0 %v32, 16
  %v50 = vpop.permute.xlu0 %49
  %vm57 = vcmask 130048
  %v58 = vsel %vm57, %v21, %v40
  %v59 = vsel %vm57, %v22, %v42
  %v60 = vsel %vm57, %v23, %v44
  %v61 = vsel %vm57, %v24, %v46
  %v62 = vsel %vm57, %v25, %v48
  %v63 = vsel %vm57, %v26, %v50
  %v64 = vpack.c.bf16 %v59, %v58
  %v65 = vpack.c.bf16 %v61, %v60
  %v66 = vpack.c.bf16 %v63, %v62
  %v67 = vld [vmem:[%s2] sm:$0xf]
  %v68 = vld [vmem:[%s2 + $0x4] sm:$0xf]
  %v69 = vld [vmem:[%s2 + $0x8] sm:$0xf]
  %v70 = vld [vmem:[%s2 + $0xc] sm:$0xf]
  %v71 = vld [vmem:[%s3] sm:$0x1]
  %v73 = vlaneseq
  %v74 = vshrl.u32 %v73, 7
  %v75 = vsub.s32 0, %v74
  %v76 = vrot.slane %v71, %v75
  %v82 = vunpack.c.l.b16 %v67
  %v83 = vunpack.c.l.b16 %v68
  %v84 = vunpack.c.l.b16 %v69
  %v85 = vunpack.c.l.b16 %v70
  %v86 = vpack.c.b16 %v83, %v82
  %v87 = vpack.c.b16 %v85, %v84
  %vm90 = vcmask 261120
  %v92 = vsel %vm90, %v64, 0
  %v95 = vsel %vm90, %v65, 0
  %v98 = vsel %vm90, %v66, 0
  %100 = vmatprep.subr.bf16.mxu0 0
  %101 = vmatpush1.bf16.msra.mxu0 %v86
  %102 = vmatprep.subr.bf16.mxu0 0
  %103 = vmatpush1.bf16.msra.mxu0 %v87
  %104 = vmatprep.subr.bf16.mxu0 0
  %105 = vmatpush1.bf16.msra.mxu0 0
  %106 = vmatprep.subr.bf16.mxu0 0
  %107 = vmatpush1.bf16.msra.mxu0 0
  %108 = vmatprep.subr.bf16.mxu0 0
  %109 = vmatpush1.bf16.msra.mxu0 0
  %110 = vmatprep.subr.bf16.mxu0 0
  %111 = vmatpush1.bf16.msra.mxu0 0
  %112 = vmatprep.subr.bf16.mxu0 0
  %113 = vmatpush1.bf16.msra.mxu0 0
  %114 = vmatprep.subr.bf16.mxu0 0
  %115 = vmatpush1.bf16.msra.mxu0 0
  %116 = vmatprep.subr.bf16.mxu0 0
  %117 = vmatpush1.bf16.msra.mxu0 0
  %118 = vmatprep.subr.bf16.mxu0 0
  %119 = vmatpush1.bf16.msra.mxu0 0
  %120 = vmatprep.subr.bf16.mxu0 0
  %121 = vmatpush1.bf16.msra.mxu0 0
  %122 = vmatprep.subr.bf16.mxu0 0
  %123 = vmatpush1.bf16.msra.mxu0 0
  %124 = vmatprep.subr.bf16.mxu0 0
  %125 = vmatpush1.bf16.msra.mxu0 0
  %126 = vmatprep.subr.bf16.mxu0 0
  %127 = vmatpush1.bf16.msra.mxu0 0
  %128 = vmatprep.subr.bf16.mxu0 0
  %129 = vmatpush1.bf16.msra.mxu0 0
  %130 = vmatprep.subr.bf16.mxu0 0
  %131 = vmatpush1.bf16.msra.mxu0 0
  %132 = vmatprep.mubr.bf16.mxu0 0
  %133 = vmatmul.mubr.bf16.gmra.mrb[0].mxu0 %v92
  %v134 = vpop.f32.mrb[0].mxu0
  %v135 = vadd.f32 %v76, %v134
  %v136 = vpop.f32.mrb[0].mxu0
  %v137 = vpop.f32.mrb[0].mxu0
  %v138 = vadd.f32 %v76, %v137
  %v139 = vpop.f32.mrb[0].mxu0
  %140 = vmatprep.mubr.bf16.mxu0 0
  %141 = vmatmul.mubr.bf16.gmra.mrb[0].mxu0 %v95
  %v142 = vpop.f32.mrb[0].mxu0
  %v143 = vadd.f32 %v76, %v142
  %v144 = vpop.f32.mrb[0].mxu0
  %v145 = vpop.f32.mrb[0].mxu0
  %v146 = vadd.f32 %v76, %v145
  %v147 = vpop.f32.mrb[0].mxu0
  %148 = vmatprep.mubr.bf16.mxu0 0
  %149 = vmatmul.mubr.bf16.gmra.mrb[0].mxu0 %v98
  %v150 = vpop.f32.mrb[0].mxu0
  %v151 = vadd.f32 %v76, %v150
  %v152 = vpop.f32.mrb[0].mxu0
  %v153 = vpop.f32.mrb[0].mxu0
  %v154 = vadd.f32 %v76, %v153
  %v155 = vpop.f32.mrb[0].mxu0
  %156 = vdwg.mxu0
  %v157 = vtanh.pop %v135
  %v158 = vtanh.pop %v138
  %v159 = vtanh.pop %v143
  %v160 = vtanh.pop %v146
  %v161 = vtanh.pop %v151
  %v162 = vtanh.pop %v154
  %v163 = vld [vmem:[%s4] sm:$0x1]
  %v165 = vlaneseq
  %v166 = vshrl.u32 %v165, 7
  %v167 = vsub.s32 0, %v166
  %v168 = vrot.slane %v163, %v167
  %v170 = vmul.f32 %v157, %v168
  %v171 = vmul.f32 %v158, %v168
  %v172 = vmul.f32 %v159, %v168
  %v173 = vmul.f32 %v160, %v168
  %v174 = vmul.f32 %v161, %v168
  %v175 = vmul.f32 %v162, %v168
  %v176 = vsel %vm90, %v170, 0.0
  %177 = vadd.xlane.f32.xlu0 %v176
  %v178 = vpop.xlane.xlu0 %177
  %v179 = vsel %vm90, %v171, 0.0
  %180 = vadd.xlane.f32.xlu0 %v179
  %v181 = vpop.xlane.xlu0 %180
  %v182 = vsel %vm90, %v172, 0.0
  %183 = vadd.xlane.f32.xlu0 %v182
  %v184 = vpop.xlane.xlu0 %183
  %v185 = vsel %vm90, %v173, 0.0
  %186 = vadd.xlane.f32.xlu0 %v185
  %v187 = vpop.xlane.xlu0 %186
  %v188 = vsel %vm90, %v174, 0.0
  %189 = vadd.xlane.f32.xlu0 %v188
  %v190 = vpop.xlane.xlu0 %189
  %v191 = vsel %vm90, %v175, 0.0
  %192 = vadd.xlane.f32.xlu0 %v191
  %v193 = vpop.xlane.xlu0 %192
  %v200 = vlaneseq
  %v201 = vand.u32 %v200, 127
  %v202 = vlaneseq
  %v203 = vshrl.u32 %v202, 7
  %v204 = vsub.s32 %v201, %v203
  %v205 = vrot.slane %v178, %v204
  %v206 = vlaneseq
  %v207 = vshrl.u32 %v206, 7
  %v208 = vsub.s32 %v201, %v207
  %v209 = vrot.slane %v181, %v208
  %v210 = vlaneseq
  %v211 = vshrl.u32 %v210, 7
  %v212 = vsub.s32 %v201, %v211
  %v213 = vrot.slane %v184, %v212
  %v214 = vlaneseq
  %v215 = vshrl.u32 %v214, 7
  %v216 = vsub.s32 %v201, %v215
  %v217 = vrot.slane %v187, %v216
  %v218 = vlaneseq
  %v219 = vshrl.u32 %v218, 7
  %v220 = vsub.s32 %v201, %v219
  %v221 = vrot.slane %v190, %v220
  %v222 = vlaneseq
  %v223 = vshrl.u32 %v222, 7
  %v224 = vsub.s32 %v201, %v223
  %v225 = vrot.slane %v193, %v224
  %vm226 = vcmask 1041409
  %v227 = vsel %vm226, %v209, %v205
  %vm228 = vcmask 1042434
  %v229 = vsel %vm228, %v213, %v227
  %vm230 = vcmask 1043459
  %v231 = vsel %vm230, %v217, %v229
  %vm232 = vcmask 1044484
  %v233 = vsel %vm232, %v221, %v231
  %vm234 = vcmask 1045509
  %v235 = vsel %vm234, %v225, %v233
  %vm237 = vcmask 62464
  %v238 = vsel %vm237, %v235, -inf
  %239 = vmax.xlane.f32.xlu0 %v238
  %v240 = vpop.xlane.xlu0 %239
  %v242 = vlaneseq
  %v243 = vshrl.u32 %v242, 7
  %v244 = vsub.s32 0, %v243
  %v245 = vrot.slane %v240, %v244
  %v246 = vlaneseq
  %v247 = vshrl.u32 %v246, 7
  %v248 = vsub.s32 1, %v247
  %v249 = vrot.slane %v240, %v248
  %v250 = vlaneseq
  %v251 = vshrl.u32 %v250, 7
  %v252 = vsub.s32 2, %v251
  %v253 = vrot.slane %v240, %v252
  %v254 = vlaneseq
  %v255 = vshrl.u32 %v254, 7
  %v256 = vsub.s32 3, %v255
  %v257 = vrot.slane %v240, %v256
  %v258 = vlaneseq
  %v259 = vshrl.u32 %v258, 7
  %v260 = vsub.s32 4, %v259
  %v261 = vrot.slane %v240, %v260
  %v262 = vlaneseq
  %v263 = vshrl.u32 %v262, 7
  %v264 = vsub.s32 5, %v263
  %v265 = vrot.slane %v240, %v264
  %v272 = vsub.f32 %v178, %v245
  %v273 = vsub.f32 %v181, %v249
  %v274 = vsub.f32 %v184, %v253
  %v275 = vsub.f32 %v187, %v257
  %v276 = vsub.f32 %v190, %v261
  %v277 = vsub.f32 %v193, %v265
  %v278 = vmul.f32 %v272, 1.442695
  %v279 = vpow.pop %v278
  %v280 = vmul.f32 %v273, 1.442695
  %v281 = vpow.pop %v280
  %v282 = vmul.f32 %v274, 1.442695
  %v283 = vpow.pop %v282
  %v284 = vmul.f32 %v275, 1.442695
  %v285 = vpow.pop %v284
  %v286 = vmul.f32 %v276, 1.442695
  %v287 = vpow.pop %v286
  %v288 = vmul.f32 %v277, 1.442695
  %v289 = vpow.pop %v288
  %296 = vset.pattern.permute.xlu0 0
  %297 = vperm.xlu0 %296, %v279
  %v298 = vpop.permute.xlu0 %297
  %299 = vset.pattern.permute.xlu0 0
  %300 = vperm.xlu0 %299, %v281
  %v301 = vpop.permute.xlu0 %300
  %302 = vset.pattern.permute.xlu0 0
  %303 = vperm.xlu0 %302, %v283
  %v304 = vpop.permute.xlu0 %303
  %305 = vset.pattern.permute.xlu0 0
  %306 = vperm.xlu0 %305, %v285
  %v307 = vpop.permute.xlu0 %306
  %308 = vset.pattern.permute.xlu0 0
  %309 = vperm.xlu0 %308, %v287
  %v310 = vpop.permute.xlu0 %309
  %311 = vset.pattern.permute.xlu0 0
  %312 = vperm.xlu0 %311, %v289
  %v313 = vpop.permute.xlu0 %312
  %v314 = vlaneseq
  %v315 = vshrl.u32 %v314, 7
  %v316 = vsub.s32 %v201, %v315
  %v317 = vrot.slane %v298, %v316
  %v318 = vlaneseq
  %v319 = vshrl.u32 %v318, 7
  %v320 = vsub.s32 %v201, %v319
  %v321 = vrot.slane %v301, %v320
  %v322 = vlaneseq
  %v323 = vshrl.u32 %v322, 7
  %v324 = vsub.s32 %v201, %v323
  %v325 = vrot.slane %v304, %v324
  %v326 = vlaneseq
  %v327 = vshrl.u32 %v326, 7
  %v328 = vsub.s32 %v201, %v327
  %v329 = vrot.slane %v307, %v328
  %v330 = vlaneseq
  %v331 = vshrl.u32 %v330, 7
  %v332 = vsub.s32 %v201, %v331
  %v333 = vrot.slane %v310, %v332
  %v334 = vlaneseq
  %v335 = vshrl.u32 %v334, 7
  %v336 = vsub.s32 %v201, %v335
  %v337 = vrot.slane %v313, %v336
  %v338 = vsel %vm226, %v321, %v317
  %v339 = vsel %vm228, %v325, %v338
  %v340 = vsel %vm230, %v329, %v339
  %v341 = vsel %vm232, %v333, %v340
  %v342 = vsel %vm234, %v337, %v341
  %v344 = vsel %vm237, %v342, 0.0
  %345 = vadd.xlane.f32.xlu0 %v344
  %v346 = vpop.xlane.xlu0 %345
  %v348 = vlaneseq
  %v349 = vshrl.u32 %v348, 7
  %v350 = vsub.s32 0, %v349
  %v351 = vrot.slane %v346, %v350
  %v352 = vlaneseq
  %v353 = vshrl.u32 %v352, 7
  %v354 = vsub.s32 1, %v353
  %v355 = vrot.slane %v346, %v354
  %v356 = vlaneseq
  %v357 = vshrl.u32 %v356, 7
  %v358 = vsub.s32 2, %v357
  %v359 = vrot.slane %v346, %v358
  %v360 = vlaneseq
  %v361 = vshrl.u32 %v360, 7
  %v362 = vsub.s32 3, %v361
  %v363 = vrot.slane %v346, %v362
  %v364 = vlaneseq
  %v365 = vshrl.u32 %v364, 7
  %v366 = vsub.s32 4, %v365
  %v367 = vrot.slane %v346, %v366
  %v368 = vlaneseq
  %v369 = vshrl.u32 %v368, 7
  %v370 = vsub.s32 5, %v369
  %v371 = vrot.slane %v346, %v370
  %v378 = vrcp.pop %v351
  %v379 = vmul.f32 %v279, %v378
  %v380 = vrcp.pop %v355
  %v381 = vmul.f32 %v281, %v380
  %v382 = vrcp.pop %v359
  %v383 = vmul.f32 %v283, %v382
  %v384 = vrcp.pop %v363
  %v385 = vmul.f32 %v285, %v384
  %v386 = vrcp.pop %v367
  %v387 = vmul.f32 %v287, %v386
  %v388 = vrcp.pop %v371
  %v389 = vmul.f32 %v289, %v388
  %391 = vset.pattern.permute.xlu0 0
  %392 = vperm.xlu0 %391, %v379
  %v393 = vpop.permute.xlu0 %392
  %396 = vset.pattern.permute.xlu0 0
  %397 = vperm.xlu0 %396, %v381
  %v398 = vpop.permute.xlu0 %397
  %401 = vset.pattern.permute.xlu0 0
  %402 = vperm.xlu0 %401, %v383
  %v403 = vpop.permute.xlu0 %402
  %406 = vset.pattern.permute.xlu0 0
  %407 = vperm.xlu0 %406, %v385
  %v408 = vpop.permute.xlu0 %407
  %411 = vset.pattern.permute.xlu0 0
  %412 = vperm.xlu0 %411, %v387
  %v413 = vpop.permute.xlu0 %412
  %416 = vset.pattern.permute.xlu0 0
  %417 = vperm.xlu0 %416, %v389
  %v418 = vpop.permute.xlu0 %417
  %v420 = vmul.f32 %v58, %v393
  %v421 = vmul.f32 %v59, %v398
  %v422 = vmul.f32 %v60, %v403
  %v423 = vmul.f32 %v61, %v408
  %v424 = vmul.f32 %v62, %v413
  %v425 = vmul.f32 %v63, %v418
  %v426 = vsel %vm90, %v420, 0.0
  %v427 = vrot.slane %v426, 4
  %v428 = vadd.f32 %v426, %v427
  %v429 = vrot.slane %v428, 2
  %v430 = vadd.f32 %v428, %v429
  %v431 = vrot.slane %v430, 1
  %v432 = vadd.f32 %v430, %v431
  %v433 = vsel %vm90, %v421, 0.0
  %v434 = vrot.slane %v433, 4
  %v435 = vadd.f32 %v433, %v434
  %v436 = vrot.slane %v435, 2
  %v437 = vadd.f32 %v435, %v436
  %v438 = vrot.slane %v437, 1
  %v439 = vadd.f32 %v437, %v438
  %v440 = vsel %vm90, %v422, 0.0
  %v441 = vrot.slane %v440, 4
  %v442 = vadd.f32 %v440, %v441
  %v443 = vrot.slane %v442, 2
  %v444 = vadd.f32 %v442, %v443
  %v445 = vrot.slane %v444, 1
  %v446 = vadd.f32 %v444, %v445
  %v447 = vsel %vm90, %v423, 0.0
  %v448 = vrot.slane %v447, 4
  %v449 = vadd.f32 %v447, %v448
  %v450 = vrot.slane %v449, 2
  %v451 = vadd.f32 %v449, %v450
  %v452 = vrot.slane %v451, 1
  %v453 = vadd.f32 %v451, %v452
  %v454 = vsel %vm90, %v424, 0.0
  %v455 = vrot.slane %v454, 4
  %v456 = vadd.f32 %v454, %v455
  %v457 = vrot.slane %v456, 2
  %v458 = vadd.f32 %v456, %v457
  %v459 = vrot.slane %v458, 1
  %v460 = vadd.f32 %v458, %v459
  %v461 = vsel %vm90, %v425, 0.0
  %v462 = vrot.slane %v461, 4
  %v463 = vadd.f32 %v461, %v462
  %v464 = vrot.slane %v463, 2
  %v465 = vadd.f32 %v463, %v464
  %v466 = vrot.slane %v465, 1
  %v467 = vadd.f32 %v465, %v466
  %v474 = vsel %vm226, %v439, %v432
  %v475 = vsel %vm228, %v446, %v474
  %v476 = vsel %vm230, %v453, %v475
  %v477 = vsel %vm232, %v460, %v476
  %v478 = vsel %vm234, %v467, %v477
  %vm480 = vcmask 259072
  %481 = vst.msk [vmem:[%s5] sm:$0x3f] %vm480, %v478
  // Predicated region
  $region22: #{han_forward.5} parent=0 // pred_check
    _
  $region23: #{han_forward.5} parent=0 // pred_check_branch
    %483 = sbr.rel (0) target = $region25
  $region24: #{han_forward.5} parent=0 // pred_region
    _
  $region25: #{han_forward.5} parent=0 // pred_fallthru
    _
  // Predicated region
  $region26: #{han_forward.5} parent=0 // pred_check
    _
  $region27: #{han_forward.5} parent=0 // pred_check_branch
    %485 = sbr.rel (0) target = $region29
  $region28: #{han_forward.5} parent=0 // pred_region
    _
  $region29: #{han_forward.5} parent=0 // pred_fallthru
    _

// kernel: han_forward.7
$region0: #{han_forward.7}
  #allocation0 [shape = 'u32[]', space=smem, size = 0x4, offset = 0x4, fixed_abs, tag = 'smem constant byte address 0x4 - core index']
  #allocation1 [shape = 'u32[144,128]{1,0:T(1,128)}', space=vmem, size = 0x12000, scoped, tag = 'internal scratch']
  %s0 = inlined_call_operand.vmem [shape: f32[2,3,16], index: 0, kind: input, shape index: {}]
  %s1 = inlined_call_operand.vmem [shape: f32[2,3,16], index: 1, kind: input, shape index: {}]
  %s2 = inlined_call_operand.vmem [shape: bf16[32,32], index: 2, kind: input, shape index: {}]
  %s3 = inlined_call_operand.vmem [shape: f32[1,32], index: 3, kind: input, shape index: {}]
  %s4 = inlined_call_operand.vmem [shape: f32[1,32], index: 4, kind: input, shape index: {}]
  %s5 = inlined_call_operand.vmem [shape: bf16[32,4], index: 5, kind: input, shape index: {}]
  %s6 = inlined_call_operand.vmem [shape: f32[1,4], index: 6, kind: input, shape index: {}]
  %s7 = inlined_call_operand.hbm [shape: f32[2,4], index: 7, kind: output, shape index: {}]
  %s8 = sld [smem:[#allocation0]]
  $region38: #{han_forward.7} parent=0
    _
  %s10 = ssub.s32 1, %s8
  %s11 = scalar_select 0, %s10, %s8
  $region1: #{han_forward.7} parent=0
    #allocation2 [shape = 'u8[1024]{0}', space=vmem, size = 0x400, scoped, tag = 'output window, operand 0, single buffered']
    #allocation3 [shape = 's32[1]{0}', space=sflag, size = 0x4, scoped, tag = 'scoped memory for han_forward.7']
    %12 = vsyncpa [#allocation3], 0
    // Predicated region
    $region2: #{han_forward.7} parent=1 // pred_check
      _
    $region3: #{han_forward.7} parent=1 // pred_check_branch
      %14 = sbr.rel (0) target = $region5
    $region4: #{han_forward.7} parent=1 // pred_region
      _
    $region5: #{han_forward.7} parent=1 // pred_fallthru
      _
    // Predicated region
    $region6: #{han_forward.7} parent=1 // pred_check
      _
    $region7: #{han_forward.7} parent=1 // pred_check_branch
      %16 = sbr.rel (0) target = $region9
    $region8: #{han_forward.7} parent=1 // pred_region
      _
    $region9: #{han_forward.7} parent=1 // pred_fallthru
      _
    // Predicated region
    $region10: #{han_forward.7} parent=1 // pred_check
      _
    $region11: #{han_forward.7} parent=1 // pred_check_branch
      %18 = sbr.rel (0) target = $region13
    $region12: #{han_forward.7} parent=1 // pred_region
      _
    $region13: #{han_forward.7} parent=1 // pred_fallthru
      _
    // Predicated region
    $region14: #{han_forward.7} parent=1 // pred_check
      _
    $region15: #{han_forward.7} parent=1 // pred_check_branch
      %20 = sbr.rel (0) target = $region17
    $region16: #{han_forward.7} parent=1 // pred_region
      _
    $region17: #{han_forward.7} parent=1 // pred_fallthru
      _
    // Predicated region
    $region18: #{han_forward.7} parent=1 // pred_check
      _
    $region19: #{han_forward.7} parent=1 // pred_check_branch
      %22 = sbr.rel (0) target = $region21
    $region20: #{han_forward.7} parent=1 // pred_region
      _
    $region21: #{han_forward.7} parent=1 // pred_fallthru
      _
    // Predicated region
    $region22: #{han_forward.7} parent=1 // pred_check
      _
    $region23: #{han_forward.7} parent=1 // pred_check_branch
      %24 = sbr.rel (0) target = $region25
    $region24: #{han_forward.7} parent=1 // pred_region
      _
    $region25: #{han_forward.7} parent=1 // pred_fallthru
      _
    // Predicated region
    $region26: #{han_forward.7} parent=1 // pred_check
      _
    $region27: #{han_forward.7} parent=1 // pred_check_branch
      %26 = sbr.rel (0) target = $region29
    $region28: #{han_forward.7} parent=1 // pred_region
      _
    $region29: #{han_forward.7} parent=1 // pred_fallthru
      _
    %v28 = vld [vmem:[%s0] sm:$0x7]
    %v29 = vld [vmem:[%s0 + $0x4] sm:$0x7]
    %v30 = vld [vmem:[%s1] sm:$0x7]
    %v31 = vld [vmem:[%s1 + $0x4] sm:$0x7]
    %34 = vrot.lane.b32.xlu0 %v30, 16
    %v35 = vpop.permute.xlu0 %34
    %36 = vrot.lane.b32.xlu0 %v31, 16
    %v37 = vpop.permute.xlu0 %36
    %vm40 = vcmask 130048
    %v41 = vsel %vm40, %v28, %v35
    %v42 = vsel %vm40, %v29, %v37
    %v46 = vunpack.c.l.s4 1966171168
    %v47 = vunpack.c.0.s8 %v46
    %v48 = vlaneseq
    %v49 = vshrl.u32 %v48, 7
    %v50 = vsub.s32 %v47, %v49
    %v51 = vrot.slane %v41, %v50
    %v52 = vcombine.high %v51, %v51
    %v54 = vunpack.c.l.s4 1966171168
    %v55 = vunpack.c.0.s8 %v54
    %v56 = vlaneseq
    %v57 = vshrl.u32 %v56, 7
    %v58 = vsub.s32 %v55, %v57
    %v59 = vrot.slane %v51, %v58
    %v61 = vunpack.c.l.s4 1966171168
    %v62 = vunpack.c.0.s8 %v61
    %v63 = vlaneseq
    %v64 = vshrl.u32 %v63, 7
    %v65 = vsub.s32 %v62, %v64
    %v66 = vrot.slane %v52, %v65
    %v67 = vcombine.high %v59, %v59
    %v69 = vunpack.c.l.s4 1966171168
    %v70 = vunpack.c.0.s8 %v69
    %v71 = vlaneseq
    %v72 = vshrl.u32 %v71, 7
    %v73 = vsub.s32 %v70, %v72
    %v74 = vrot.slane %v42, %v73
    %v75 = vcombine.high %v74, %v74
    %v77 = vunpack.c.l.s4 1966171168
    %v78 = vunpack.c.0.s8 %v77
    %v79 = vlaneseq
    %v80 = vshrl.u32 %v79, 7
    %v81 = vsub.s32 %v78, %v80
    %v82 = vrot.slane %v74, %v81
    %v84 = vunpack.c.l.s4 1966171168
    %v85 = vunpack.c.0.s8 %v84
    %v86 = vlaneseq
    %v87 = vshrl.u32 %v86, 7
    %v88 = vsub.s32 %v85, %v87
    %v89 = vrot.slane %v75, %v88
    %v90 = vcombine.high %v82, %v82
    %v91 = vcombine.low %v59, %v66
    %v92 = vcombine.low %v67, %v82
    %v93 = vcombine.low %v89, %v90
    %v95 = vunpack.c.l.s4 1966171168
    %v96 = vunpack.c.0.s8 %v95
    %v97 = vlaneseq
    %v98 = vshrl.u32 %v97, 7
    %v99 = vsub.s32 %v96, %v98
    %v100 = vrot.slane %v91, %v99
    %v102 = vunpack.c.l.s4 1966171168
    %v103 = vunpack.c.0.s8 %v102
    %v104 = vlaneseq
    %v105 = vshrl.u32 %v104, 7
    %v106 = vsub.s32 %v103, %v105
    %v107 = vrot.slane %v92, %v106
    %v109 = vunpack.c.l.s4 1966171168
    %v110 = vunpack.c.0.s8 %v109
    %v111 = vlaneseq
    %v112 = vshrl.u32 %v111, 7
    %v113 = vsub.s32 %v110, %v112
    %v114 = vrot.slane %v93, %v113
    %v115 = vcombine.low %v100, %v107
    %v117 = vunpack.c.l.s4 1966171168
    %v118 = vunpack.c.0.s8 %v117
    %v119 = vlaneseq
    %v120 = vshrl.u32 %v119, 7
    %v121 = vsub.s32 %v118, %v120
    %v122 = vrot.slane %v115, %v121
    %v124 = vunpack.c.l.s4 1966171168
    %v125 = vunpack.c.0.s8 %v124
    %v126 = vlaneseq
    %v127 = vshrl.u32 %v126, 7
    %v128 = vsub.s32 %v125, %v127
    %v129 = vrot.slane %v114, %v128
    %v130 = vcombine.low %v122, %v129
    %v132 = vpack.c.bf16 %v130, %v130
    %v133 = vld [vmem:[%s2] sm:$0xf]
    %v134 = vld [vmem:[%s2 + $0x4] sm:$0xf]
    %v135 = vld [vmem:[%s2 + $0x8] sm:$0xf]
    %v136 = vld [vmem:[%s2 + $0xc] sm:$0xf]
    %v137 = vld [vmem:[%s3] sm:$0x1]
    %v139 = vlaneseq
    %v140 = vshrl.u32 %v139, 7
    %v141 = vsub.s32 0, %v140
    %v142 = vrot.slane %v137, %v141
    %v148 = vunpack.c.l.b16 %v133
    %v149 = vunpack.c.l.b16 %v134
    %v150 = vunpack.c.l.b16 %v135
    %v151 = vunpack.c.l.b16 %v136
    %v152 = vpack.c.b16 %v149, %v148
    %v153 = vpack.c.b16 %v151, %v150
    %vm156 = vcmask 261120
    %v158 = vsel %vm156, %v132, 0
    %160 = vmatprep.subr.bf16.mxu0 0
    %161 = vmatpush1.bf16.msra.mxu0 %v152
    %162 = vmatprep.subr.bf16.mxu0 0
    %163 = vmatpush1.bf16.msra.mxu0 %v153
    %164 = vmatprep.subr.bf16.mxu0 0
    %165 = vmatpush1.bf16.msra.mxu0 0
    %166 = vmatprep.subr.bf16.mxu0 0
    %167 = vmatpush1.bf16.msra.mxu0 0
    %168 = vmatprep.subr.bf16.mxu0 0
    %169 = vmatpush1.bf16.msra.mxu0 0
    %170 = vmatprep.subr.bf16.mxu0 0
    %171 = vmatpush1.bf16.msra.mxu0 0
    %172 = vmatprep.subr.bf16.mxu0 0
    %173 = vmatpush1.bf16.msra.mxu0 0
    %174 = vmatprep.subr.bf16.mxu0 0
    %175 = vmatpush1.bf16.msra.mxu0 0
    %176 = vmatprep.subr.bf16.mxu0 0
    %177 = vmatpush1.bf16.msra.mxu0 0
    %178 = vmatprep.subr.bf16.mxu0 0
    %179 = vmatpush1.bf16.msra.mxu0 0
    %180 = vmatprep.subr.bf16.mxu0 0
    %181 = vmatpush1.bf16.msra.mxu0 0
    %182 = vmatprep.subr.bf16.mxu0 0
    %183 = vmatpush1.bf16.msra.mxu0 0
    %184 = vmatprep.subr.bf16.mxu0 0
    %185 = vmatpush1.bf16.msra.mxu0 0
    %186 = vmatprep.subr.bf16.mxu0 0
    %187 = vmatpush1.bf16.msra.mxu0 0
    %188 = vmatprep.subr.bf16.mxu0 0
    %189 = vmatpush1.bf16.msra.mxu0 0
    %190 = vmatprep.subr.bf16.mxu0 0
    %191 = vmatpush1.bf16.msra.mxu0 0
    %192 = vmatprep.mubr.bf16.mxu0 0
    %193 = vmatmul.mubr.bf16.gmra.mrb[0].mxu0 %v158
    %v194 = vpop.f32.mrb[0].mxu0
    %v195 = vadd.f32 %v142, %v194
    %v196 = vpop.f32.mrb[0].mxu0
    %v197 = vpop.f32.mrb[0].mxu0
    %v198 = vpop.f32.mrb[0].mxu0
    %199 = vdwg.mxu0
    %v200 = vtanh.pop %v195
    %v202 = vcombine.high %v200, %v200
    %v204 = vunpack.c.l.s4 1966171168
    %v205 = vunpack.c.0.s8 %v204
    %v206 = vlaneseq
    %v207 = vshrl.u32 %v206, 7
    %v208 = vsub.s32 %v205, %v207
    %v209 = vrot.slane %v200, %v208
    %v211 = vunpack.c.l.s4 1966171168
    %v212 = vunpack.c.0.s8 %v211
    %v213 = vlaneseq
    %v214 = vshrl.u32 %v213, 7
    %v215 = vsub.s32 %v212, %v214
    %v216 = vrot.slane %v202, %v215
    %v217 = vcombine.high %v209, %v209
    %v218 = vcombine.high %v216, %v216
    %v220 = vunpack.c.l.s4 1966171168
    %v221 = vunpack.c.0.s8 %v220
    %v222 = vlaneseq
    %v223 = vshrl.u32 %v222, 7
    %v224 = vsub.s32 %v221, %v223
    %v225 = vrot.slane %v209, %v224
    %v227 = vunpack.c.l.s4 1966171168
    %v228 = vunpack.c.0.s8 %v227
    %v229 = vlaneseq
    %v230 = vshrl.u32 %v229, 7
    %v231 = vsub.s32 %v228, %v230
    %v232 = vrot.slane %v216, %v231
    %v234 = vunpack.c.l.s4 1966171168
    %v235 = vunpack.c.0.s8 %v234
    %v236 = vlaneseq
    %v237 = vshrl.u32 %v236, 7
    %v238 = vsub.s32 %v235, %v237
    %v239 = vrot.slane %v217, %v238
    %v241 = vunpack.c.l.s4 1966171168
    %v242 = vunpack.c.0.s8 %v241
    %v243 = vlaneseq
    %v244 = vshrl.u32 %v243, 7
    %v245 = vsub.s32 %v242, %v244
    %v246 = vrot.slane %v218, %v245
    %v247 = vcombine.high %v225, %v225
    %v248 = vcombine.high %v239, %v239
    %v255 = vld [vmem:[%s4] sm:$0x1]
    %v257 = vlaneseq
    %v258 = vshrl.u32 %v257, 7
    %v259 = vsub.s32 0, %v258
    %v260 = vrot.slane %v255, %v259
    %v262 = vunpack.c.l.s4 1966171168
    %v263 = vunpack.c.0.s8 %v262
    %v264 = vlaneseq
    %v265 = vshrl.u32 %v264, 7
    %v266 = vsub.s32 %v263, %v265
    %v267 = vrot.slane %v260, %v266
    %v268 = vcombine.high %v267, %v267
    %v270 = vunpack.c.l.s4 1966171168
    %v271 = vunpack.c.0.s8 %v270
    %v272 = vlaneseq
    %v273 = vshrl.u32 %v272, 7
    %v274 = vsub.s32 %v271, %v273
    %v275 = vrot.slane %v267, %v274
    %v277 = vunpack.c.l.s4 1966171168
    %v278 = vunpack.c.0.s8 %v277
    %v279 = vlaneseq
    %v280 = vshrl.u32 %v279, 7
    %v281 = vsub.s32 %v278, %v280
    %v282 = vrot.slane %v268, %v281
    %v283 = vcombine.high %v275, %v275
    %v287 = vmul.f32 %v225, %v275
    %v288 = vmul.f32 %v239, %v282
    %v289 = vmul.f32 %v247, %v283
    %v290 = vmul.f32 %v248, %v275
    %v291 = vmul.f32 %v232, %v282
    %v292 = vmul.f32 %v246, %v283
    %v299 = vcombine.low %v287, %v288
    %v301 = vunpack.c.l.s4 1966171168
    %v302 = vunpack.c.0.s8 %v301
    %v303 = vlaneseq
    %v304 = vshrl.u32 %v303, 7
    %v305 = vsub.s32 %v302, %v304
    %v306 = vrot.slane %v299, %v305
    %v308 = vunpack.c.l.s4 1966171168
    %v309 = vunpack.c.0.s8 %v308
    %v310 = vlaneseq
    %v311 = vshrl.u32 %v310, 7
    %v312 = vsub.s32 %v309, %v311
    %v313 = vrot.slane %v289, %v312
    %v314 = vcombine.low %v306, %v313
    %v316 = vunpack.c.l.s4 1966171168
    %v317 = vunpack.c.0.s8 %v316
    %v318 = vlaneseq
    %v319 = vshrl.u32 %v318, 7
    %v320 = vsub.s32 %v317, %v319
    %v321 = vrot.slane %v314, %v320
    %v322 = vcombine.low %v290, %v291
    %v324 = vunpack.c.l.s4 1966171168
    %v325 = vunpack.c.0.s8 %v324
    %v326 = vlaneseq
    %v327 = vshrl.u32 %v326, 7
    %v328 = vsub.s32 %v325, %v327
    %v329 = vrot.slane %v322, %v328
    %v331 = vunpack.c.l.s4 1966171168
    %v332 = vunpack.c.0.s8 %v331
    %v333 = vlaneseq
    %v334 = vshrl.u32 %v333, 7
    %v335 = vsub.s32 %v332, %v334
    %v336 = vrot.slane %v292, %v335
    %v337 = vcombine.low %v329, %v336
    %v339 = vunpack.c.l.s4 1966171168
    %v340 = vunpack.c.0.s8 %v339
    %v341 = vlaneseq
    %v342 = vshrl.u32 %v341, 7
    %v343 = vsub.s32 %v340, %v342
    %v344 = vrot.slane %v337, %v343
    %vm347 = vcmask 256000
    %v348 = vsel %vm347, %v321, 0.0
    %349 = vadd.xlane.f32.xlu0 %v348
    %v350 = vpop.xlane.xlu0 %349
    %v351 = vsel %vm347, %v344, 0.0
    %352 = vadd.xlane.f32.xlu0 %v351
    %v353 = vpop.xlane.xlu0 %352
    %v356 = vlaneseq
    %v357 = vand.u32 %v356, 127
    %v358 = vlaneseq
    %v359 = vshrl.u32 %v358, 7
    %v360 = vsub.s32 %v357, %v359
    %v361 = vrot.slane %v350, %v360
    %v362 = vlaneseq
    %v363 = vshrl.u32 %v362, 7
    %v364 = vsub.s32 %v357, %v363
    %v365 = vrot.slane %v353, %v364
    %vm366 = vcmask 1041409
    %v367 = vsel %vm366, %v365, %v361
    %vm369 = vcmask 17408
    %v370 = vsel %vm369, %v367, -inf
    %371 = vmax.xlane.f32.xlu0 %v370
    %v372 = vpop.xlane.xlu0 %371
    %v374 = vlaneseq
    %v375 = vshrl.u32 %v374, 7
    %v376 = vsub.s32 0, %v375
    %v377 = vrot.slane %v372, %v376
    %v378 = vlaneseq
    %v379 = vshrl.u32 %v378, 7
    %v380 = vsub.s32 1, %v379
    %v381 = vrot.slane %v372, %v380
    %v384 = vsub.f32 %v350, %v377
    %v385 = vsub.f32 %v353, %v381
    %v386 = vmul.f32 %v384, 1.442695
    %v387 = vpow.pop %v386
    %v388 = vmul.f32 %v385, 1.442695
    %v389 = vpow.pop %v388
    %392 = vset.pattern.permute.xlu0 0
    %393 = vperm.xlu0 %392, %v387
    %v394 = vpop.permute.xlu0 %393
    %395 = vset.pattern.permute.xlu0 0
    %396 = vperm.xlu0 %395, %v389
    %v397 = vpop.permute.xlu0 %396
    %v398 = vlaneseq
    %v399 = vshrl.u32 %v398, 7
    %v400 = vsub.s32 %v357, %v399
    %v401 = vrot.slane %v394, %v400
    %v402 = vlaneseq
    %v403 = vshrl.u32 %v402, 7
    %v404 = vsub.s32 %v357, %v403
    %v405 = vrot.slane %v397, %v404
    %v406 = vsel %vm366, %v405, %v401
    %v408 = vsel %vm369, %v406, 0.0
    %409 = vadd.xlane.f32.xlu0 %v408
    %v410 = vpop.xlane.xlu0 %409
    %v412 = vlaneseq
    %v413 = vshrl.u32 %v412, 7
    %v414 = vsub.s32 0, %v413
    %v415 = vrot.slane %v410, %v414
    %v416 = vlaneseq
    %v417 = vshrl.u32 %v416, 7
    %v418 = vsub.s32 1, %v417
    %v419 = vrot.slane %v410, %v418
    %v422 = vrcp.pop %v415
    %v423 = vmul.f32 %v387, %v422
    %v424 = vrcp.pop %v419
    %v425 = vmul.f32 %v389, %v424
    %427 = vset.pattern.permute.xlu0 0
    %428 = vperm.xlu0 %427, %v423
    %v429 = vpop.permute.xlu0 %428
    %432 = vset.pattern.permute.xlu0 0
    %433 = vperm.xlu0 %432, %v425
    %v434 = vpop.permute.xlu0 %433
    %v436 = vmul.f32 %v41, %v429
    %v437 = vmul.f32 %v42, %v434
    %v438 = vsel %vm347, %v436, 0.0
    %v439 = vrot.slane %v438, 4
    %v440 = vadd.f32 %v438, %v439
    %v441 = vrot.slane %v440, 2
    %v442 = vadd.f32 %v440, %v441
    %v443 = vrot.slane %v442, 1
    %v444 = vadd.f32 %v442, %v443
    %v445 = vsel %vm347, %v437, 0.0
    %v446 = vrot.slane %v445, 4
    %v447 = vadd.f32 %v445, %v446
    %v448 = vrot.slane %v447, 2
    %v449 = vadd.f32 %v447, %v448
    %v450 = vrot.slane %v449, 1
    %v451 = vadd.f32 %v449, %v450
    %v452 = vpack.c.bf16 %v444, %v444
    %v453 = vpack.c.bf16 %v451, %v451
    %v454 = vld [vmem:[%s5] sm:$0xf]
    %v455 = vld [vmem:[%s5 + $0x4] sm:$0xf]
    %v456 = vld [vmem:[%s5 + $0x8] sm:$0xf]
    %v457 = vld [vmem:[%s5 + $0xc] sm:$0xf]
    %v458 = vld [vmem:[%s6] sm:$0x1]
    %v460 = vlaneseq
    %v461 = vshrl.u32 %v460, 7
    %v462 = vsub.s32 0, %v461
    %v463 = vrot.slane %v458, %v462
    %v467 = vunpack.c.l.b16 %v452
    %v468 = vunpack.c.l.b16 %v453
    %v469 = vsel %vm366, %v468, %v467
    %v470 = vpack.c.b16 %v469, %v469
    %v475 = vunpack.c.l.b16 %v454
    %v476 = vunpack.c.l.b16 %v455
    %v477 = vunpack.c.l.b16 %v456
    %v478 = vunpack.c.l.b16 %v457
    %v479 = vpack.c.b16 %v476, %v475
    %v480 = vpack.c.b16 %v478, %v477
    %v484 = vsel %vm156, %v470, 0
    %486 = vmatprep.subr.bf16.mxu0 0
    %487 = vmatpush1.bf16.msra.mxu0 %v479
    %488 = vmatprep.subr.bf16.mxu0 0
    %489 = vmatpush1.bf16.msra.mxu0 %v480
    %490 = vmatprep.subr.bf16.mxu0 0
    %491 = vmatpush1.bf16.msra.mxu0 0
    %492 = vmatprep.subr.bf16.mxu0 0
    %493 = vmatpush1.bf16.msra.mxu0 0
    %494 = vmatprep.subr.bf16.mxu0 0
    %495 = vmatpush1.bf16.msra.mxu0 0
    %496 = vmatprep.subr.bf16.mxu0 0
    %497 = vmatpush1.bf16.msra.mxu0 0
    %498 = vmatprep.subr.bf16.mxu0 0
    %499 = vmatpush1.bf16.msra.mxu0 0
    %500 = vmatprep.subr.bf16.mxu0 0
    %501 = vmatpush1.bf16.msra.mxu0 0
    %502 = vmatprep.subr.bf16.mxu0 0
    %503 = vmatpush1.bf16.msra.mxu0 0
    %504 = vmatprep.subr.bf16.mxu0 0
    %505 = vmatpush1.bf16.msra.mxu0 0
    %506 = vmatprep.subr.bf16.mxu0 0
    %507 = vmatpush1.bf16.msra.mxu0 0
    %508 = vmatprep.subr.bf16.mxu0 0
    %509 = vmatpush1.bf16.msra.mxu0 0
    %510 = vmatprep.subr.bf16.mxu0 0
    %511 = vmatpush1.bf16.msra.mxu0 0
    %512 = vmatprep.subr.bf16.mxu0 0
    %513 = vmatpush1.bf16.msra.mxu0 0
    %514 = vmatprep.subr.bf16.mxu0 0
    %515 = vmatpush1.bf16.msra.mxu0 0
    %516 = vmatprep.subr.bf16.mxu0 0
    %517 = vmatpush1.bf16.msra.mxu0 0
    %518 = vmatprep.mubr.bf16.mxu0 0
    %519 = vmatmul.mubr.bf16.gmra.mrb[0].mxu0 %v484
    %v520 = vpop.f32.mrb[0].mxu0
    %v521 = vadd.f32 %v463, %v520
    %v522 = vpop.f32.mrb[0].mxu0
    %v523 = vpop.f32.mrb[0].mxu0
    %v524 = vpop.f32.mrb[0].mxu0
    %525 = vdwg.mxu0
    %vm526 = vcmask 25600
    %527 = vst.msk [vmem:[#allocation2] sm:$0x3] %vm526, %v521
    // Predicated region
    $region30: #{han_forward.7} parent=1 // pred_check
      _
    $region31: #{han_forward.7} parent=1 // pred_check_branch
      %529 = sbr.rel (0) target = $region33
    $region32: #{han_forward.7} parent=1 // pred_region
      %s531 = ssub.s32 32, 32
      %532 = vsyncadd [#allocation3], %s531
      %s534 = sshll.u32 [#allocation2], 4
      %s535 = int_to_ptr.vmem [resolvable:$true] %s534
      %537 = dma.vmem_to_hbm [thread:$0]  %s535, 32, %s7, [#allocation3]
    $region33: #{han_forward.7} parent=1 // pred_fallthru
      _
    // Predicated region
    $region34: #{han_forward.7} parent=1 // pred_check
      _
    $region35: #{han_forward.7} parent=1 // pred_check_branch
      %539 = sbr.rel (0) target = $region37
    $region36: #{han_forward.7} parent=1 // pred_region
      %540 = dma.done [#allocation3], 32
    $region37: #{han_forward.7} parent=1 // pred_fallthru
      _
    %541 = vsyncpa [#allocation3], 1

// kernel: han_forward.6
$region0: #{han_forward.6}
  #allocation0 [shape = 'u32[]', space=smem, size = 0x4, offset = 0x4, fixed_abs, tag = 'smem constant byte address 0x4 - core index']
  #allocation1 [shape = 'u32[144,128]{1,0:T(1,128)}', space=vmem, size = 0x12000, scoped, tag = 'internal scratch']
  #allocation2 [shape = 'f32[6,32]{1,0:T(8,128)}', space=vmem, size = 0x1000, scoped, tag = 'scratch operand']
  #allocation3 [shape = 'f32[6,16]{1,0:T(8,128)}', space=vmem, size = 0x1000, scoped, tag = 'scratch operand']
  #allocation4 [shape = 'f32[2,3,64]{2,1,0:T(4,128)}', space=vmem, size = 0x1000, scoped, tag = 'scratch operand']
  #allocation5 [shape = 'f32[2,3,64]{2,1,0:T(4,128)}', space=vmem, size = 0x1000, scoped, tag = 'scratch operand']
  %s0 = inlined_call_operand.vmem [shape: f32[2,3,32], index: 0, kind: input, shape index: {}, may-alias: {0,1}]
  %s1 = inlined_call_operand.vmem [shape: f32[2,3,32], index: 1, kind: input, shape index: {}, may-alias: {0,1}]
  %s2 = inlined_call_operand.vmem [shape: bf16[32,64], index: 2, kind: input, shape index: {}]
  %s3 = inlined_call_operand.vmem [shape: bf16[32,64], index: 3, kind: input, shape index: {}]
  %s4 = inlined_call_operand.vmem [shape: f32[1,64], index: 4, kind: input, shape index: {}]
  %s5 = inlined_call_operand.vmem [shape: f32[1,64], index: 5, kind: input, shape index: {}]
  %s6 = inlined_call_operand.vmem [shape: bf16[32,64], index: 6, kind: input, shape index: {}]
  %s7 = inlined_call_operand.vmem [shape: f32[2,3,16], index: 7, kind: output, shape index: {0}]
  %s8 = inlined_call_operand.vmem [shape: f32[2,3,16], index: 8, kind: output, shape index: {1}]
  %9 = xla_tuple %s7, %s8
  %s10 = sld [smem:[#allocation0]]
  $region50: #{han_forward.6} parent=0
    _
  %s12 = ssub.s32 1, %s10
  %s13 = scalar_select 0, %s12, %s10
  // Predicated region
  $region2: #{han_forward.6} parent=0 // pred_check
    _
  $region3: #{han_forward.6} parent=0 // pred_check_branch
    %15 = sbr.rel (0) target = $region5
  $region4: #{han_forward.6} parent=0 // pred_region
    _
  $region5: #{han_forward.6} parent=0 // pred_fallthru
    _
  // Predicated region
  $region6: #{han_forward.6} parent=0 // pred_check
    _
  $region7: #{han_forward.6} parent=0 // pred_check_branch
    %17 = sbr.rel (0) target = $region9
  $region8: #{han_forward.6} parent=0 // pred_region
    %s18 = ssub.s32 0, 0
    %s19 = smul.u32 2, %s18
    %p20 = scmp.lt.s32.totalorder %s19, 1
    %s21 = scalar_select %p20, %s19, 1
    %s22 = smul.addr %s21, 4
    %s23 = scalar_lea.vmem %s1, %s22
    %s24 = ssub.s32 0, 0
    %s25 = smul.u32 2, %s24
  $region9: #{han_forward.6} parent=0 // pred_fallthru
    _
  // Predicated region
  $region10: #{han_forward.6} parent=0 // pred_check
    _
  $region11: #{han_forward.6} parent=0 // pred_check_branch
    %27 = sbr.rel (0) target = $region13
  $region12: #{han_forward.6} parent=0 // pred_region
    _
  $region13: #{han_forward.6} parent=0 // pred_fallthru
    _
  // Predicated region
  $region14: #{han_forward.6} parent=0 // pred_check
    _
  $region15: #{han_forward.6} parent=0 // pred_check_branch
    %29 = sbr.rel (0) target = $region17
  $region16: #{han_forward.6} parent=0 // pred_region
    _
  $region17: #{han_forward.6} parent=0 // pred_fallthru
    _
  // Predicated region
  $region18: #{han_forward.6} parent=0 // pred_check
    _
  $region19: #{han_forward.6} parent=0 // pred_check_branch
    %31 = sbr.rel (0) target = $region21
  $region20: #{han_forward.6} parent=0 // pred_region
    _
  $region21: #{han_forward.6} parent=0 // pred_fallthru
    _
  // Predicated region
  $region22: #{han_forward.6} parent=0 // pred_check
    _
  $region23: #{han_forward.6} parent=0 // pred_check_branch
    %33 = sbr.rel (0) target = $region25
  $region24: #{han_forward.6} parent=0 // pred_region
    _
  $region25: #{han_forward.6} parent=0 // pred_fallthru
    _
  // Predicated region
  $region26: #{han_forward.6} parent=0 // pred_check
    _
  $region27: #{han_forward.6} parent=0 // pred_check_branch
    %35 = sbr.rel (0) target = $region29
  $region28: #{han_forward.6} parent=0 // pred_region
    _
  $region29: #{han_forward.6} parent=0 // pred_fallthru
    _
  %s36 = ssub.s32 0, 0
  %s37 = smul.u32 2, %s36
  %p38 = scmp.lt.s32.totalorder %s37, 1
  %s39 = scalar_select %p38, %s37, 1
  %s40 = smul.addr %s39, 4
  %s41 = scalar_lea.vmem %s1, %s40
  %s42 = ssub.s32 0, 0
  %s43 = smul.u32 2, %s42
  %p44 = scmp.lt.s32.totalorder %s43, 1
  %s45 = scalar_select %p44, %s43, 1
  %s46 = smul.addr %s45, 4
  %s47 = scalar_lea.vmem %s8, %s46
  %s48 = ssub.s32 0, 0
  %s49 = smul.u32 2, %s48
  %p50 = scmp.lt.s32.totalorder %s49, 1
  %s51 = scalar_select %p50, %s49, 1
  %s52 = smul.addr %s51, 4
  %s53 = scalar_lea.vmem %s1, %s52
  %s54 = ssub.s32 0, 0
  %s55 = smul.u32 2, %s54
  %s56 = ssub.s32 0, 0
  %s57 = smul.u32 2, %s56
  %p58 = scmp.lt.s32.totalorder %s57, 1
  %s59 = scalar_select %p58, %s57, 1
  %s60 = smul.addr %s59, 4
  %s61 = scalar_lea.vmem %s8, %s60
  %s62 = ssub.s32 0, 0
  %s63 = smul.u32 2, %s62
  %p65 = scmp.eq.s32.totalorder 0, 0
  // Predicated region
  $region30: #{han_forward.6} parent=0 // pred_check
    %p66 = pneg %p65
  $region31: #{han_forward.6} parent=0 // pred_check_branch
    %68 = sbr.rel (%p66) target = $region33
  $region32: #{han_forward.6} parent=0 // pred_region
    %vm69 = vcmask 259072
    %70 = vst.msk [vmem:[#allocation2] sm:$0x3f] %vm69, 0.0
    %vm71 = vcmask 128000
    %72 = vst.msk [vmem:[#allocation3] sm:$0x3f] %vm71, 0.0
  $region33: #{han_forward.6} parent=0 // pred_fallthru
    _
  %v73 = vld [vmem:[%s0] sm:$0x7]
  %v74 = vld [vmem:[%s0 + $0x4] sm:$0x7]
  %v78 = vunpack.c.l.s4 1966171168
  %v79 = vunpack.c.0.s8 %v78
  %v80 = vlaneseq
  %v81 = vshrl.u32 %v80, 7
  %v82 = vsub.s32 %v79, %v81
  %v83 = vrot.slane %v73, %v82
  %v84 = vcombine.high %v83, %v83
  %v86 = vunpack.c.l.s4 1966171168
  %v87 = vunpack.c.0.s8 %v86
  %v88 = vlaneseq
  %v89 = vshrl.u32 %v88, 7
  %v90 = vsub.s32 %v87, %v89
  %v91 = vrot.slane %v83, %v90
  %v93 = vunpack.c.l.s4 1966171168
  %v94 = vunpack.c.0.s8 %v93
  %v95 = vlaneseq
  %v96 = vshrl.u32 %v95, 7
  %v97 = vsub.s32 %v94, %v96
  %v98 = vrot.slane %v84, %v97
  %v99 = vcombine.high %v91, %v91
  %v101 = vunpack.c.l.s4 1966171168
  %v102 = vunpack.c.0.s8 %v101
  %v103 = vlaneseq
  %v104 = vshrl.u32 %v103, 7
  %v105 = vsub.s32 %v102, %v104
  %v106 = vrot.slane %v74, %v105
  %v107 = vcombine.high %v106, %v106
  %v109 = vunpack.c.l.s4 1966171168
  %v110 = vunpack.c.0.s8 %v109
  %v111 = vlaneseq
  %v112 = vshrl.u32 %v111, 7
  %v113 = vsub.s32 %v110, %v112
  %v114 = vrot.slane %v106, %v113
  %v116 = vunpack.c.l.s4 1966171168
  %v117 = vunpack.c.0.s8 %v116
  %v118 = vlaneseq
  %v119 = vshrl.u32 %v118, 7
  %v120 = vsub.s32 %v117, %v119
  %v121 = vrot.slane %v107, %v120
  %v122 = vcombine.high %v114, %v114
  %v123 = vcombine.low %v91, %v98
  %v124 = vcombine.low %v99, %v114
  %v125 = vcombine.low %v121, %v122
  %v127 = vunpack.c.l.s4 1966171168
  %v128 = vunpack.c.0.s8 %v127
  %v129 = vlaneseq
  %v130 = vshrl.u32 %v129, 7
  %v131 = vsub.s32 %v128, %v130
  %v132 = vrot.slane %v123, %v131
  %v134 = vunpack.c.l.s4 1966171168
  %v135 = vunpack.c.0.s8 %v134
  %v136 = vlaneseq
  %v137 = vshrl.u32 %v136, 7
  %v138 = vsub.s32 %v135, %v137
  %v139 = vrot.slane %v124, %v138
  %v141 = vunpack.c.l.s4 1966171168
  %v142 = vunpack.c.0.s8 %v141
  %v143 = vlaneseq
  %v144 = vshrl.u32 %v143, 7
  %v145 = vsub.s32 %v142, %v144
  %v146 = vrot.slane %v125, %v145
  %v147 = vcombine.low %v132, %v139
  %v149 = vunpack.c.l.s4 1966171168
  %v150 = vunpack.c.0.s8 %v149
  %v151 = vlaneseq
  %v152 = vshrl.u32 %v151, 7
  %v153 = vsub.s32 %v150, %v152
  %v154 = vrot.slane %v147, %v153
  %v156 = vunpack.c.l.s4 1966171168
  %v157 = vunpack.c.0.s8 %v156
  %v158 = vlaneseq
  %v159 = vshrl.u32 %v158, 7
  %v160 = vsub.s32 %v157, %v159
  %v161 = vrot.slane %v146, %v160
  %v162 = vcombine.low %v154, %v161
  %v164 = vpack.c.bf16 %v162, %v162
  %v165 = vld [vmem:[%s53] sm:$0x7]
  %v166 = vld [vmem:[%s53 + $0x4] sm:$0x7]
  %v170 = vunpack.c.l.s4 1966171168
  %v171 = vunpack.c.0.s8 %v170
  %v172 = vlaneseq
  %v173 = vshrl.u32 %v172, 7
  %v174 = vsub.s32 %v171, %v173
  %v175 = vrot.slane %v165, %v174
  %v176 = vcombine.high %v175, %v175
  %v178 = vunpack.c.l.s4 1966171168
  %v179 = vunpack.c.0.s8 %v178
  %v180 = vlaneseq
  %v181 = vshrl.u32 %v180, 7
  %v182 = vsub.s32 %v179, %v181
  %v183 = vrot.slane %v175, %v182
  %v185 = vunpack.c.l.s4 1966171168
  %v186 = vunpack.c.0.s8 %v185
  %v187 = vlaneseq
  %v188 = vshrl.u32 %v187, 7
  %v189 = vsub.s32 %v186, %v188
  %v190 = vrot.slane %v176, %v189
  %v191 = vcombine.high %v183, %v183
  %v193 = vunpack.c.l.s4 1966171168
  %v194 = vunpack.c.0.s8 %v193
  %v195 = vlaneseq
  %v196 = vshrl.u32 %v195, 7
  %v197 = vsub.s32 %v194, %v196
  %v198 = vrot.slane %v166, %v197
  %v199 = vcombine.high %v198, %v198
  %v201 = vunpack.c.l.s4 1966171168
  %v202 = vunpack.c.0.s8 %v201
  %v203 = vlaneseq
  %v204 = vshrl.u32 %v203, 7
  %v205 = vsub.s32 %v202, %v204
  %v206 = vrot.slane %v198, %v205
  %v208 = vunpack.c.l.s4 1966171168
  %v209 = vunpack.c.0.s8 %v208
  %v210 = vlaneseq
  %v211 = vshrl.u32 %v210, 7
  %v212 = vsub.s32 %v209, %v211
  %v213 = vrot.slane %v199, %v212
  %v214 = vcombine.high %v206, %v206
  %v215 = vcombine.low %v183, %v190
  %v216 = vcombine.low %v191, %v206
  %v217 = vcombine.low %v213, %v214
  %v219 = vunpack.c.l.s4 1966171168
  %v220 = vunpack.c.0.s8 %v219
  %v221 = vlaneseq
  %v222 = vshrl.u32 %v221, 7
  %v223 = vsub.s32 %v220, %v222
  %v224 = vrot.slane %v215, %v223
  %v226 = vunpack.c.l.s4 1966171168
  %v227 = vunpack.c.0.s8 %v226
  %v228 = vlaneseq
  %v229 = vshrl.u32 %v228, 7
  %v230 = vsub.s32 %v227, %v229
  %v231 = vrot.slane %v216, %v230
  %v233 = vunpack.c.l.s4 1966171168
  %v234 = vunpack.c.0.s8 %v233
  %v235 = vlaneseq
  %v236 = vshrl.u32 %v235, 7
  %v237 = vsub.s32 %v234, %v236
  %v238 = vrot.slane %v217, %v237
  %v239 = vcombine.low %v224, %v231
  %v241 = vunpack.c.l.s4 1966171168
  %v242 = vunpack.c.0.s8 %v241
  %v243 = vlaneseq
  %v244 = vshrl.u32 %v243, 7
  %v245 = vsub.s32 %v242, %v244
  %v246 = vrot.slane %v239, %v245
  %v248 = vunpack.c.l.s4 1966171168
  %v249 = vunpack.c.0.s8 %v248
  %v250 = vlaneseq
  %v251 = vshrl.u32 %v250, 7
  %v252 = vsub.s32 %v249, %v251
  %v253 = vrot.slane %v238, %v252
  %v254 = vcombine.low %v246, %v253
  %v256 = vpack.c.bf16 %v254, %v254
  %v257 = vld [vmem:[%s2] sm:$0xf]
  %v258 = vld [vmem:[%s2 + $0x4] sm:$0xf]
  %v259 = vld [vmem:[%s2 + $0x8] sm:$0xf]
  %v260 = vld [vmem:[%s2 + $0xc] sm:$0xf]
  %v261 = vld [vmem:[%s4] sm:$0x1]
  %v263 = vlaneseq
  %v264 = vshrl.u32 %v263, 7
  %v265 = vsub.s32 0, %v264
  %v266 = vrot.slane %v261, %v265
  %v272 = vunpack.c.l.b16 %v257
  %v273 = vunpack.c.l.b16 %v258
  %v274 = vunpack.c.l.b16 %v259
  %v275 = vunpack.c.l.b16 %v260
  %v276 = vpack.c.b16 %v273, %v272
  %v277 = vpack.c.b16 %v275, %v274
  %vm280 = vcmask 261120
  %v282 = vsel %vm280, %v164, 0
  %284 = vmatprep.subr.bf16.mxu0 0
  %285 = vmatpush1.bf16.msra.mxu0 %v276
  %286 = vmatprep.subr.bf16.mxu0 0
  %287 = vmatpush1.bf16.msra.mxu0 %v277
  %288 = vmatprep.subr.bf16.mxu0 0
  %289 = vmatpush1.bf16.msra.mxu0 0
  %290 = vmatprep.subr.bf16.mxu0 0
  %291 = vmatpush1.bf16.msra.mxu0 0
  %292 = vmatprep.subr.bf16.mxu0 0
  %293 = vmatpush1.bf16.msra.mxu0 0
  %294 = vmatprep.subr.bf16.mxu0 0
  %295 = vmatpush1.bf16.msra.mxu0 0
  %296 = vmatprep.subr.bf16.mxu0 0
  %297 = vmatpush1.bf16.msra.mxu0 0
  %298 = vmatprep.subr.bf16.mxu0 0
  %299 = vmatpush1.bf16.msra.mxu0 0
  %300 = vmatprep.subr.bf16.mxu0 0
  %301 = vmatpush1.bf16.msra.mxu0 0
  %302 = vmatprep.subr.bf16.mxu0 0
  %303 = vmatpush1.bf16.msra.mxu0 0
  %304 = vmatprep.subr.bf16.mxu0 0
  %305 = vmatpush1.bf16.msra.mxu0 0
  %306 = vmatprep.subr.bf16.mxu0 0
  %307 = vmatpush1.bf16.msra.mxu0 0
  %308 = vmatprep.subr.bf16.mxu0 0
  %309 = vmatpush1.bf16.msra.mxu0 0
  %310 = vmatprep.subr.bf16.mxu0 0
  %311 = vmatpush1.bf16.msra.mxu0 0
  %312 = vmatprep.subr.bf16.mxu0 0
  %313 = vmatpush1.bf16.msra.mxu0 0
  %314 = vmatprep.subr.bf16.mxu0 0
  %315 = vmatpush1.bf16.msra.mxu0 0
  %316 = vmatprep.mubr.bf16.mxu0 0
  %317 = vmatmul.mubr.bf16.gmra.mrb[0].mxu0 %v282
  %v318 = vpop.f32.mrb[0].mxu0
  %v319 = vadd.f32 %v266, %v318
  %v320 = vpop.f32.mrb[0].mxu0
  %v321 = vpop.f32.mrb[0].mxu0
  %v322 = vpop.f32.mrb[0].mxu0
  %323 = vdwg.mxu0
  %v325 = vcombine.high %v319, %v319
  %v327 = vunpack.c.l.s4 1966171168
  %v328 = vunpack.c.0.s8 %v327
  %v329 = vlaneseq
  %v330 = vshrl.u32 %v329, 7
  %v331 = vsub.s32 %v328, %v330
  %v332 = vrot.slane %v319, %v331
  %v334 = vunpack.c.l.s4 1966171168
  %v335 = vunpack.c.0.s8 %v334
  %v336 = vlaneseq
  %v337 = vshrl.u32 %v336, 7
  %v338 = vsub.s32 %v335, %v337
  %v339 = vrot.slane %v325, %v338
  %v340 = vcombine.high %v332, %v332
  %v341 = vcombine.high %v339, %v339
  %v343 = vunpack.c.l.s4 1966171168
  %v344 = vunpack.c.0.s8 %v343
  %v345 = vlaneseq
  %v346 = vshrl.u32 %v345, 7
  %v347 = vsub.s32 %v344, %v346
  %v348 = vrot.slane %v332, %v347
  %v350 = vunpack.c.l.s4 1966171168
  %v351 = vunpack.c.0.s8 %v350
  %v352 = vlaneseq
  %v353 = vshrl.u32 %v352, 7
  %v354 = vsub.s32 %v351, %v353
  %v355 = vrot.slane %v339, %v354
  %v357 = vunpack.c.l.s4 1966171168
  %v358 = vunpack.c.0.s8 %v357
  %v359 = vlaneseq
  %v360 = vshrl.u32 %v359, 7
  %v361 = vsub.s32 %v358, %v360
  %v362 = vrot.slane %v340, %v361
  %v364 = vunpack.c.l.s4 1966171168
  %v365 = vunpack.c.0.s8 %v364
  %v366 = vlaneseq
  %v367 = vshrl.u32 %v366, 7
  %v368 = vsub.s32 %v365, %v367
  %v369 = vrot.slane %v341, %v368
  %v370 = vcombine.high %v348, %v348
  %v371 = vcombine.high %v362, %v362
  %v372 = vcombine.low %v348, %v362
  %v374 = vunpack.c.l.s4 1966171168
  %v375 = vunpack.c.0.s8 %v374
  %v376 = vlaneseq
  %v377 = vshrl.u32 %v376, 7
  %v378 = vsub.s32 %v375, %v377
  %v379 = vrot.slane %v372, %v378
  %v381 = vunpack.c.l.s4 1966171168
  %v382 = vunpack.c.0.s8 %v381
  %v383 = vlaneseq
  %v384 = vshrl.u32 %v383, 7
  %v385 = vsub.s32 %v382, %v384
  %v386 = vrot.slane %v370, %v385
  %v387 = vcombine.low %v379, %v386
  %v389 = vunpack.c.l.s4 1966171168
  %v390 = vunpack.c.0.s8 %v389
  %v391 = vlaneseq
  %v392 = vshrl.u32 %v391, 7
  %v393 = vsub.s32 %v390, %v392
  %v394 = vrot.slane %v387, %v393
  %v395 = vcombine.low %v371, %v355
  %v397 = vunpack.c.l.s4 1966171168
  %v398 = vunpack.c.0.s8 %v397
  %v399 = vlaneseq
  %v400 = vshrl.u32 %v399, 7
  %v401 = vsub.s32 %v398, %v400
  %v402 = vrot.slane %v395, %v401
  %v404 = vunpack.c.l.s4 1966171168
  %v405 = vunpack.c.0.s8 %v404
  %v406 = vlaneseq
  %v407 = vshrl.u32 %v406, 7
  %v408 = vsub.s32 %v405, %v407
  %v409 = vrot.slane %v369, %v408
  %v410 = vcombine.low %v402, %v409
  %v412 = vunpack.c.l.s4 1966171168
  %v413 = vunpack.c.0.s8 %v412
  %v414 = vlaneseq
  %v415 = vshrl.u32 %v414, 7
  %v416 = vsub.s32 %v413, %v415
  %v417 = vrot.slane %v410, %v416
  %vm420 = vcmask 518144
  %421 = vst.msk [vmem:[#allocation4] sm:$0x7] %vm420, %v394
  %422 = vst.msk [vmem:[#allocation4 + $0x4] sm:$0x7] %vm420, %v417
  %v423 = vld [vmem:[%s3] sm:$0xf]
  %v424 = vld [vmem:[%s3 + $0x4] sm:$0xf]
  %v425 = vld [vmem:[%s3 + $0x8] sm:$0xf]
  %v426 = vld [vmem:[%s3 + $0xc] sm:$0xf]
  %v427 = vld [vmem:[%s5] sm:$0x1]
  %v429 = vlaneseq
  %v430 = vshrl.u32 %v429, 7
  %v431 = vsub.s32 0, %v430
  %v432 = vrot.slane %v427, %v431
  %v438 = vunpack.c.l.b16 %v423
  %v439 = vunpack.c.l.b16 %v424
  %v440 = vunpack.c.l.b16 %v425
  %v441 = vunpack.c.l.b16 %v426
  %v442 = vpack.c.b16 %v439, %v438
  %v443 = vpack.c.b16 %v441, %v440
  %v447 = vsel %vm280, %v256, 0
  %449 = vmatprep.subr.bf16.mxu0 0
  %450 = vmatpush1.bf16.msra.mxu0 %v442
  %451 = vmatprep.subr.bf16.mxu0 0
  %452 = vmatpush1.bf16.msra.mxu0 %v443
  %453 = vmatprep.subr.bf16.mxu0 0
  %454 = vmatpush1.bf16.msra.mxu0 0
  %455 = vmatprep.subr.bf16.mxu0 0
  %456 = vmatpush1.bf16.msra.mxu0 0
  %457 = vmatprep.subr.bf16.mxu0 0
  %458 = vmatpush1.bf16.msra.mxu0 0
  %459 = vmatprep.subr.bf16.mxu0 0
  %460 = vmatpush1.bf16.msra.mxu0 0
  %461 = vmatprep.subr.bf16.mxu0 0
  %462 = vmatpush1.bf16.msra.mxu0 0
  %463 = vmatprep.subr.bf16.mxu0 0
  %464 = vmatpush1.bf16.msra.mxu0 0
  %465 = vmatprep.subr.bf16.mxu0 0
  %466 = vmatpush1.bf16.msra.mxu0 0
  %467 = vmatprep.subr.bf16.mxu0 0
  %468 = vmatpush1.bf16.msra.mxu0 0
  %469 = vmatprep.subr.bf16.mxu0 0
  %470 = vmatpush1.bf16.msra.mxu0 0
  %471 = vmatprep.subr.bf16.mxu0 0
  %472 = vmatpush1.bf16.msra.mxu0 0
  %473 = vmatprep.subr.bf16.mxu0 0
  %474 = vmatpush1.bf16.msra.mxu0 0
  %475 = vmatprep.subr.bf16.mxu0 0
  %476 = vmatpush1.bf16.msra.mxu0 0
  %477 = vmatprep.subr.bf16.mxu0 0
  %478 = vmatpush1.bf16.msra.mxu0 0
  %479 = vmatprep.subr.bf16.mxu0 0
  %480 = vmatpush1.bf16.msra.mxu0 0
  %481 = vmatprep.mubr.bf16.mxu0 0
  %482 = vmatmul.mubr.bf16.gmra.mrb[0].mxu0 %v447
  %v483 = vpop.f32.mrb[0].mxu0
  %v484 = vadd.f32 %v432, %v483
  %v485 = vpop.f32.mrb[0].mxu0
  %v486 = vpop.f32.mrb[0].mxu0
  %v487 = vpop.f32.mrb[0].mxu0
  %488 = vdwg.mxu0
  %v490 = vcombine.high %v484, %v484
  %v492 = vunpack.c.l.s4 1966171168
  %v493 = vunpack.c.0.s8 %v492
  %v494 = vlaneseq
  %v495 = vshrl.u32 %v494, 7
  %v496 = vsub.s32 %v493, %v495
  %v497 = vrot.slane %v484, %v496
  %v499 = vunpack.c.l.s4 1966171168
  %v500 = vunpack.c.0.s8 %v499
  %v501 = vlaneseq
  %v502 = vshrl.u32 %v501, 7
  %v503 = vsub.s32 %v500, %v502
  %v504 = vrot.slane %v490, %v503
  %v505 = vcombine.high %v497, %v497
  %v506 = vcombine.high %v504, %v504
  %v508 = vunpack.c.l.s4 1966171168
  %v509 = vunpack.c.0.s8 %v508
  %v510 = vlaneseq
  %v511 = vshrl.u32 %v510, 7
  %v512 = vsub.s32 %v509, %v511
  %v513 = vrot.slane %v497, %v512
  %v515 = vunpack.c.l.s4 1966171168
  %v516 = vunpack.c.0.s8 %v515
  %v517 = vlaneseq
  %v518 = vshrl.u32 %v517, 7
  %v519 = vsub.s32 %v516, %v518
  %v520 = vrot.slane %v504, %v519
  %v522 = vunpack.c.l.s4 1966171168
  %v523 = vunpack.c.0.s8 %v522
  %v524 = vlaneseq
  %v525 = vshrl.u32 %v524, 7
  %v526 = vsub.s32 %v523, %v525
  %v527 = vrot.slane %v505, %v526
  %v529 = vunpack.c.l.s4 1966171168
  %v530 = vunpack.c.0.s8 %v529
  %v531 = vlaneseq
  %v532 = vshrl.u32 %v531, 7
  %v533 = vsub.s32 %v530, %v532
  %v534 = vrot.slane %v506, %v533
  %v535 = vcombine.high %v513, %v513
  %v536 = vcombine.high %v527, %v527
  %v537 = vcombine.low %v513, %v527
  %v539 = vunpack.c.l.s4 1966171168
  %v540 = vunpack.c.0.s8 %v539
  %v541 = vlaneseq
  %v542 = vshrl.u32 %v541, 7
  %v543 = vsub.s32 %v540, %v542
  %v544 = vrot.slane %v537, %v543
  %v546 = vunpack.c.l.s4 1966171168
  %v547 = vunpack.c.0.s8 %v546
  %v548 = vlaneseq
  %v549 = vshrl.u32 %v548, 7
  %v550 = vsub.s32 %v547, %v549
  %v551 = vrot.slane %v535, %v550
  %v552 = vcombine.low %v544, %v551
  %v554 = vunpack.c.l.s4 1966171168
  %v555 = vunpack.c.0.s8 %v554
  %v556 = vlaneseq
  %v557 = vshrl.u32 %v556, 7
  %v558 = vsub.s32 %v555, %v557
  %v559 = vrot.slane %v552, %v558
  %v560 = vcombine.low %v536, %v520
  %v562 = vunpack.c.l.s4 1966171168
  %v563 = vunpack.c.0.s8 %v562
  %v564 = vlaneseq
  %v565 = vshrl.u32 %v564, 7
  %v566 = vsub.s32 %v563, %v565
  %v567 = vrot.slane %v560, %v566
  %v569 = vunpack.c.l.s4 1966171168
  %v570 = vunpack.c.0.s8 %v569
  %v571 = vlaneseq
  %v572 = vshrl.u32 %v571, 7
  %v573 = vsub.s32 %v570, %v572
  %v574 = vrot.slane %v534, %v573
  %v575 = vcombine.low %v567, %v574
  %v577 = vunpack.c.l.s4 1966171168
  %v578 = vunpack.c.0.s8 %v577
  %v579 = vlaneseq
  %v580 = vshrl.u32 %v579, 7
  %v581 = vsub.s32 %v578, %v580
  %v582 = vrot.slane %v575, %v581
  %585 = vst.msk [vmem:[#allocation5] sm:$0x7] %vm420, %v559
  %586 = vst.msk [vmem:[#allocation5 + $0x4] sm:$0x7] %vm420, %v582
  %v587 = vld [vmem:[%s6] sm:$0xf]
  %v588 = vld [vmem:[%s6 + $0x4] sm:$0xf]
  %v589 = vld [vmem:[%s6 + $0x8] sm:$0xf]
  %v590 = vld [vmem:[%s6 + $0xc] sm:$0xf]
  %v591 = vld [vmem:[#allocation2] sm:$0x3f]
  %v592 = vpack.c.bf16 %v591, %v591
  %v597 = vunpack.c.l.b16 %v587
  %v598 = vunpack.c.l.b16 %v588
  %v599 = vunpack.c.l.b16 %v589
  %v600 = vunpack.c.l.b16 %v590
  %v601 = vpack.c.b16 %v598, %v597
  %v602 = vpack.c.b16 %v600, %v599
  %v606 = vsel %vm280, %v592, 0
  %608 = vmatprep.subr.bf16.mxu0 0
  %609 = vmatpush1.bf16.msra.mxu0 %v601
  %610 = vmatprep.subr.bf16.mxu0 0
  %611 = vmatpush1.bf16.msra.mxu0 %v602
  %612 = vmatprep.subr.bf16.mxu0 0
  %613 = vmatpush1.bf16.msra.mxu0 0
  %614 = vmatprep.subr.bf16.mxu0 0
  %615 = vmatpush1.bf16.msra.mxu0 0
  %616 = vmatprep.subr.bf16.mxu0 0
  %617 = vmatpush1.bf16.msra.mxu0 0
  %618 = vmatprep.subr.bf16.mxu0 0
  %619 = vmatpush1.bf16.msra.mxu0 0
  %620 = vmatprep.subr.bf16.mxu0 0
  %621 = vmatpush1.bf16.msra.mxu0 0
  %622 = vmatprep.subr.bf16.mxu0 0
  %623 = vmatpush1.bf16.msra.mxu0 0
  %624 = vmatprep.subr.bf16.mxu0 0
  %625 = vmatpush1.bf16.msra.mxu0 0
  %626 = vmatprep.subr.bf16.mxu0 0
  %627 = vmatpush1.bf16.msra.mxu0 0
  %628 = vmatprep.subr.bf16.mxu0 0
  %629 = vmatpush1.bf16.msra.mxu0 0
  %630 = vmatprep.subr.bf16.mxu0 0
  %631 = vmatpush1.bf16.msra.mxu0 0
  %632 = vmatprep.subr.bf16.mxu0 0
  %633 = vmatpush1.bf16.msra.mxu0 0
  %634 = vmatprep.subr.bf16.mxu0 0
  %635 = vmatpush1.bf16.msra.mxu0 0
  %636 = vmatprep.subr.bf16.mxu0 0
  %637 = vmatpush1.bf16.msra.mxu0 0
  %638 = vmatprep.subr.bf16.mxu0 0
  %639 = vmatpush1.bf16.msra.mxu0 0
  %640 = vmatprep.mubr.bf16.mxu0 0
  %641 = vmatmul.mubr.bf16.gmra.mrb[0].mxu0 %v606
  %v642 = vpop.f32.mrb[0].mxu0
  %v643 = vadd.f32 0.0, %v642
  %v644 = vpop.f32.mrb[0].mxu0
  %v645 = vpop.f32.mrb[0].mxu0
  %v646 = vpop.f32.mrb[0].mxu0
  %647 = vdwg.mxu0
  %v648 = vld [vmem:[#allocation4] sm:$0x7]
  %s649 = scalar_lea.vmem [#allocation5], 4
  %v650 = vld [vmem:[%s649] sm:$0x7]
  %v652 = vrot.slane %v650, 5
  %vm654 = vcmask 1042432
  %v655 = vsel %vm654, %v648, %v652
  %v656 = vadd.f32 %v655, %v643
  %v657 = vxor.u32 %v656, 2147483648
  %v658 = vmul.f32 %v657, 1.442695
  %v659 = vpow.pop %v658
  %v660 = vadd.f32 %v659, 1.0
  %v661 = vrcp.pop %v660
  %v662 = vmul.f32 1.0, %v661
  %v663 = vtanh.pop %v656
  %v664 = vld [vmem:[#allocation3] sm:$0x3f]
  %666 = vrot.lane.b32.xlu0 %v664, 16
  %v667 = vpop.permute.xlu0 %666
  %v669 = vmul.f32 %v662, %v667
  %671 = vrot.lane.b32.xlu0 %v663, 96
  %v672 = vpop.permute.xlu0 %671
  %v674 = vmul.f32 %v662, %v672
  %676 = vrot.lane.b32.xlu0 %v674, 16
  %v677 = vpop.permute.xlu0 %676
  %v679 = vadd.f32 %v669, %v677
  %v680 = vtanh.pop %v679
  %682 = vrot.lane.b32.xlu0 %v680, 32
  %v683 = vpop.permute.xlu0 %682
  %v685 = vmul.f32 %v662, %v683
  %687 = vrot.lane.b32.xlu0 %v679, 112
  %v688 = vpop.permute.xlu0 %687
  %vm690 = vcmask 128000
  %691 = vst.msk [vmem:[#allocation3] sm:$0x3f] %vm690, %v688
  %693 = vrot.lane.b32.xlu0 %v685, 80
  %v694 = vpop.permute.xlu0 %693
  %vm696 = vcmask 124928
  %697 = vst.msk [vmem:[#allocation2] sm:$0x7] %vm696, %v694
  %698 = vrot.lane.b32.xlu0 %v685, 96
  %v699 = vpop.permute.xlu0 %698
  %vm701 = vcmask 259203
  %702 = vst.msk [vmem:[#allocation2] sm:$0x38] %vm701, %v699
  %703 = vst.msk [vmem:[%s7] sm:$0x7] %vm696, %v694
  %s704 = scalar_lea.vmem %s61, 4
  %vm705 = vcmask 128003
  %706 = vst.msk [vmem:[%s704 - $0x3] sm:$0x38] %vm705, %v694
  %v707 = vld [vmem:[#allocation2] sm:$0x3f]
  %v708 = vpack.c.bf16 %v707, %v707
  %v710 = vsel %vm280, %v708, 0
  %712 = vmatprep.subr.bf16.mxu0 0
  %713 = vmatpush1.bf16.msra.mxu0 %v601
  %714 = vmatprep.subr.bf16.mxu0 0
  %715 = vmatpush1.bf16.msra.mxu0 %v602
  %716 = vmatprep.subr.bf16.mxu0 0
  %717 = vmatpush1.bf16.msra.mxu0 0
  %718 = vmatprep.subr.bf16.mxu0 0
  %719 = vmatpush1.bf16.msra.mxu0 0
  %720 = vmatprep.subr.bf16.mxu0 0
  %721 = vmatpush1.bf16.msra.mxu0 0
  %722 = vmatprep.subr.bf16.mxu0 0
  %723 = vmatpush1.bf16.msra.mxu0 0
  %724 = vmatprep.subr.bf16.mxu0 0
  %725 = vmatpush1.bf16.msra.mxu0 0
  %726 = vmatprep.subr.bf16.mxu0 0
  %727 = vmatpush1.bf16.msra.mxu0 0
  %728 = vmatprep.subr.bf16.mxu0 0
  %729 = vmatpush1.bf16.msra.mxu0 0
  %730 = vmatprep.subr.bf16.mxu0 0
  %731 = vmatpush1.bf16.msra.mxu0 0
  %732 = vmatprep.subr.bf16.mxu0 0
  %733 = vmatpush1.bf16.msra.mxu0 0
  %734 = vmatprep.subr.bf16.mxu0 0
  %735 = vmatpush1.bf16.msra.mxu0 0
  %736 = vmatprep.subr.bf16.mxu0 0
  %737 = vmatpush1.bf16.msra.mxu0 0
  %738 = vmatprep.subr.bf16.mxu0 0
  %739 = vmatpush1.bf16.msra.mxu0 0
  %740 = vmatprep.subr.bf16.mxu0 0
  %741 = vmatpush1.bf16.msra.mxu0 0
  %742 = vmatprep.subr.bf16.mxu0 0
  %743 = vmatpush1.bf16.msra.mxu0 0
  %744 = vmatprep.mubr.bf16.mxu0 0
  %745 = vmatmul.mubr.bf16.gmra.mrb[0].mxu0 %v710
  %v746 = vpop.f32.mrb[0].mxu0
  %v747 = vadd.f32 0.0, %v746
  %v748 = vpop.f32.mrb[0].mxu0
  %v749 = vpop.f32.mrb[0].mxu0
  %v750 = vpop.f32.mrb[0].mxu0
  %751 = vdwg.mxu0
  %s752 = scalar_lea.vmem [#allocation4], 4
  %v753 = vld [vmem:[%s752] sm:$0x7]
  %v754 = vld [vmem:[#allocation5] sm:$0x7]
  %v756 = vrot.slane %v754, 5
  %v758 = vsel %vm654, %v753, %v756
  %v759 = vadd.f32 %v758, %v747
  %v760 = vxor.u32 %v759, 2147483648
  %v761 = vmul.f32 %v760, 1.442695
  %v762 = vpow.pop %v761
  %v763 = vadd.f32 %v762, 1.0
  %v764 = vrcp.pop %v763
  %v765 = vmul.f32 1.0, %v764
  %v766 = vtanh.pop %v759
  %v767 = vld [vmem:[#allocation3] sm:$0x3f]
  %769 = vrot.lane.b32.xlu0 %v767, 16
  %v770 = vpop.permute.xlu0 %769
  %v772 = vmul.f32 %v765, %v770
  %774 = vrot.lane.b32.xlu0 %v766, 96
  %v775 = vpop.permute.xlu0 %774
  %v777 = vmul.f32 %v765, %v775
  %779 = vrot.lane.b32.xlu0 %v777, 16
  %v780 = vpop.permute.xlu0 %779
  %v782 = vadd.f32 %v772, %v780
  %v783 = vtanh.pop %v782
  %785 = vrot.lane.b32.xlu0 %v783, 32
  %v786 = vpop.permute.xlu0 %785
  %v788 = vmul.f32 %v765, %v786
  %790 = vrot.lane.b32.xlu0 %v782, 112
  %v791 = vpop.permute.xlu0 %790
  %793 = vst.msk [vmem:[#allocation3] sm:$0x3f] %vm690, %v791
  %795 = vrot.lane.b32.xlu0 %v788, 80
  %v796 = vpop.permute.xlu0 %795
  %798 = vst.msk [vmem:[#allocation2] sm:$0x7] %vm696, %v796
  %799 = vrot.lane.b32.xlu0 %v788, 96
  %v800 = vpop.permute.xlu0 %799
  %802 = vst.msk [vmem:[#allocation2] sm:$0x38] %vm701, %v800
  %s803 = scalar_lea.vmem %s7, 4
  %804 = vst.msk [vmem:[%s803] sm:$0x7] %vm696, %v796
  %805 = vst.msk [vmem:[%s61 - $0x3] sm:$0x38] %vm705, %v796
  %s806 = ssub.s32 0, 0
  %s807 = smul.u32 2, %s806
  %p808 = scmp.lt.s32.totalorder %s807, 1
  %s809 = scalar_select %p808, %s807, 1
  %s810 = smul.addr %s809, 4
  %s811 = scalar_lea.vmem %s8, %s810
  // Predicated region
  $region34: #{han_forward.6} parent=0 // pred_check
    _
  $region35: #{han_forward.6} parent=0 // pred_check_branch
    %813 = sbr.rel (0) target = $region37
  $region36: #{han_forward.6} parent=0 // pred_region
    _
  $region37: #{han_forward.6} parent=0 // pred_fallthru
    _
  // Predicated region
  $region38: #{han_forward.6} parent=0 // pred_check
    _
  $region39: #{han_forward.6} parent=0 // pred_check_branch
    %815 = sbr.rel (0) target = $region41
  $region40: #{han_forward.6} parent=0 // pred_region
    %s816 = ssub.s32 0, 0
    %s817 = smul.u32 2, %s816
  $region41: #{han_forward.6} parent=0 // pred_fallthru
    _
  // Predicated region
  $region42: #{han_forward.6} parent=0 // pred_check
    _
  $region43: #{han_forward.6} parent=0 // pred_check_branch
    %819 = sbr.rel (0) target = $region45
  $region44: #{han_forward.6} parent=0 // pred_region
    _
  $region45: #{han_forward.6} parent=0 // pred_fallthru
    _
  // Predicated region
  $region46: #{han_forward.6} parent=0 // pred_check
    _
  $region47: #{han_forward.6} parent=0 // pred_check_branch
    %821 = sbr.rel (0) target = $region49
  $region48: #{han_forward.6} parent=0 // pred_region
    %s822 = ssub.s32 0, 0
    %s823 = smul.u32 2, %s822
    %p824 = scmp.lt.s32.totalorder %s823, 1
    %s825 = scalar_select %p824, %s823, 1
    %s826 = smul.addr %s825, 4
    %s827 = scalar_lea.vmem %s8, %s826
  $region49: #{han_forward.6} parent=0 // pred_fallthru
    _

// kernel: han_forward.4
$region0: #{han_forward.4}
  #allocation0 [shape = 'u32[]', space=smem, size = 0x4, offset = 0x4, fixed_abs, tag = 'smem constant byte address 0x4 - core index']
  #allocation1 [shape = 'u32[144,128]{1,0:T(1,128)}', space=vmem, size = 0x12000, scoped, tag = 'internal scratch']
  #allocation2 [shape = 'f32[16,32]{1,0:T(8,128)}', space=vmem, size = 0x2000, scoped, tag = 'scratch operand']
  #allocation3 [shape = 'f32[16,16]{1,0:T(8,128)}', space=vmem, size = 0x2000, scoped, tag = 'scratch operand']
  #allocation4 [shape = 'f32[6,8,64]{2,1,0:T(8,128)}', space=vmem, size = 0x6000, scoped, tag = 'scratch operand']
  #allocation5 [shape = 'f32[6,8,64]{2,1,0:T(8,128)}', space=vmem, size = 0x6000, scoped, tag = 'scratch operand']
  %s0 = inlined_call_operand.vmem [shape: f32[6,8,16], index: 0, kind: input, shape index: {}, may-alias: {0,1}]
  %s1 = inlined_call_operand.vmem [shape: f32[6,8,16], index: 1, kind: input, shape index: {}, may-alias: {0,1}]
  %s2 = inlined_call_operand.vmem [shape: bf16[16,64], index: 2, kind: input, shape index: {}]
  %s3 = inlined_call_operand.vmem [shape: bf16[16,64], index: 3, kind: input, shape index: {}]
  %s4 = inlined_call_operand.vmem [shape: f32[1,64], index: 4, kind: input, shape index: {}]
  %s5 = inlined_call_operand.vmem [shape: f32[1,64], index: 5, kind: input, shape index: {}]
  %s6 = inlined_call_operand.vmem [shape: bf16[32,64], index: 6, kind: input, shape index: {}]
  %s7 = inlined_call_operand.vmem [shape: f32[6,8,16], index: 7, kind: output, shape index: {0}]
  %s8 = inlined_call_operand.vmem [shape: f32[6,8,16], index: 8, kind: output, shape index: {1}]
  %9 = xla_tuple %s7, %s8
  %s10 = sld [smem:[#allocation0]]
  $region50: #{han_forward.4} parent=0
    _
  %s12 = ssub.s32 1, %s10
  %s13 = scalar_select 0, %s12, %s10
  // Predicated region
  $region2: #{han_forward.4} parent=0 // pred_check
    _
  $region3: #{han_forward.4} parent=0 // pred_check_branch
    %15 = sbr.rel (0) target = $region5
  $region4: #{han_forward.4} parent=0 // pred_region
    _
  $region5: #{han_forward.4} parent=0 // pred_fallthru
    _
  // Predicated region
  $region6: #{han_forward.4} parent=0 // pred_check
    _
  $region7: #{han_forward.4} parent=0 // pred_check_branch
    %17 = sbr.rel (0) target = $region9
  $region8: #{han_forward.4} parent=0 // pred_region
    %s18 = ssub.s32 0, 0
    %s19 = smul.u32 6, %s18
    %p20 = scmp.lt.s32.totalorder %s19, 5
    %s21 = scalar_select %p20, %s19, 5
    %s22 = smul.addr %s21, 8
    %s23 = scalar_lea.vmem %s1, %s22
    %s24 = ssub.s32 0, 0
    %s25 = smul.u32 6, %s24
  $region9: #{han_forward.4} parent=0 // pred_fallthru
    _
  // Predicated region
  $region10: #{han_forward.4} parent=0 // pred_check
    _
  $region11: #{han_forward.4} parent=0 // pred_check_branch
    %27 = sbr.rel (0) target = $region13
  $region12: #{han_forward.4} parent=0 // pred_region
    _
  $region13: #{han_forward.4} parent=0 // pred_fallthru
    _
  // Predicated region
  $region14: #{han_forward.4} parent=0 // pred_check
    _
  $region15: #{han_forward.4} parent=0 // pred_check_branch
    %29 = sbr.rel (0) target = $region17
  $region16: #{han_forward.4} parent=0 // pred_region
    _
  $region17: #{han_forward.4} parent=0 // pred_fallthru
    _
  // Predicated region
  $region18: #{han_forward.4} parent=0 // pred_check
    _
  $region19: #{han_forward.4} parent=0 // pred_check_branch
    %31 = sbr.rel (0) target = $region21
  $region20: #{han_forward.4} parent=0 // pred_region
    _
  $region21: #{han_forward.4} parent=0 // pred_fallthru
    _
  // Predicated region
  $region22: #{han_forward.4} parent=0 // pred_check
    _
  $region23: #{han_forward.4} parent=0 // pred_check_branch
    %33 = sbr.rel (0) target = $region25
  $region24: #{han_forward.4} parent=0 // pred_region
    _
  $region25: #{han_forward.4} parent=0 // pred_fallthru
    _
  // Predicated region
  $region26: #{han_forward.4} parent=0 // pred_check
    _
  $region27: #{han_forward.4} parent=0 // pred_check_branch
    %35 = sbr.rel (0) target = $region29
  $region28: #{han_forward.4} parent=0 // pred_region
    _
  $region29: #{han_forward.4} parent=0 // pred_fallthru
    _
  %s36 = ssub.s32 0, 0
  %s37 = smul.u32 6, %s36
  %p38 = scmp.lt.s32.totalorder %s37, 5
  %s39 = scalar_select %p38, %s37, 5
  %s40 = smul.addr %s39, 8
  %s41 = scalar_lea.vmem %s1, %s40
  %s42 = ssub.s32 0, 0
  %s43 = smul.u32 6, %s42
  %p44 = scmp.lt.s32.totalorder %s43, 5
  %s45 = scalar_select %p44, %s43, 5
  %s46 = smul.addr %s45, 8
  %s47 = scalar_lea.vmem %s8, %s46
  %s48 = ssub.s32 0, 0
  %s49 = smul.u32 6, %s48
  %p50 = scmp.lt.s32.totalorder %s49, 5
  %s51 = scalar_select %p50, %s49, 5
  %s52 = smul.addr %s51, 8
  %s53 = scalar_lea.vmem %s1, %s52
  %s54 = ssub.s32 0, 0
  %s55 = smul.u32 6, %s54
  %s56 = ssub.s32 0, 0
  %s57 = smul.u32 6, %s56
  %p58 = scmp.lt.s32.totalorder %s57, 5
  %s59 = scalar_select %p58, %s57, 5
  %s60 = smul.addr %s59, 8
  %s61 = scalar_lea.vmem %s8, %s60
  %s62 = ssub.s32 0, 0
  %s63 = smul.u32 6, %s62
  %p65 = scmp.eq.s32.totalorder 0, 0
  // Predicated region
  $region30: #{han_forward.4} parent=0 // pred_check
    %p66 = pneg %p65
  $region31: #{han_forward.4} parent=0 // pred_check_branch
    %68 = sbr.rel (%p66) target = $region33
  $region32: #{han_forward.4} parent=0 // pred_region
    %vm69 = vcmask 261120
    %70 = vst.msk [vmem:[#allocation2] sm:$0xff] %vm69, 0.0
    %71 = vst.msk [vmem:[#allocation2 + $0x8] sm:$0xff] %vm69, 0.0
    %vm72 = vcmask 130048
    %73 = vst.msk [vmem:[#allocation3] sm:$0xff] %vm72, 0.0
    %74 = vst.msk [vmem:[#allocation3 + $0x8] sm:$0xff] %vm72, 0.0
  $region33: #{han_forward.4} parent=0 // pred_fallthru
    _
  %v75 = vld [vmem:[%s0] sm:$0xff]
  %v76 = vld [vmem:[%s0 + $0x8] sm:$0xff]
  %v77 = vld [vmem:[%s0 + $0x10] sm:$0xff]
  %v78 = vld [vmem:[%s0 + $0x18] sm:$0xff]
  %v79 = vld [vmem:[%s0 + $0x20] sm:$0xff]
  %v80 = vld [vmem:[%s0 + $0x28] sm:$0xff]
  %v81 = vpack.c.bf16 %v76, %v75
  %v82 = vpack.c.bf16 %v78, %v77
  %v83 = vpack.c.bf16 %v80, %v79
  %v84 = vld [vmem:[%s53] sm:$0xff]
  %v85 = vld [vmem:[%s53 + $0x8] sm:$0xff]
  %v86 = vld [vmem:[%s53 + $0x10] sm:$0xff]
  %v87 = vld [vmem:[%s53 + $0x18] sm:$0xff]
  %v88 = vld [vmem:[%s53 + $0x20] sm:$0xff]
  %v89 = vld [vmem:[%s53 + $0x28] sm:$0xff]
  %v90 = vpack.c.bf16 %v85, %v84
  %v91 = vpack.c.bf16 %v87, %v86
  %v92 = vpack.c.bf16 %v89, %v88
  %v93 = vld [vmem:[%s2] sm:$0xf]
  %v94 = vld [vmem:[%s2 + $0x4] sm:$0xf]
  %v95 = vld [vmem:[%s4] sm:$0x1]
  %v97 = vlaneseq
  %v98 = vshrl.u32 %v97, 7
  %v99 = vsub.s32 0, %v98
  %v100 = vrot.slane %v95, %v99
  %v104 = vunpack.c.l.b16 %v93
  %v105 = vunpack.c.l.b16 %v94
  %v106 = vpack.c.b16 %v105, %v104
  %vm108 = vcmask 130048
  %v110 = vsel %vm108, %v81, 0
  %v113 = vsel %vm108, %v82, 0
  %v116 = vsel %vm108, %v83, 0
  %118 = vmatprep.subr.bf16.mxu0 0
  %119 = vmatpush1.bf16.msra.mxu0 %v106
  %120 = vmatprep.subr.bf16.mxu0 0
  %121 = vmatpush1.bf16.msra.mxu0 0
  %122 = vmatprep.subr.bf16.mxu0 0
  %123 = vmatpush1.bf16.msra.mxu0 0
  %124 = vmatprep.subr.bf16.mxu0 0
  %125 = vmatpush1.bf16.msra.mxu0 0
  %126 = vmatprep.subr.bf16.mxu0 0
  %127 = vmatpush1.bf16.msra.mxu0 0
  %128 = vmatprep.subr.bf16.mxu0 0
  %129 = vmatpush1.bf16.msra.mxu0 0
  %130 = vmatprep.subr.bf16.mxu0 0
  %131 = vmatpush1.bf16.msra.mxu0 0
  %132 = vmatprep.subr.bf16.mxu0 0
  %133 = vmatpush1.bf16.msra.mxu0 0
  %134 = vmatprep.subr.bf16.mxu0 0
  %135 = vmatpush1.bf16.msra.mxu0 0
  %136 = vmatprep.subr.bf16.mxu0 0
  %137 = vmatpush1.bf16.msra.mxu0 0
  %138 = vmatprep.subr.bf16.mxu0 0
  %139 = vmatpush1.bf16.msra.mxu0 0
  %140 = vmatprep.subr.bf16.mxu0 0
  %141 = vmatpush1.bf16.msra.mxu0 0
  %142 = vmatprep.subr.bf16.mxu0 0
  %143 = vmatpush1.bf16.msra.mxu0 0
  %144 = vmatprep.subr.bf16.mxu0 0
  %145 = vmatpush1.bf16.msra.mxu0 0
  %146 = vmatprep.subr.bf16.mxu0 0
  %147 = vmatpush1.bf16.msra.mxu0 0
  %148 = vmatprep.subr.bf16.mxu0 0
  %149 = vmatpush1.bf16.msra.mxu0 0
  %150 = vmatprep.mubr.bf16.mxu0 0
  %151 = vmatmul.mubr.bf16.gmra.mrb[0].mxu0 %v110
  %v152 = vpop.f32.mrb[0].mxu0
  %v153 = vadd.f32 %v100, %v152
  %v154 = vpop.f32.mrb[0].mxu0
  %v155 = vpop.f32.mrb[0].mxu0
  %v156 = vadd.f32 %v100, %v155
  %v157 = vpop.f32.mrb[0].mxu0
  %158 = vmatprep.mubr.bf16.mxu0 0
  %159 = vmatmul.mubr.bf16.gmra.mrb[0].mxu0 %v113
  %v160 = vpop.f32.mrb[0].mxu0
  %v161 = vadd.f32 %v100, %v160
  %v162 = vpop.f32.mrb[0].mxu0
  %v163 = vpop.f32.mrb[0].mxu0
  %v164 = vadd.f32 %v100, %v163
  %v165 = vpop.f32.mrb[0].mxu0
  %166 = vmatprep.mubr.bf16.mxu0 0
  %167 = vmatmul.mubr.bf16.gmra.mrb[0].mxu0 %v116
  %v168 = vpop.f32.mrb[0].mxu0
  %v169 = vadd.f32 %v100, %v168
  %v170 = vpop.f32.mrb[0].mxu0
  %v171 = vpop.f32.mrb[0].mxu0
  %v172 = vadd.f32 %v100, %v171
  %v173 = vpop.f32.mrb[0].mxu0
  %174 = vdwg.mxu0
  %vm175 = vcmask 523264
  %176 = vst.msk [vmem:[#allocation4] sm:$0xff] %vm175, %v153
  %177 = vst.msk [vmem:[#allocation4 + $0x8] sm:$0xff] %vm175, %v156
  %178 = vst.msk [vmem:[#allocation4 + $0x10] sm:$0xff] %vm175, %v161
  %179 = vst.msk [vmem:[#allocation4 + $0x18] sm:$0xff] %vm175, %v164
  %180 = vst.msk [vmem:[#allocation4 + $0x20] sm:$0xff] %vm175, %v169
  %181 = vst.msk [vmem:[#allocation4 + $0x28] sm:$0xff] %vm175, %v172
  %v182 = vld [vmem:[%s3] sm:$0xf]
  %v183 = vld [vmem:[%s3 + $0x4] sm:$0xf]
  %v184 = vld [vmem:[%s5] sm:$0x1]
  %v186 = vlaneseq
  %v187 = vshrl.u32 %v186, 7
  %v188 = vsub.s32 0, %v187
  %v189 = vrot.slane %v184, %v188
  %v193 = vunpack.c.l.b16 %v182
  %v194 = vunpack.c.l.b16 %v183
  %v195 = vpack.c.b16 %v194, %v193
  %v198 = vsel %vm108, %v90, 0
  %v201 = vsel %vm108, %v91, 0
  %v204 = vsel %vm108, %v92, 0
  %206 = vmatprep.subr.bf16.mxu0 0
  %207 = vmatpush1.bf16.msra.mxu0 %v195
  %208 = vmatprep.subr.bf16.mxu0 0
  %209 = vmatpush1.bf16.msra.mxu0 0
  %210 = vmatprep.subr.bf16.mxu0 0
  %211 = vmatpush1.bf16.msra.mxu0 0
  %212 = vmatprep.subr.bf16.mxu0 0
  %213 = vmatpush1.bf16.msra.mxu0 0
  %214 = vmatprep.subr.bf16.mxu0 0
  %215 = vmatpush1.bf16.msra.mxu0 0
  %216 = vmatprep.subr.bf16.mxu0 0
  %217 = vmatpush1.bf16.msra.mxu0 0
  %218 = vmatprep.subr.bf16.mxu0 0
  %219 = vmatpush1.bf16.msra.mxu0 0
  %220 = vmatprep.subr.bf16.mxu0 0
  %221 = vmatpush1.bf16.msra.mxu0 0
  %222 = vmatprep.subr.bf16.mxu0 0
  %223 = vmatpush1.bf16.msra.mxu0 0
  %224 = vmatprep.subr.bf16.mxu0 0
  %225 = vmatpush1.bf16.msra.mxu0 0
  %226 = vmatprep.subr.bf16.mxu0 0
  %227 = vmatpush1.bf16.msra.mxu0 0
  %228 = vmatprep.subr.bf16.mxu0 0
  %229 = vmatpush1.bf16.msra.mxu0 0
  %230 = vmatprep.subr.bf16.mxu0 0
  %231 = vmatpush1.bf16.msra.mxu0 0
  %232 = vmatprep.subr.bf16.mxu0 0
  %233 = vmatpush1.bf16.msra.mxu0 0
  %234 = vmatprep.subr.bf16.mxu0 0
  %235 = vmatpush1.bf16.msra.mxu0 0
  %236 = vmatprep.subr.bf16.mxu0 0
  %237 = vmatpush1.bf16.msra.mxu0 0
  %238 = vmatprep.mubr.bf16.mxu0 0
  %239 = vmatmul.mubr.bf16.gmra.mrb[0].mxu0 %v198
  %v240 = vpop.f32.mrb[0].mxu0
  %v241 = vadd.f32 %v189, %v240
  %v242 = vpop.f32.mrb[0].mxu0
  %v243 = vpop.f32.mrb[0].mxu0
  %v244 = vadd.f32 %v189, %v243
  %v245 = vpop.f32.mrb[0].mxu0
  %246 = vmatprep.mubr.bf16.mxu0 0
  %247 = vmatmul.mubr.bf16.gmra.mrb[0].mxu0 %v201
  %v248 = vpop.f32.mrb[0].mxu0
  %v249 = vadd.f32 %v189, %v248
  %v250 = vpop.f32.mrb[0].mxu0
  %v251 = vpop.f32.mrb[0].mxu0
  %v252 = vadd.f32 %v189, %v251
  %v253 = vpop.f32.mrb[0].mxu0
  %254 = vmatprep.mubr.bf16.mxu0 0
  %255 = vmatmul.mubr.bf16.gmra.mrb[0].mxu0 %v204
  %v256 = vpop.f32.mrb[0].mxu0
  %v257 = vadd.f32 %v189, %v256
  %v258 = vpop.f32.mrb[0].mxu0
  %v259 = vpop.f32.mrb[0].mxu0
  %v260 = vadd.f32 %v189, %v259
  %v261 = vpop.f32.mrb[0].mxu0
  %262 = vdwg.mxu0
  %263 = vst.msk [vmem:[#allocation5] sm:$0xff] %vm175, %v241
  %264 = vst.msk [vmem:[#allocation5 + $0x8] sm:$0xff] %vm175, %v244
  %265 = vst.msk [vmem:[#allocation5 + $0x10] sm:$0xff] %vm175, %v249
  %266 = vst.msk [vmem:[#allocation5 + $0x18] sm:$0xff] %vm175, %v252
  %267 = vst.msk [vmem:[#allocation5 + $0x20] sm:$0xff] %vm175, %v257
  %268 = vst.msk [vmem:[#allocation5 + $0x28] sm:$0xff] %vm175, %v260
  %v269 = vld [vmem:[%s6] sm:$0xf]
  %v270 = vld [vmem:[%s6 + $0x4] sm:$0xf]
  %v271 = vld [vmem:[%s6 + $0x8] sm:$0xf]
  %v272 = vld [vmem:[%s6 + $0xc] sm:$0xf]
  %v273 = vld [vmem:[#allocation2] sm:$0xff]
  %v274 = vld [vmem:[#allocation2 + $0x8] sm:$0xff]
  %v275 = vpack.c.bf16 %v274, %v273
  %v280 = vunpack.c.l.b16 %v269
  %v281 = vunpack.c.l.b16 %v270
  %v282 = vunpack.c.l.b16 %v271
  %v283 = vunpack.c.l.b16 %v272
  %v284 = vpack.c.b16 %v281, %v280
  %v285 = vpack.c.b16 %v283, %v282
  %vm288 = vcmask 261120
  %v290 = vsel %vm288, %v275, 0
  %292 = vmatprep.subr.bf16.mxu0 0
  %293 = vmatpush1.bf16.msra.mxu0 %v284
  %294 = vmatprep.subr.bf16.mxu0 0
  %295 = vmatpush1.bf16.msra.mxu0 %v285
  %296 = vmatprep.subr.bf16.mxu0 0
  %297 = vmatpush1.bf16.msra.mxu0 0
  %298 = vmatprep.subr.bf16.mxu0 0
  %299 = vmatpush1.bf16.msra.mxu0 0
  %300 = vmatprep.subr.bf16.mxu0 0
  %301 = vmatpush1.bf16.msra.mxu0 0
  %302 = vmatprep.subr.bf16.mxu0 0
  %303 = vmatpush1.bf16.msra.mxu0 0
  %304 = vmatprep.subr.bf16.mxu0 0
  %305 = vmatpush1.bf16.msra.mxu0 0
  %306 = vmatprep.subr.bf16.mxu0 0
  %307 = vmatpush1.bf16.msra.mxu0 0
  %308 = vmatprep.subr.bf16.mxu0 0
  %309 = vmatpush1.bf16.msra.mxu0 0
  %310 = vmatprep.subr.bf16.mxu0 0
  %311 = vmatpush1.bf16.msra.mxu0 0
  %312 = vmatprep.subr.bf16.mxu0 0
  %313 = vmatpush1.bf16.msra.mxu0 0
  %314 = vmatprep.subr.bf16.mxu0 0
  %315 = vmatpush1.bf16.msra.mxu0 0
  %316 = vmatprep.subr.bf16.mxu0 0
  %317 = vmatpush1.bf16.msra.mxu0 0
  %318 = vmatprep.subr.bf16.mxu0 0
  %319 = vmatpush1.bf16.msra.mxu0 0
  %320 = vmatprep.subr.bf16.mxu0 0
  %321 = vmatpush1.bf16.msra.mxu0 0
  %322 = vmatprep.subr.bf16.mxu0 0
  %323 = vmatpush1.bf16.msra.mxu0 0
  %324 = vmatprep.mubr.bf16.mxu0 0
  %325 = vmatmul.mubr.bf16.gmra.mrb[0].mxu0 %v290
  %v326 = vpop.f32.mrb[0].mxu0
  %v327 = vadd.f32 0.0, %v326
  %v328 = vpop.f32.mrb[0].mxu0
  %v329 = vpop.f32.mrb[0].mxu0
  %v330 = vadd.f32 0.0, %v329
  %v331 = vpop.f32.mrb[0].mxu0
  %332 = vdwg.mxu0
  %v333 = vld [vmem:[#allocation4] sm:$0xff]
  %s334 = scalar_lea.vmem [#allocation5], 40
  %v335 = vld [vmem:[%s334] sm:$0xff]
  %v336 = vadd.f32 %v333, %v327
  %v337 = vadd.f32 %v335, %v330
  %v338 = vxor.u32 %v336, 2147483648
  %v339 = vxor.u32 %v337, 2147483648
  %v340 = vmul.f32 %v338, 1.442695
  %v341 = vpow.pop %v340
  %v342 = vmul.f32 %v339, 1.442695
  %v343 = vpow.pop %v342
  %v344 = vadd.f32 %v341, 1.0
  %v345 = vadd.f32 %v343, 1.0
  %v346 = vrcp.pop %v344
  %v347 = vmul.f32 1.0, %v346
  %v348 = vrcp.pop %v345
  %v349 = vmul.f32 1.0, %v348
  %v350 = vtanh.pop %v336
  %v351 = vtanh.pop %v337
  %v352 = vld [vmem:[#allocation3] sm:$0xff]
  %v353 = vld [vmem:[#allocation3 + $0x8] sm:$0xff]
  %356 = vrot.lane.b32.xlu0 %v352, 16
  %v357 = vpop.permute.xlu0 %356
  %358 = vrot.lane.b32.xlu0 %v353, 16
  %v359 = vpop.permute.xlu0 %358
  %v362 = vmul.f32 %v347, %v357
  %v363 = vmul.f32 %v349, %v359
  %366 = vrot.lane.b32.xlu0 %v350, 96
  %v367 = vpop.permute.xlu0 %366
  %368 = vrot.lane.b32.xlu0 %v351, 96
  %v369 = vpop.permute.xlu0 %368
  %v372 = vmul.f32 %v347, %v367
  %v373 = vmul.f32 %v349, %v369
  %376 = vrot.lane.b32.xlu0 %v372, 16
  %v377 = vpop.permute.xlu0 %376
  %378 = vrot.lane.b32.xlu0 %v373, 16
  %v379 = vpop.permute.xlu0 %378
  %v382 = vadd.f32 %v362, %v377
  %v383 = vadd.f32 %v363, %v379
  %v384 = vtanh.pop %v382
  %v385 = vtanh.pop %v383
  %388 = vrot.lane.b32.xlu0 %v384, 32
  %v389 = vpop.permute.xlu0 %388
  %390 = vrot.lane.b32.xlu0 %v385, 32
  %v391 = vpop.permute.xlu0 %390
  %v394 = vmul.f32 %v347, %v389
  %v395 = vmul.f32 %v349, %v391
  %398 = vrot.lane.b32.xlu0 %v382, 112
  %v399 = vpop.permute.xlu0 %398
  %400 = vrot.lane.b32.xlu0 %v383, 112
  %v401 = vpop.permute.xlu0 %400
  %404 = vst.msk [vmem:[#allocation3] sm:$0xff] %vm108, %v399
  %405 = vst.msk [vmem:[#allocation3 + $0x8] sm:$0xff] %vm108, %v401
  %407 = vrot.lane.b32.xlu0 %v394, 80
  %v408 = vpop.permute.xlu0 %407
  %410 = vst.msk [vmem:[#allocation2] sm:$0xff] %vm108, %v408
  %412 = vrot.lane.b32.xlu0 %v395, 96
  %v413 = vpop.permute.xlu0 %412
  %vm415 = vcmask 261248
  %416 = vst.msk [vmem:[#allocation2 + $0x8] sm:$0xff] %vm415, %v413
  %417 = vst.msk [vmem:[%s7] sm:$0xff] %vm108, %v408
  %418 = vrot.lane.b32.xlu0 %v395, 80
  %v419 = vpop.permute.xlu0 %418
  %s421 = scalar_lea.vmem %s61, 40
  %422 = vst.msk [vmem:[%s421] sm:$0xff] %vm108, %v419
  %v423 = vld [vmem:[#allocation2] sm:$0xff]
  %v424 = vld [vmem:[#allocation2 + $0x8] sm:$0xff]
  %v425 = vpack.c.bf16 %v424, %v423
  %v427 = vsel %vm288, %v425, 0
  %429 = vmatprep.subr.bf16.mxu0 0
  %430 = vmatpush1.bf16.msra.mxu0 %v284
  %431 = vmatprep.subr.bf16.mxu0 0
  %432 = vmatpush1.bf16.msra.mxu0 %v285
  %433 = vmatprep.subr.bf16.mxu0 0
  %434 = vmatpush1.bf16.msra.mxu0 0
  %435 = vmatprep.subr.bf16.mxu0 0
  %436 = vmatpush1.bf16.msra.mxu0 0
  %437 = vmatprep.subr.bf16.mxu0 0
  %438 = vmatpush1.bf16.msra.mxu0 0
  %439 = vmatprep.subr.bf16.mxu0 0
  %440 = vmatpush1.bf16.msra.mxu0 0
  %441 = vmatprep.subr.bf16.mxu0 0
  %442 = vmatpush1.bf16.msra.mxu0 0
  %443 = vmatprep.subr.bf16.mxu0 0
  %444 = vmatpush1.bf16.msra.mxu0 0
  %445 = vmatprep.subr.bf16.mxu0 0
  %446 = vmatpush1.bf16.msra.mxu0 0
  %447 = vmatprep.subr.bf16.mxu0 0
  %448 = vmatpush1.bf16.msra.mxu0 0
  %449 = vmatprep.subr.bf16.mxu0 0
  %450 = vmatpush1.bf16.msra.mxu0 0
  %451 = vmatprep.subr.bf16.mxu0 0
  %452 = vmatpush1.bf16.msra.mxu0 0
  %453 = vmatprep.subr.bf16.mxu0 0
  %454 = vmatpush1.bf16.msra.mxu0 0
  %455 = vmatprep.subr.bf16.mxu0 0
  %456 = vmatpush1.bf16.msra.mxu0 0
  %457 = vmatprep.subr.bf16.mxu0 0
  %458 = vmatpush1.bf16.msra.mxu0 0
  %459 = vmatprep.subr.bf16.mxu0 0
  %460 = vmatpush1.bf16.msra.mxu0 0
  %461 = vmatprep.mubr.bf16.mxu0 0
  %462 = vmatmul.mubr.bf16.gmra.mrb[0].mxu0 %v427
  %v463 = vpop.f32.mrb[0].mxu0
  %v464 = vadd.f32 0.0, %v463
  %v465 = vpop.f32.mrb[0].mxu0
  %v466 = vpop.f32.mrb[0].mxu0
  %v467 = vadd.f32 0.0, %v466
  %v468 = vpop.f32.mrb[0].mxu0
  %469 = vdwg.mxu0
  %s470 = scalar_lea.vmem [#allocation4], 8
  %v471 = vld [vmem:[%s470] sm:$0xff]
  %s472 = scalar_lea.vmem [#allocation5], 32
  %v473 = vld [vmem:[%s472] sm:$0xff]
  %v474 = vadd.f32 %v471, %v464
  %v475 = vadd.f32 %v473, %v467
  %v476 = vxor.u32 %v474, 2147483648
  %v477 = vxor.u32 %v475, 2147483648
  %v478 = vmul.f32 %v476, 1.442695
  %v479 = vpow.pop %v478
  %v480 = vmul.f32 %v477, 1.442695
  %v481 = vpow.pop %v480
  %v482 = vadd.f32 %v479, 1.0
  %v483 = vadd.f32 %v481, 1.0
  %v484 = vrcp.pop %v482
  %v485 = vmul.f32 1.0, %v484
  %v486 = vrcp.pop %v483
  %v487 = vmul.f32 1.0, %v486
  %v488 = vtanh.pop %v474
  %v489 = vtanh.pop %v475
  %v490 = vld [vmem:[#allocation3] sm:$0xff]
  %v491 = vld [vmem:[#allocation3 + $0x8] sm:$0xff]
  %494 = vrot.lane.b32.xlu0 %v490, 16
  %v495 = vpop.permute.xlu0 %494
  %496 = vrot.lane.b32.xlu0 %v491, 16
  %v497 = vpop.permute.xlu0 %496
  %v500 = vmul.f32 %v485, %v495
  %v501 = vmul.f32 %v487, %v497
  %504 = vrot.lane.b32.xlu0 %v488, 96
  %v505 = vpop.permute.xlu0 %504
  %506 = vrot.lane.b32.xlu0 %v489, 96
  %v507 = vpop.permute.xlu0 %506
  %v510 = vmul.f32 %v485, %v505
  %v511 = vmul.f32 %v487, %v507
  %514 = vrot.lane.b32.xlu0 %v510, 16
  %v515 = vpop.permute.xlu0 %514
  %516 = vrot.lane.b32.xlu0 %v511, 16
  %v517 = vpop.permute.xlu0 %516
  %v520 = vadd.f32 %v500, %v515
  %v521 = vadd.f32 %v501, %v517
  %v522 = vtanh.pop %v520
  %v523 = vtanh.pop %v521
  %526 = vrot.lane.b32.xlu0 %v522, 32
  %v527 = vpop.permute.xlu0 %526
  %528 = vrot.lane.b32.xlu0 %v523, 32
  %v529 = vpop.permute.xlu0 %528
  %v532 = vmul.f32 %v485, %v527
  %v533 = vmul.f32 %v487, %v529
  %536 = vrot.lane.b32.xlu0 %v520, 112
  %v537 = vpop.permute.xlu0 %536
  %538 = vrot.lane.b32.xlu0 %v521, 112
  %v539 = vpop.permute.xlu0 %538
  %542 = vst.msk [vmem:[#allocation3] sm:$0xff] %vm108, %v537
  %543 = vst.msk [vmem:[#allocation3 + $0x8] sm:$0xff] %vm108, %v539
  %545 = vrot.lane.b32.xlu0 %v532, 80
  %v546 = vpop.permute.xlu0 %545
  %548 = vst.msk [vmem:[#allocation2] sm:$0xff] %vm108, %v546
  %550 = vrot.lane.b32.xlu0 %v533, 96
  %v551 = vpop.permute.xlu0 %550
  %553 = vst.msk [vmem:[#allocation2 + $0x8] sm:$0xff] %vm415, %v551
  %s554 = scalar_lea.vmem %s7, 8
  %555 = vst.msk [vmem:[%s554] sm:$0xff] %vm108, %v546
  %556 = vrot.lane.b32.xlu0 %v533, 80
  %v557 = vpop.permute.xlu0 %556
  %s559 = scalar_lea.vmem %s61, 32
  %560 = vst.msk [vmem:[%s559] sm:$0xff] %vm108, %v557
  %v561 = vld [vmem:[#allocation2] sm:$0xff]
  %v562 = vld [vmem:[#allocation2 + $0x8] sm:$0xff]
  %v563 = vpack.c.bf16 %v562, %v561
  %v565 = vsel %vm288, %v563, 0
  %567 = vmatprep.subr.bf16.mxu0 0
  %568 = vmatpush1.bf16.msra.mxu0 %v284
  %569 = vmatprep.subr.bf16.mxu0 0
  %570 = vmatpush1.bf16.msra.mxu0 %v285
  %571 = vmatprep.subr.bf16.mxu0 0
  %572 = vmatpush1.bf16.msra.mxu0 0
  %573 = vmatprep.subr.bf16.mxu0 0
  %574 = vmatpush1.bf16.msra.mxu0 0
  %575 = vmatprep.subr.bf16.mxu0 0
  %576 = vmatpush1.bf16.msra.mxu0 0
  %577 = vmatprep.subr.bf16.mxu0 0
  %578 = vmatpush1.bf16.msra.mxu0 0
  %579 = vmatprep.subr.bf16.mxu0 0
  %580 = vmatpush1.bf16.msra.mxu0 0
  %581 = vmatprep.subr.bf16.mxu0 0
  %582 = vmatpush1.bf16.msra.mxu0 0
  %583 = vmatprep.subr.bf16.mxu0 0
  %584 = vmatpush1.bf16.msra.mxu0 0
  %585 = vmatprep.subr.bf16.mxu0 0
  %586 = vmatpush1.bf16.msra.mxu0 0
  %587 = vmatprep.subr.bf16.mxu0 0
  %588 = vmatpush1.bf16.msra.mxu0 0
  %589 = vmatprep.subr.bf16.mxu0 0
  %590 = vmatpush1.bf16.msra.mxu0 0
  %591 = vmatprep.subr.bf16.mxu0 0
  %592 = vmatpush1.bf16.msra.mxu0 0
  %593 = vmatprep.subr.bf16.mxu0 0
  %594 = vmatpush1.bf16.msra.mxu0 0
  %595 = vmatprep.subr.bf16.mxu0 0
  %596 = vmatpush1.bf16.msra.mxu0 0
  %597 = vmatprep.subr.bf16.mxu0 0
  %598 = vmatpush1.bf16.msra.mxu0 0
  %599 = vmatprep.mubr.bf16.mxu0 0
  %600 = vmatmul.mubr.bf16.gmra.mrb[0].mxu0 %v565
  %v601 = vpop.f32.mrb[0].mxu0
  %v602 = vadd.f32 0.0, %v601
  %v603 = vpop.f32.mrb[0].mxu0
  %v604 = vpop.f32.mrb[0].mxu0
  %v605 = vadd.f32 0.0, %v604
  %v606 = vpop.f32.mrb[0].mxu0
  %607 = vdwg.mxu0
  %s608 = scalar_lea.vmem [#allocation4], 16
  %v609 = vld [vmem:[%s608] sm:$0xff]
  %s610 = scalar_lea.vmem [#allocation5], 24
  %v611 = vld [vmem:[%s610] sm:$0xff]
  %v612 = vadd.f32 %v609, %v602
  %v613 = vadd.f32 %v611, %v605
  %v614 = vxor.u32 %v612, 2147483648
  %v615 = vxor.u32 %v613, 2147483648
  %v616 = vmul.f32 %v614, 1.442695
  %v617 = vpow.pop %v616
  %v618 = vmul.f32 %v615, 1.442695
  %v619 = vpow.pop %v618
  %v620 = vadd.f32 %v617, 1.0
  %v621 = vadd.f32 %v619, 1.0
  %v622 = vrcp.pop %v620
  %v623 = vmul.f32 1.0, %v622
  %v624 = vrcp.pop %v621
  %v625 = vmul.f32 1.0, %v624
  %v626 = vtanh.pop %v612
  %v627 = vtanh.pop %v613
  %v628 = vld [vmem:[#allocation3] sm:$0xff]
  %v629 = vld [vmem:[#allocation3 + $0x8] sm:$0xff]
  %632 = vrot.lane.b32.xlu0 %v628, 16
  %v633 = vpop.permute.xlu0 %632
  %634 = vrot.lane.b32.xlu0 %v629, 16
  %v635 = vpop.permute.xlu0 %634
  %v638 = vmul.f32 %v623, %v633
  %v639 = vmul.f32 %v625, %v635
  %642 = vrot.lane.b32.xlu0 %v626, 96
  %v643 = vpop.permute.xlu0 %642
  %644 = vrot.lane.b32.xlu0 %v627, 96
  %v645 = vpop.permute.xlu0 %644
  %v648 = vmul.f32 %v623, %v643
  %v649 = vmul.f32 %v625, %v645
  %652 = vrot.lane.b32.xlu0 %v648, 16
  %v653 = vpop.permute.xlu0 %652
  %654 = vrot.lane.b32.xlu0 %v649, 16
  %v655 = vpop.permute.xlu0 %654
  %v658 = vadd.f32 %v638, %v653
  %v659 = vadd.f32 %v639, %v655
  %v660 = vtanh.pop %v658
  %v661 = vtanh.pop %v659
  %664 = vrot.lane.b32.xlu0 %v660, 32
  %v665 = vpop.permute.xlu0 %664
  %666 = vrot.lane.b32.xlu0 %v661, 32
  %v667 = vpop.permute.xlu0 %666
  %v670 = vmul.f32 %v623, %v665
  %v671 = vmul.f32 %v625, %v667
  %674 = vrot.lane.b32.xlu0 %v658, 112
  %v675 = vpop.permute.xlu0 %674
  %676 = vrot.lane.b32.xlu0 %v659, 112
  %v677 = vpop.permute.xlu0 %676
  %680 = vst.msk [vmem:[#allocation3] sm:$0xff] %vm108, %v675
  %681 = vst.msk [vmem:[#allocation3 + $0x8] sm:$0xff] %vm108, %v677
  %683 = vrot.lane.b32.xlu0 %v670, 80
  %v684 = vpop.permute.xlu0 %683
  %686 = vst.msk [vmem:[#allocation2] sm:$0xff] %vm108, %v684
  %688 = vrot.lane.b32.xlu0 %v671, 96
  %v689 = vpop.permute.xlu0 %688
  %691 = vst.msk [vmem:[#allocation2 + $0x8] sm:$0xff] %vm415, %v689
  %s692 = scalar_lea.vmem %s7, 16
  %693 = vst.msk [vmem:[%s692] sm:$0xff] %vm108, %v684
  %694 = vrot.lane.b32.xlu0 %v671, 80
  %v695 = vpop.permute.xlu0 %694
  %s697 = scalar_lea.vmem %s61, 24
  %698 = vst.msk [vmem:[%s697] sm:$0xff] %vm108, %v695
  %v699 = vld [vmem:[#allocation2] sm:$0xff]
  %v700 = vld [vmem:[#allocation2 + $0x8] sm:$0xff]
  %v701 = vpack.c.bf16 %v700, %v699
  %v703 = vsel %vm288, %v701, 0
  %705 = vmatprep.subr.bf16.mxu0 0
  %706 = vmatpush1.bf16.msra.mxu0 %v284
  %707 = vmatprep.subr.bf16.mxu0 0
  %708 = vmatpush1.bf16.msra.mxu0 %v285
  %709 = vmatprep.subr.bf16.mxu0 0
  %710 = vmatpush1.bf16.msra.mxu0 0
  %711 = vmatprep.subr.bf16.mxu0 0
  %712 = vmatpush1.bf16.msra.mxu0 0
  %713 = vmatprep.subr.bf16.mxu0 0
  %714 = vmatpush1.bf16.msra.mxu0 0
  %715 = vmatprep.subr.bf16.mxu0 0
  %716 = vmatpush1.bf16.msra.mxu0 0
  %717 = vmatprep.subr.bf16.mxu0 0
  %718 = vmatpush1.bf16.msra.mxu0 0
  %719 = vmatprep.subr.bf16.mxu0 0
  %720 = vmatpush1.bf16.msra.mxu0 0
  %721 = vmatprep.subr.bf16.mxu0 0
  %722 = vmatpush1.bf16.msra.mxu0 0
  %723 = vmatprep.subr.bf16.mxu0 0
  %724 = vmatpush1.bf16.msra.mxu0 0
  %725 = vmatprep.subr.bf16.mxu0 0
  %726 = vmatpush1.bf16.msra.mxu0 0
  %727 = vmatprep.subr.bf16.mxu0 0
  %728 = vmatpush1.bf16.msra.mxu0 0
  %729 = vmatprep.subr.bf16.mxu0 0
  %730 = vmatpush1.bf16.msra.mxu0 0
  %731 = vmatprep.subr.bf16.mxu0 0
  %732 = vmatpush1.bf16.msra.mxu0 0
  %733 = vmatprep.subr.bf16.mxu0 0
  %734 = vmatpush1.bf16.msra.mxu0 0
  %735 = vmatprep.subr.bf16.mxu0 0
  %736 = vmatpush1.bf16.msra.mxu0 0
  %737 = vmatprep.mubr.bf16.mxu0 0
  %738 = vmatmul.mubr.bf16.gmra.mrb[0].mxu0 %v703
  %v739 = vpop.f32.mrb[0].mxu0
  %v740 = vadd.f32 0.0, %v739
  %v741 = vpop.f32.mrb[0].mxu0
  %v742 = vpop.f32.mrb[0].mxu0
  %v743 = vadd.f32 0.0, %v742
  %v744 = vpop.f32.mrb[0].mxu0
  %745 = vdwg.mxu0
  %s746 = scalar_lea.vmem [#allocation4], 24
  %v747 = vld [vmem:[%s746] sm:$0xff]
  %s748 = scalar_lea.vmem [#allocation5], 16
  %v749 = vld [vmem:[%s748] sm:$0xff]
  %v750 = vadd.f32 %v747, %v740
  %v751 = vadd.f32 %v749, %v743
  %v752 = vxor.u32 %v750, 2147483648
  %v753 = vxor.u32 %v751, 2147483648
  %v754 = vmul.f32 %v752, 1.442695
  %v755 = vpow.pop %v754
  %v756 = vmul.f32 %v753, 1.442695
  %v757 = vpow.pop %v756
  %v758 = vadd.f32 %v755, 1.0
  %v759 = vadd.f32 %v757, 1.0
  %v760 = vrcp.pop %v758
  %v761 = vmul.f32 1.0, %v760
  %v762 = vrcp.pop %v759
  %v763 = vmul.f32 1.0, %v762
  %v764 = vtanh.pop %v750
  %v765 = vtanh.pop %v751
  %v766 = vld [vmem:[#allocation3] sm:$0xff]
  %v767 = vld [vmem:[#allocation3 + $0x8] sm:$0xff]
  %770 = vrot.lane.b32.xlu0 %v766, 16
  %v771 = vpop.permute.xlu0 %770
  %772 = vrot.lane.b32.xlu0 %v767, 16
  %v773 = vpop.permute.xlu0 %772
  %v776 = vmul.f32 %v761, %v771
  %v777 = vmul.f32 %v763, %v773
  %780 = vrot.lane.b32.xlu0 %v764, 96
  %v781 = vpop.permute.xlu0 %780
  %782 = vrot.lane.b32.xlu0 %v765, 96
  %v783 = vpop.permute.xlu0 %782
  %v786 = vmul.f32 %v761, %v781
  %v787 = vmul.f32 %v763, %v783
  %790 = vrot.lane.b32.xlu0 %v786, 16
  %v791 = vpop.permute.xlu0 %790
  %792 = vrot.lane.b32.xlu0 %v787, 16
  %v793 = vpop.permute.xlu0 %792
  %v796 = vadd.f32 %v776, %v791
  %v797 = vadd.f32 %v777, %v793
  %v798 = vtanh.pop %v796
  %v799 = vtanh.pop %v797
  %802 = vrot.lane.b32.xlu0 %v798, 32
  %v803 = vpop.permute.xlu0 %802
  %804 = vrot.lane.b32.xlu0 %v799, 32
  %v805 = vpop.permute.xlu0 %804
  %v808 = vmul.f32 %v761, %v803
  %v809 = vmul.f32 %v763, %v805
  %812 = vrot.lane.b32.xlu0 %v796, 112
  %v813 = vpop.permute.xlu0 %812
  %814 = vrot.lane.b32.xlu0 %v797, 112
  %v815 = vpop.permute.xlu0 %814
  %818 = vst.msk [vmem:[#allocation3] sm:$0xff] %vm108, %v813
  %819 = vst.msk [vmem:[#allocation3 + $0x8] sm:$0xff] %vm108, %v815
  %821 = vrot.lane.b32.xlu0 %v808, 80
  %v822 = vpop.permute.xlu0 %821
  %824 = vst.msk [vmem:[#allocation2] sm:$0xff] %vm108, %v822
  %826 = vrot.lane.b32.xlu0 %v809, 96
  %v827 = vpop.permute.xlu0 %826
  %829 = vst.msk [vmem:[#allocation2 + $0x8] sm:$0xff] %vm415, %v827
  %s830 = scalar_lea.vmem %s7, 24
  %831 = vst.msk [vmem:[%s830] sm:$0xff] %vm108, %v822
  %832 = vrot.lane.b32.xlu0 %v809, 80
  %v833 = vpop.permute.xlu0 %832
  %s835 = scalar_lea.vmem %s61, 16
  %836 = vst.msk [vmem:[%s835] sm:$0xff] %vm108, %v833
  %v837 = vld [vmem:[#allocation2] sm:$0xff]
  %v838 = vld [vmem:[#allocation2 + $0x8] sm:$0xff]
  %v839 = vpack.c.bf16 %v838, %v837
  %v841 = vsel %vm288, %v839, 0
  %843 = vmatprep.subr.bf16.mxu0 0
  %844 = vmatpush1.bf16.msra.mxu0 %v284
  %845 = vmatprep.subr.bf16.mxu0 0
  %846 = vmatpush1.bf16.msra.mxu0 %v285
  %847 = vmatprep.subr.bf16.mxu0 0
  %848 = vmatpush1.bf16.msra.mxu0 0
  %849 = vmatprep.subr.bf16.mxu0 0
  %850 = vmatpush1.bf16.msra.mxu0 0
  %851 = vmatprep.subr.bf16.mxu0 0
  %852 = vmatpush1.bf16.msra.mxu0 0
  %853 = vmatprep.subr.bf16.mxu0 0
  %854 = vmatpush1.bf16.msra.mxu0 0
  %855 = vmatprep.subr.bf16.mxu0 0
  %856 = vmatpush1.bf16.msra.mxu0 0
  %857 = vmatprep.subr.bf16.mxu0 0
  %858 = vmatpush1.bf16.msra.mxu0 0
  %859 = vmatprep.subr.bf16.mxu0 0
  %860 = vmatpush1.bf16.msra.mxu0 0
  %861 = vmatprep.subr.bf16.mxu0 0
  %862 = vmatpush1.bf16.msra.mxu0 0
  %863 = vmatprep.subr.bf16.mxu0 0
  %864 = vmatpush1.bf16.msra.mxu0 0
  %865 = vmatprep.subr.bf16.mxu0 0
  %866 = vmatpush1.bf16.msra.mxu0 0
  %867 = vmatprep.subr.bf16.mxu0 0
  %868 = vmatpush1.bf16.msra.mxu0 0
  %869 = vmatprep.subr.bf16.mxu0 0
  %870 = vmatpush1.bf16.msra.mxu0 0
  %871 = vmatprep.subr.bf16.mxu0 0
  %872 = vmatpush1.bf16.msra.mxu0 0
  %873 = vmatprep.subr.bf16.mxu0 0
  %874 = vmatpush1.bf16.msra.mxu0 0
  %875 = vmatprep.mubr.bf16.mxu0 0
  %876 = vmatmul.mubr.bf16.gmra.mrb[0].mxu0 %v841
  %v877 = vpop.f32.mrb[0].mxu0
  %v878 = vadd.f32 0.0, %v877
  %v879 = vpop.f32.mrb[0].mxu0
  %v880 = vpop.f32.mrb[0].mxu0
  %v881 = vadd.f32 0.0, %v880
  %v882 = vpop.f32.mrb[0].mxu0
  %883 = vdwg.mxu0
  %s884 = scalar_lea.vmem [#allocation4], 32
  %v885 = vld [vmem:[%s884] sm:$0xff]
  %s886 = scalar_lea.vmem [#allocation5], 8
  %v887 = vld [vmem:[%s886] sm:$0xff]
  %v888 = vadd.f32 %v885, %v878
  %v889 = vadd.f32 %v887, %v881
  %v890 = vxor.u32 %v888, 2147483648
  %v891 = vxor.u32 %v889, 2147483648
  %v892 = vmul.f32 %v890, 1.442695
  %v893 = vpow.pop %v892
  %v894 = vmul.f32 %v891, 1.442695
  %v895 = vpow.pop %v894
  %v896 = vadd.f32 %v893, 1.0
  %v897 = vadd.f32 %v895, 1.0
  %v898 = vrcp.pop %v896
  %v899 = vmul.f32 1.0, %v898
  %v900 = vrcp.pop %v897
  %v901 = vmul.f32 1.0, %v900
  %v902 = vtanh.pop %v888
  %v903 = vtanh.pop %v889
  %v904 = vld [vmem:[#allocation3] sm:$0xff]
  %v905 = vld [vmem:[#allocation3 + $0x8] sm:$0xff]
  %908 = vrot.lane.b32.xlu0 %v904, 16
  %v909 = vpop.permute.xlu0 %908
  %910 = vrot.lane.b32.xlu0 %v905, 16
  %v911 = vpop.permute.xlu0 %910
  %v914 = vmul.f32 %v899, %v909
  %v915 = vmul.f32 %v901, %v911
  %918 = vrot.lane.b32.xlu0 %v902, 96
  %v919 = vpop.permute.xlu0 %918
  %920 = vrot.lane.b32.xlu0 %v903, 96
  %v921 = vpop.permute.xlu0 %920
  %v924 = vmul.f32 %v899, %v919
  %v925 = vmul.f32 %v901, %v921
  %928 = vrot.lane.b32.xlu0 %v924, 16
  %v929 = vpop.permute.xlu0 %928
  %930 = vrot.lane.b32.xlu0 %v925, 16
  %v931 = vpop.permute.xlu0 %930
  %v934 = vadd.f32 %v914, %v929
  %v935 = vadd.f32 %v915, %v931
  %v936 = vtanh.pop %v934
  %v937 = vtanh.pop %v935
  %940 = vrot.lane.b32.xlu0 %v936, 32
  %v941 = vpop.permute.xlu0 %940
  %942 = vrot.lane.b32.xlu0 %v937, 32
  %v943 = vpop.permute.xlu0 %942
  %v946 = vmul.f32 %v899, %v941
  %v947 = vmul.f32 %v901, %v943
  %950 = vrot.lane.b32.xlu0 %v934, 112
  %v951 = vpop.permute.xlu0 %950
  %952 = vrot.lane.b32.xlu0 %v935, 112
  %v953 = vpop.permute.xlu0 %952
  %956 = vst.msk [vmem:[#allocation3] sm:$0xff] %vm108, %v951
  %957 = vst.msk [vmem:[#allocation3 + $0x8] sm:$0xff] %vm108, %v953
  %959 = vrot.lane.b32.xlu0 %v946, 80
  %v960 = vpop.permute.xlu0 %959
  %962 = vst.msk [vmem:[#allocation2] sm:$0xff] %vm108, %v960
  %964 = vrot.lane.b32.xlu0 %v947, 96
  %v965 = vpop.permute.xlu0 %964
  %967 = vst.msk [vmem:[#allocation2 + $0x8] sm:$0xff] %vm415, %v965
  %s968 = scalar_lea.vmem %s7, 32
  %969 = vst.msk [vmem:[%s968] sm:$0xff] %vm108, %v960
  %970 = vrot.lane.b32.xlu0 %v947, 80
  %v971 = vpop.permute.xlu0 %970
  %s973 = scalar_lea.vmem %s61, 8
  %974 = vst.msk [vmem:[%s973] sm:$0xff] %vm108, %v971
  %v975 = vld [vmem:[#allocation2] sm:$0xff]
  %v976 = vld [vmem:[#allocation2 + $0x8] sm:$0xff]
  %v977 = vpack.c.bf16 %v976, %v975
  %v979 = vsel %vm288, %v977, 0
  %981 = vmatprep.subr.bf16.mxu0 0
  %982 = vmatpush1.bf16.msra.mxu0 %v284
  %983 = vmatprep.subr.bf16.mxu0 0
  %984 = vmatpush1.bf16.msra.mxu0 %v285
  %985 = vmatprep.subr.bf16.mxu0 0
  %986 = vmatpush1.bf16.msra.mxu0 0
  %987 = vmatprep.subr.bf16.mxu0 0
  %988 = vmatpush1.bf16.msra.mxu0 0
  %989 = vmatprep.subr.bf16.mxu0 0
  %990 = vmatpush1.bf16.msra.mxu0 0
  %991 = vmatprep.subr.bf16.mxu0 0
  %992 = vmatpush1.bf16.msra.mxu0 0
  %993 = vmatprep.subr.bf16.mxu0 0
  %994 = vmatpush1.bf16.msra.mxu0 0
  %995 = vmatprep.subr.bf16.mxu0 0
  %996 = vmatpush1.bf16.msra.mxu0 0
  %997 = vmatprep.subr.bf16.mxu0 0
  %998 = vmatpush1.bf16.msra.mxu0 0
  %999 = vmatprep.subr.bf16.mxu0 0
  %1000 = vmatpush1.bf16.msra.mxu0 0
  %1001 = vmatprep.subr.bf16.mxu0 0
  %1002 = vmatpush1.bf16.msra.mxu0 0
  %1003 = vmatprep.subr.bf16.mxu0 0
  %1004 = vmatpush1.bf16.msra.mxu0 0
  %1005 = vmatprep.subr.bf16.mxu0 0
  %1006 = vmatpush1.bf16.msra.mxu0 0
  %1007 = vmatprep.subr.bf16.mxu0 0
  %1008 = vmatpush1.bf16.msra.mxu0 0
  %1009 = vmatprep.subr.bf16.mxu0 0
  %1010 = vmatpush1.bf16.msra.mxu0 0
  %1011 = vmatprep.subr.bf16.mxu0 0
  %1012 = vmatpush1.bf16.msra.mxu0 0
  %1013 = vmatprep.mubr.bf16.mxu0 0
  %1014 = vmatmul.mubr.bf16.gmra.mrb[0].mxu0 %v979
  %v1015 = vpop.f32.mrb[0].mxu0
  %v1016 = vadd.f32 0.0, %v1015
  %v1017 = vpop.f32.mrb[0].mxu0
  %v1018 = vpop.f32.mrb[0].mxu0
  %v1019 = vadd.f32 0.0, %v1018
  %v1020 = vpop.f32.mrb[0].mxu0
  %1021 = vdwg.mxu0
  %s1022 = scalar_lea.vmem [#allocation4], 40
  %v1023 = vld [vmem:[%s1022] sm:$0xff]
  %v1024 = vld [vmem:[#allocation5] sm:$0xff]
  %v1025 = vadd.f32 %v1023, %v1016
  %v1026 = vadd.f32 %v1024, %v1019
  %v1027 = vxor.u32 %v1025, 2147483648
  %v1028 = vxor.u32 %v1026, 2147483648
  %v1029 = vmul.f32 %v1027, 1.442695
  %v1030 = vpow.pop %v1029
  %v1031 = vmul.f32 %v1028, 1.442695
  %v1032 = vpow.pop %v1031
  %v1033 = vadd.f32 %v1030, 1.0
  %v1034 = vadd.f32 %v1032, 1.0
  %v1035 = vrcp.pop %v1033
  %v1036 = vmul.f32 1.0, %v1035
  %v1037 = vrcp.pop %v1034
  %v1038 = vmul.f32 1.0, %v1037
  %v1039 = vtanh.pop %v1025
  %v1040 = vtanh.pop %v1026
  %v1041 = vld [vmem:[#allocation3] sm:$0xff]
  %v1042 = vld [vmem:[#allocation3 + $0x8] sm:$0xff]
  %1045 = vrot.lane.b32.xlu0 %v1041, 16
  %v1046 = vpop.permute.xlu0 %1045
  %1047 = vrot.lane.b32.xlu0 %v1042, 16
  %v1048 = vpop.permute.xlu0 %1047
  %v1051 = vmul.f32 %v1036, %v1046
  %v1052 = vmul.f32 %v1038, %v1048
  %1055 = vrot.lane.b32.xlu0 %v1039, 96
  %v1056 = vpop.permute.xlu0 %1055
  %1057 = vrot.lane.b32.xlu0 %v1040, 96
  %v1058 = vpop.permute.xlu0 %1057
  %v1061 = vmul.f32 %v1036, %v1056
  %v1062 = vmul.f32 %v1038, %v1058
  %1065 = vrot.lane.b32.xlu0 %v1061, 16
  %v1066 = vpop.permute.xlu0 %1065
  %1067 = vrot.lane.b32.xlu0 %v1062, 16
  %v1068 = vpop.permute.xlu0 %1067
  %v1071 = vadd.f32 %v1051, %v1066
  %v1072 = vadd.f32 %v1052, %v1068
  %v1073 = vtanh.pop %v1071
  %v1074 = vtanh.pop %v1072
  %1077 = vrot.lane.b32.xlu0 %v1073, 32
  %v1078 = vpop.permute.xlu0 %1077
  %1079 = vrot.lane.b32.xlu0 %v1074, 32
  %v1080 = vpop.permute.xlu0 %1079
  %v1083 = vmul.f32 %v1036, %v1078
  %v1084 = vmul.f32 %v1038, %v1080
  %1087 = vrot.lane.b32.xlu0 %v1071, 112
  %v1088 = vpop.permute.xlu0 %1087
  %1089 = vrot.lane.b32.xlu0 %v1072, 112
  %v1090 = vpop.permute.xlu0 %1089
  %1093 = vst.msk [vmem:[#allocation3] sm:$0xff] %vm108, %v1088
  %1094 = vst.msk [vmem:[#allocation3 + $0x8] sm:$0xff] %vm108, %v1090
  %1096 = vrot.lane.b32.xlu0 %v1083, 80
  %v1097 = vpop.permute.xlu0 %1096
  %1099 = vst.msk [vmem:[#allocation2] sm:$0xff] %vm108, %v1097
  %1101 = vrot.lane.b32.xlu0 %v1084, 96
  %v1102 = vpop.permute.xlu0 %1101
  %1104 = vst.msk [vmem:[#allocation2 + $0x8] sm:$0xff] %vm415, %v1102
  %s1105 = scalar_lea.vmem %s7, 40
  %1106 = vst.msk [vmem:[%s1105] sm:$0xff] %vm108, %v1097
  %1107 = vrot.lane.b32.xlu0 %v1084, 80
  %v1108 = vpop.permute.xlu0 %1107
  %1110 = vst.msk [vmem:[%s61] sm:$0xff] %vm108, %v1108
  %s1111 = ssub.s32 0, 0
  %s1112 = smul.u32 6, %s1111
  %p1113 = scmp.lt.s32.totalorder %s1112, 5
  %s1114 = scalar_select %p1113, %s1112, 5
  %s1115 = smul.addr %s1114, 8
  %s1116 = scalar_lea.vmem %s8, %s1115
  // Predicated region
  $region34: #{han_forward.4} parent=0 // pred_check
    _
  $region35: #{han_forward.4} parent=0 // pred_check_branch
    %1118 = sbr.rel (0) target = $region37
  $region36: #{han_forward.4} parent=0 // pred_region
    _
  $region37: #{han_forward.4} parent=0 // pred_fallthru
    _
  // Predicated region
  $region38: #{han_forward.4} parent=0 // pred_check
    _
  $region39: #{han_forward.4} parent=0 // pred_check_branch
    %1120 = sbr.rel (0) target = $region41
  $region40: #{han_forward.4} parent=0 // pred_region
    %s1121 = ssub.s32 0, 0
    %s1122 = smul.u32 6, %s1121
  $region41: #{han_forward.4} parent=0 // pred_fallthru
    _
  // Predicated region
  $region42: #{han_forward.4} parent=0 // pred_check
    _
  $region43: #{han_forward.4} parent=0 // pred_check_branch
    %1124 = sbr.rel (0) target = $region45
  $region44: #{han_forward.4} parent=0 // pred_region
    _
  $region45: #{han_forward.4} parent=0 // pred_fallthru
    _
  // Predicated region
  $region46: #{han_forward.4} parent=0 // pred_check
    _
  $region47: #{han_forward.4} parent=0 // pred_check_branch
    %1126 = sbr.rel (0) target = $region49
  $region48: #{han_forward.4} parent=0 // pred_region
    %s1127 = ssub.s32 0, 0
    %s1128 = smul.u32 6, %s1127
    %p1129 = scmp.lt.s32.totalorder %s1128, 5
    %s1130 = scalar_select %p1129, %s1128, 5
    %s1131 = smul.addr %s1130, 8
    %s1132 = scalar_lea.vmem %s8, %s1131
  $region49: #{han_forward.4} parent=0 // pred_fallthru
    _

</llo_original>
